<compile_context>
chip_gen: v7x
topology: tpu7x:2x2x1
jax: 0.10.0
libtpu: 0.0.40
codegen_flags: <defaults>
</compile_context>

<pallas_src>
import jax
import jax.numpy as jnp
from jax.experimental import pallas as pl
from jax.experimental.pallas import tpu as pltpu

OUT_PAD = 128   # lane-dense output head width


def _round_up(n, m):
    return ((n + m - 1) // m) * m


def _pick_batch_tile(B, batch_tile):
    """Batch tile: multiple of 8 sublanes, capped at B, >= 2 grid steps."""
    tb = min(_round_up(batch_tile, 8), _round_up(B, 8))
    # Keep at least 2 grid steps when the batch allows it so the "parallel"
    # batch axis can actually be split across v7x's two TensorCores.
    if pl.cdiv(B, tb) < 2 and B > 8:
        tb = max(8, _round_up(pl.cdiv(B, 2), 8))
    return tb


def _make_kernel(n_hidden: int):
    """Kernel closure for a fixed number of MLP hidden layers."""

    def kernel(*refs):
        # ref layout:
        #   [0..3]   p_u (tb,k) bf16, q_i (tb,k) bf16,
        #            user_feat (tb,du) f32, item_feat (tb,di) f32
        #   [4..8]   w_pu, w_qi, w_uf, w_if (bf16), b_in (f32)  -- fused
        #            "concat + side-feature projection" weights
        #   [9 : 9+2L]          (W_l bf16, b_l f32) per hidden layer
        #   [9+2L], [10+2L]     w_out (H_last, 128) f32, b_out (1, 128) f32
        #   [11+2L]             out_ref (tb, 128) f32
        pu_ref, qi_ref, uf_ref, if_ref = refs[0:4]
        w_pu_ref, w_qi_ref, w_uf_ref, w_if_ref, b_in_ref = refs[4:9]
        mlp_refs = refs[9:9 + 2 * n_hidden]
        wo_ref = refs[9 + 2 * n_hidden]
        bo_ref = refs[10 + 2 * n_hidden]
        out_ref = refs[11 + 2 * n_hidden]

        # Fused "concat + feature projections": four MXU matmuls summed
        # (identity blocks copy p_u / q_i into their column ranges; W_u / W_i
        # project the side features).  Mathematically identical to the
        # block-diagonal single matmul, but needs no JAX-side concat.
        x = jnp.dot(pu_ref[...], w_pu_ref[...],
                    preferred_element_type=jnp.float32)
        x += jnp.dot(qi_ref[...], w_qi_ref[...],
                     preferred_element_type=jnp.float32)
        x += jnp.dot(uf_ref[...].astype(jnp.bfloat16), w_uf_ref[...],
                     preferred_element_type=jnp.float32)
        x += jnp.dot(if_ref[...].astype(jnp.bfloat16), w_if_ref[...],
                     preferred_element_type=jnp.float32)
        x += b_in_ref[...]

        # MLP: bf16 matmuls on the MXU, f32 accumulate, f32 bias-add + ReLU.
        for layer in range(n_hidden):
            w = mlp_refs[2 * layer]
            b = mlp_refs[2 * layer + 1]
            x = jnp.dot(x.astype(jnp.bfloat16), w[...],
                        preferred_element_type=jnp.float32) + b[...]
            x = jnp.maximum(x, 0.0)

        # Lane-dense output head: f32 matmul against (H_last, 128) where only
        # column 0 is non-zero -> unmasked (tb, 128) store; wrapper slices
        # column 0.
        out_ref[...] = jnp.dot(x, wo_ref[...],
                               preferred_element_type=jnp.float32) + bo_ref[...]

    return kernel


def init_params(key, num_users, num_items, embedding_dim,
                user_feat_dim, item_feat_dim, hidden_dims):
    """Deterministic parameter init (shapes match the PyTorch module).

    Linear weights are stored as (in_features, out_features) so the kernel
    computes x @ W + b (PyTorch nn.Linear is y = x @ W.T + b).
    """
    keys = jax.random.split(key, 6 + 2 * len(hidden_dims))
    ki = iter(range(len(keys)))

    def lin(k, fan_in, fan_out):
        bound = 1.0 / jnp.sqrt(fan_in)
        kw, kb = jax.random.split(k)
        w = jax.random.uniform(kw, (fan_in, fan_out), jnp.float32, -bound, bound)
        b = jax.random.uniform(kb, (1, fan_out), jnp.float32, -bound, bound)
        return w, b

    params = {}
    params["user_embedding"] = jax.random.normal(
        keys[next(ki)], (num_users, embedding_dim), jnp.float32)
    params["item_embedding"] = jax.random.normal(
        keys[next(ki)], (num_items, embedding_dim), jnp.float32)
    params["user_feat_fc"] = lin(keys[next(ki)], user_feat_dim, embedding_dim)
    params["item_feat_fc"] = lin(keys[next(ki)], item_feat_dim, embedding_dim)

    mlp = []
    in_dim = embedding_dim * 4
    for h in hidden_dims:
        mlp.append(lin(keys[next(ki)], in_dim, h))
        in_dim = h
    params["mlp"] = mlp
    params["output"] = lin(keys[next(ki)], in_dim, 1)
    return params


def prepack_params(params):
    """One-time weight repack (hoisted out of the per-call wrapper).

    Builds the fused projection weights (identity blocks for p_u/q_i, the
    side-feature projections W_u/W_i placed in their column ranges), casts
    matmul operands to bf16, and pads the output head to 128 lanes (only
    column 0 non-zero, so padded lanes of the result are never read).
    """
    emb_u = params["user_embedding"]
    k = emb_u.shape[1]
    wu, bu = params["user_feat_fc"]          # (du, k), (1, k)
    wi, bi = params["item_feat_fc"]          # (di, k), (1, k)
    du, di = wu.shape[0], wi.shape[0]
    d0 = 4 * k

    eye_k = jnp.eye(k, dtype=jnp.float32)
    w_pu = jnp.zeros((k, d0), jnp.float32).at[:, 0:k].set(eye_k)
    w_qi = jnp.zeros((k, d0), jnp.float32).at[:, k:2 * k].set(eye_k)
    w_uf = jnp.zeros((du, d0), jnp.float32).at[:, 2 * k:3 * k].set(wu)
    w_if = jnp.zeros((di, d0), jnp.float32).at[:, 3 * k:4 * k].set(wi)
    b_in = jnp.concatenate(
        [jnp.zeros((1, 2 * k), jnp.float32), bu, bi], axis=-1)   # (1, 4k)

    wo, bo = params["output"]                 # (H_last, 1), (1, 1)
    h_last = wo.shape[0]
    w_out = jnp.zeros((h_last, OUT_PAD), jnp.float32).at[:, 0:1].set(wo)
    b_out = jnp.zeros((1, OUT_PAD), jnp.float32).at[:, 0:1].set(bo)

    return {
        "user_embedding": params["user_embedding"],
        "item_embedding": params["item_embedding"],
        "w_pu": w_pu.astype(jnp.bfloat16),
        "w_qi": w_qi.astype(jnp.bfloat16),
        "w_uf": w_uf.astype(jnp.bfloat16),
        "w_if": w_if.astype(jnp.bfloat16),
        "b_in": b_in,                                       # f32
        "mlp": [(w.astype(jnp.bfloat16), b) for (w, b) in params["mlp"]],
        "w_out": w_out,                                     # f32
        "b_out": b_out,                                     # f32
    }


def neural_cf_forward(user, item, user_feat, item_feat, packed,
                      *, batch_tile=512):
    emb_u = packed["user_embedding"]
    emb_i = packed["item_embedding"]
    k = emb_u.shape[1]
    B = user.shape[0]
    du = user_feat.shape[1]
    di = item_feat.shape[1]
    d0 = 4 * k
    n_hidden = len(packed["mlp"])
    hidden = [w.shape[1] for w, _ in packed["mlp"]]
    h_last = packed["w_out"].shape[0]

    user_feat = user_feat.astype(jnp.float32)
    item_feat = item_feat.astype(jnp.float32)

    # Embedding-row gather: plain-JAX glue. Cast to bf16 fuses into the gather
    # so only (B, k) bf16 intermediates touch HBM.
    p_u = jnp.take(emb_u, user, axis=0).astype(jnp.bfloat16)   # (B, k)
    q_i = jnp.take(emb_i, item, axis=0).astype(jnp.bfloat16)   # (B, k)

    # ---- batch tiling --------------------------------------------------
    tb = _pick_batch_tile(B, batch_tile)
    B_pad = _round_up(B, tb)
    if B_pad != B:
        padr = ((0, B_pad - B), (0, 0))
        p_u = jnp.pad(p_u, padr)
        q_i = jnp.pad(q_i, padr)
        user_feat = jnp.pad(user_feat, padr)
        item_feat = jnp.pad(item_feat, padr)
    grid = (B_pad // tb,)

    weight_args = [packed["w_pu"], packed["w_qi"], packed["w_uf"],
                   packed["w_if"], packed["b_in"]]
    for w, b in packed["mlp"]:
        weight_args.extend([w, b])
    weight_args.extend([packed["w_out"], packed["b_out"]])

    args = [p_u, q_i, user_feat, item_feat] + weight_args

    batch_map = lambda i: (i, 0)
    const_map = lambda i: (0, 0)   # weights/biases: VMEM-resident across steps
    in_specs = [pl.BlockSpec((tb, k), batch_map),
                pl.BlockSpec((tb, k), batch_map),
                pl.BlockSpec((tb, du), batch_map),
                pl.BlockSpec((tb, di), batch_map)]
    for a in weight_args:
        in_specs.append(pl.BlockSpec(a.shape, const_map))

    out_specs = pl.BlockSpec((tb, OUT_PAD), batch_map)   # lane-dense stores

    # ---- VMEM budget (explicit; matters on v7x's 64 MiB) -----------------
    act_block = tb * (2 * k * 2 + (du + di) * 4)          # bf16 embeds + f32 feats
    out_block = tb * OUT_PAD * 4
    wgt_bytes = sum(int(a.size) * a.dtype.itemsize for a in weight_args)
    vmem_need = 2 * (act_block + out_block + wgt_bytes)   # double buffering
    vmem_limit = int(min(max(4 * vmem_need, 8 << 20), 64 << 20))

    in_dims = [d0] + hidden[:-1]
    flops = 2 * B_pad * ((2 * k + du + di) * d0
                         + sum(a * b for a, b in zip(in_dims, hidden))
                         + h_last * OUT_PAD)
    bytes_accessed = int(sum(int(a.size) * a.dtype.itemsize for a in args)
                         + B_pad * OUT_PAD * 4)

    out = pl.pallas_call(
        _make_kernel(n_hidden),
        out_shape=jax.ShapeDtypeStruct((B_pad, OUT_PAD), jnp.float32),
        grid_spec=pltpu.PrefetchScalarGridSpec(
            num_scalar_prefetch=0,
            grid=grid,
            in_specs=in_specs,
            out_specs=out_specs),
        compiler_params=pltpu.CompilerParams(
            dimension_semantics=("parallel",),
            vmem_limit_bytes=vmem_limit),
        cost_estimate=pl.CostEstimate(
            flops=flops, transcendentals=0, bytes_accessed=bytes_accessed),
    )(*args)

    # PyTorch: out.squeeze() -> (B,); keep only lane 0 and drop batch padding.
    return out[:B, 0]


def neural_cf_reference(user, item, user_feat, item_feat, params):
    """Pure-JAX f32 reference (exact module semantics)."""
    p = params["user_embedding"][user]
    q = params["item_embedding"][item]
    wu, bu = params["user_feat_fc"]
    wi, bi = params["item_feat_fc"]
    s = user_feat @ wu + bu
    t = item_feat @ wi + bi
    x = jnp.concatenate([p, q, s, t], axis=-1)
    for w, b in params["mlp"]:
        x = jnp.maximum(x @ w + b, 0.0)
    wo, bo = params["output"]
    return jnp.squeeze(x @ wo + bo, axis=-1)


if __name__ == "__main__":
    # Small, TPU-friendly shapes.
    num_users, num_items = 50, 40
    embedding_dim = 32          # k -> MLP input dim 4k = 128
    user_feat_dim = 16
    item_feat_dim = 24
    hidden_dims = [64, 32]      # kept at native width (no zero-FLOP padding)
    batch = 768                 # -> 2 grid steps at the default batch_tile=512

    root = jax.random.PRNGKey(0)
    k_inp, k_par = jax.random.split(root)
    ku, ki2, kuf, kif = jax.random.split(k_inp, 4)

    user = jax.random.randint(ku, (batch,), 0, num_users, dtype=jnp.int32)
    item = jax.random.randint(ki2, (batch,), 0, num_items, dtype=jnp.int32)
    user_feat = jax.random.normal(kuf, (batch, user_feat_dim), jnp.float32)
    item_feat = jax.random.normal(kif, (batch, item_feat_dim), jnp.float32)

    params = init_params(k_par, num_users, num_items, embedding_dim,
                         user_feat_dim, item_feat_dim, hidden_dims)
    packed = prepack_params(params)        # one-time weight repack (hoisted)

    fwd = jax.jit(neural_cf_forward, static_argnames=("batch_tile",))
    out = fwd(user, item, user_feat, item_feat, packed, batch_tile=512)
    out = jax.block_until_ready(out)

    ref = neural_cf_reference(user, item, user_feat, item_feat, params)
    assert out.shape == (batch,)
    # bf16 matmul operands with f32 accumulation vs f32 reference -> loose tol.
    assert jnp.allclose(out, ref, atol=5e-2, rtol=5e-2), (
        float(jnp.max(jnp.abs(out - ref))))

    print("KERNEL_OK")
</pallas_src>

<mosaic_0001>
module attributes {stable_mosaic.version = 11 : i64} {
  func.func @kernel(%arg0: i32, %arg1: memref<512x32xbf16, #tpu.memory_space<vmem>>, %arg2: memref<512x32xbf16, #tpu.memory_space<vmem>>, %arg3: memref<512x16xf32, #tpu.memory_space<vmem>>, %arg4: memref<512x24xf32, #tpu.memory_space<vmem>>, %arg5: memref<32x128xbf16, #tpu.memory_space<vmem>>, %arg6: memref<32x128xbf16, #tpu.memory_space<vmem>>, %arg7: memref<16x128xbf16, #tpu.memory_space<vmem>>, %arg8: memref<24x128xbf16, #tpu.memory_space<vmem>>, %arg9: memref<1x128xf32, #tpu.memory_space<vmem>>, %arg10: memref<128x64xbf16, #tpu.memory_space<vmem>>, %arg11: memref<1x64xf32, #tpu.memory_space<vmem>>, %arg12: memref<64x32xbf16, #tpu.memory_space<vmem>>, %arg13: memref<1x32xf32, #tpu.memory_space<vmem>>, %arg14: memref<32x128xf32, #tpu.memory_space<vmem>>, %arg15: memref<1x128xf32, #tpu.memory_space<vmem>>, %arg16: memref<512x128xf32, #tpu.memory_space<vmem>>) attributes {dimension_semantics = [#tpu.dimension_semantics<parallel>], iteration_bounds = array<i64: 2>, scalar_prefetch = 0 : i64, scratch_operands = 0 : i64, tpu.core_type = #tpu.core_type<tc>, window_params = [{transform_indices = @transform_0, window_bounds = array<i64: 512, 32>}, {transform_indices = @transform_1, window_bounds = array<i64: 512, 32>}, {transform_indices = @transform_2, window_bounds = array<i64: 512, 16>}, {transform_indices = @transform_3, window_bounds = array<i64: 512, 24>}, {pipeline_mode = #tpu.pipeline_mode<synchronous>, transform_indices = @transform_4, window_bounds = array<i64: 32, 128>}, {pipeline_mode = #tpu.pipeline_mode<synchronous>, transform_indices = @transform_5, window_bounds = array<i64: 32, 128>}, {pipeline_mode = #tpu.pipeline_mode<synchronous>, transform_indices = @transform_6, window_bounds = array<i64: 16, 128>}, {pipeline_mode = #tpu.pipeline_mode<synchronous>, transform_indices = @transform_7, window_bounds = array<i64: 24, 128>}, {pipeline_mode = #tpu.pipeline_mode<synchronous>, transform_indices = @transform_8, window_bounds = array<i64: 1, 128>}, {pipeline_mode = #tpu.pipeline_mode<synchronous>, transform_indices = @transform_9, window_bounds = array<i64: 128, 64>}, {pipeline_mode = #tpu.pipeline_mode<synchronous>, transform_indices = @transform_10, window_bounds = array<i64: 1, 64>}, {pipeline_mode = #tpu.pipeline_mode<synchronous>, transform_indices = @transform_11, window_bounds = array<i64: 64, 32>}, {pipeline_mode = #tpu.pipeline_mode<synchronous>, transform_indices = @transform_12, window_bounds = array<i64: 1, 32>}, {pipeline_mode = #tpu.pipeline_mode<synchronous>, transform_indices = @transform_13, window_bounds = array<i64: 32, 128>}, {pipeline_mode = #tpu.pipeline_mode<synchronous>, transform_indices = @transform_14, window_bounds = array<i64: 1, 128>}, {transform_indices = @transform_15, window_bounds = array<i64: 512, 128>}]} {
    %c0 = arith.constant 0 : index
    %c0_0 = arith.constant 0 : index
    %0 = vector.load %arg1[%c0, %c0_0] : memref<512x32xbf16, #tpu.memory_space<vmem>>, vector<512x32xbf16>
    %c0_1 = arith.constant 0 : index
    %c0_2 = arith.constant 0 : index
    %1 = vector.load %arg5[%c0_1, %c0_2] : memref<32x128xbf16, #tpu.memory_space<vmem>>, vector<32x128xbf16>
    %cst = arith.constant dense<0.000000e+00> : vector<512x128xf32>
    %2 = tpu.matmul %0, %1, %cst {dimension_numbers = #tpu.dot_dimension_numbers<[1], [0], [0], [1], [0, 0, 1, 1], [], []>} : vector<512x32xbf16>, vector<32x128xbf16>, vector<512x128xf32> -> vector<512x128xf32>
    %c0_3 = arith.constant 0 : index
    %c0_4 = arith.constant 0 : index
    %3 = vector.load %arg2[%c0_3, %c0_4] : memref<512x32xbf16, #tpu.memory_space<vmem>>, vector<512x32xbf16>
    %c0_5 = arith.constant 0 : index
    %c0_6 = arith.constant 0 : index
    %4 = vector.load %arg6[%c0_5, %c0_6] : memref<32x128xbf16, #tpu.memory_space<vmem>>, vector<32x128xbf16>
    %cst_7 = arith.constant dense<0.000000e+00> : vector<512x128xf32>
    %5 = tpu.matmul %3, %4, %cst_7 {dimension_numbers = #tpu.dot_dimension_numbers<[1], [0], [0], [1], [0, 0, 1, 1], [], []>} : vector<512x32xbf16>, vector<32x128xbf16>, vector<512x128xf32> -> vector<512x128xf32>
    %6 = arith.addf %2, %5 : vector<512x128xf32>
    %c0_8 = arith.constant 0 : index
    %c0_9 = arith.constant 0 : index
    %7 = vector.load %arg3[%c0_8, %c0_9] : memref<512x16xf32, #tpu.memory_space<vmem>>, vector<512x16xf32>
    %8 = arith.truncf %7 : vector<512x16xf32> to vector<512x16xbf16>
    %c0_10 = arith.constant 0 : index
    %c0_11 = arith.constant 0 : index
    %9 = vector.load %arg7[%c0_10, %c0_11] : memref<16x128xbf16, #tpu.memory_space<vmem>>, vector<16x128xbf16>
    %cst_12 = arith.constant dense<0.000000e+00> : vector<512x128xf32>
    %10 = tpu.matmul %8, %9, %cst_12 {dimension_numbers = #tpu.dot_dimension_numbers<[1], [0], [0], [1], [0, 0, 1, 1], [], []>} : vector<512x16xbf16>, vector<16x128xbf16>, vector<512x128xf32> -> vector<512x128xf32>
    %11 = arith.addf %6, %10 : vector<512x128xf32>
    %c0_13 = arith.constant 0 : index
    %c0_14 = arith.constant 0 : index
    %12 = vector.load %arg4[%c0_13, %c0_14] : memref<512x24xf32, #tpu.memory_space<vmem>>, vector<512x24xf32>
    %13 = arith.truncf %12 : vector<512x24xf32> to vector<512x24xbf16>
    %c0_15 = arith.constant 0 : index
    %c0_16 = arith.constant 0 : index
    %14 = vector.load %arg8[%c0_15, %c0_16] : memref<24x128xbf16, #tpu.memory_space<vmem>>, vector<24x128xbf16>
    %cst_17 = arith.constant dense<0.000000e+00> : vector<512x128xf32>
    %15 = tpu.matmul %13, %14, %cst_17 {dimension_numbers = #tpu.dot_dimension_numbers<[1], [0], [0], [1], [0, 0, 1, 1], [], []>} : vector<512x24xbf16>, vector<24x128xbf16>, vector<512x128xf32> -> vector<512x128xf32>
    %16 = arith.addf %11, %15 : vector<512x128xf32>
    %c0_18 = arith.constant 0 : index
    %c0_19 = arith.constant 0 : index
    %17 = vector.load %arg9[%c0_18, %c0_19] : memref<1x128xf32, #tpu.memory_space<vmem>>, vector<1x128xf32>
    %18 = vector.broadcast %17 : vector<1x128xf32> to vector<512x128xf32>
    %19 = arith.addf %16, %18 : vector<512x128xf32>
    %20 = arith.truncf %19 : vector<512x128xf32> to vector<512x128xbf16>
    %c0_20 = arith.constant 0 : index
    %c0_21 = arith.constant 0 : index
    %21 = vector.load %arg10[%c0_20, %c0_21] : memref<128x64xbf16, #tpu.memory_space<vmem>>, vector<128x64xbf16>
    %cst_22 = arith.constant dense<0.000000e+00> : vector<512x64xf32>
    %22 = tpu.matmul %20, %21, %cst_22 {dimension_numbers = #tpu.dot_dimension_numbers<[1], [0], [0], [1], [0, 0, 1, 1], [], []>} : vector<512x128xbf16>, vector<128x64xbf16>, vector<512x64xf32> -> vector<512x64xf32>
    %c0_23 = arith.constant 0 : index
    %c0_24 = arith.constant 0 : index
    %23 = vector.load %arg11[%c0_23, %c0_24] : memref<1x64xf32, #tpu.memory_space<vmem>>, vector<1x64xf32>
    %24 = vector.broadcast %23 : vector<1x64xf32> to vector<512x64xf32>
    %25 = arith.addf %22, %24 : vector<512x64xf32>
    %cst_25 = arith.constant 0.000000e+00 : f32
    %26 = vector.broadcast %cst_25 : f32 to vector<512x64xf32>
    %27 = arith.maximumf %25, %26 : vector<512x64xf32>
    %28 = arith.truncf %27 : vector<512x64xf32> to vector<512x64xbf16>
    %c0_26 = arith.constant 0 : index
    %c0_27 = arith.constant 0 : index
    %29 = vector.load %arg12[%c0_26, %c0_27] : memref<64x32xbf16, #tpu.memory_space<vmem>>, vector<64x32xbf16>
    %cst_28 = arith.constant dense<0.000000e+00> : vector<512x32xf32>
    %30 = tpu.matmul %28, %29, %cst_28 {dimension_numbers = #tpu.dot_dimension_numbers<[1], [0], [0], [1], [0, 0, 1, 1], [], []>} : vector<512x64xbf16>, vector<64x32xbf16>, vector<512x32xf32> -> vector<512x32xf32>
    %c0_29 = arith.constant 0 : index
    %c0_30 = arith.constant 0 : index
    %31 = vector.load %arg13[%c0_29, %c0_30] : memref<1x32xf32, #tpu.memory_space<vmem>>, vector<1x32xf32>
    %32 = vector.broadcast %31 : vector<1x32xf32> to vector<512x32xf32>
    %33 = arith.addf %30, %32 : vector<512x32xf32>
    %cst_31 = arith.constant 0.000000e+00 : f32
    %34 = vector.broadcast %cst_31 : f32 to vector<512x32xf32>
    %35 = arith.maximumf %33, %34 : vector<512x32xf32>
    %c0_32 = arith.constant 0 : index
    %c0_33 = arith.constant 0 : index
    %36 = vector.load %arg14[%c0_32, %c0_33] : memref<32x128xf32, #tpu.memory_space<vmem>>, vector<32x128xf32>
    %cst_34 = arith.constant dense<0.000000e+00> : vector<512x128xf32>
    %37 = tpu.matmul %35, %36, %cst_34 {dimension_numbers = #tpu.dot_dimension_numbers<[1], [0], [0], [1], [0, 0, 1, 1], [], []>} : vector<512x32xf32>, vector<32x128xf32>, vector<512x128xf32> -> vector<512x128xf32>
    %c0_35 = arith.constant 0 : index
    %c0_36 = arith.constant 0 : index
    %38 = vector.load %arg15[%c0_35, %c0_36] : memref<1x128xf32, #tpu.memory_space<vmem>>, vector<1x128xf32>
    %39 = vector.broadcast %38 : vector<1x128xf32> to vector<512x128xf32>
    %40 = arith.addf %37, %39 : vector<512x128xf32>
    %c0_37 = arith.constant 0 : index
    %c0_38 = arith.constant 0 : index
    %41 = vector.load %arg16[%c0_37, %c0_38] : memref<512x128xf32, #tpu.memory_space<vmem>>, vector<512x128xf32>
    tpu.vector_store %arg16[%c0_37, %c0_38], %40 {strides = array<i32>} : memref<512x128xf32, #tpu.memory_space<vmem>>, vector<512x128xf32>,
    return
  }
  func.func @transform_0(%arg0: i32) -> (i32, i32) {
    %c0_i32 = arith.constant 0 : i32
    %c0_i32_0 = arith.constant 0 : i32
    return %arg0, %c0_i32 : i32, i32
  }
  func.func @transform_1(%arg0: i32) -> (i32, i32) {
    %c0_i32 = arith.constant 0 : i32
    %c0_i32_0 = arith.constant 0 : i32
    return %arg0, %c0_i32 : i32, i32
  }
  func.func @transform_2(%arg0: i32) -> (i32, i32) {
    %c0_i32 = arith.constant 0 : i32
    %c0_i32_0 = arith.constant 0 : i32
    return %arg0, %c0_i32 : i32, i32
  }
  func.func @transform_3(%arg0: i32) -> (i32, i32) {
    %c0_i32 = arith.constant 0 : i32
    %c0_i32_0 = arith.constant 0 : i32
    return %arg0, %c0_i32 : i32, i32
  }
  func.func @transform_4(%arg0: i32) -> (i32, i32) {
    %c0_i32 = arith.constant 0 : i32
    %c0_i32_0 = arith.constant 0 : i32
    %c0_i32_1 = arith.constant 0 : i32
    return %c0_i32, %c0_i32_0 : i32, i32
  }
  func.func @transform_5(%arg0: i32) -> (i32, i32) {
    %c0_i32 = arith.constant 0 : i32
    %c0_i32_0 = arith.constant 0 : i32
    %c0_i32_1 = arith.constant 0 : i32
    return %c0_i32, %c0_i32_0 : i32, i32
  }
  func.func @transform_6(%arg0: i32) -> (i32, i32) {
    %c0_i32 = arith.constant 0 : i32
    %c0_i32_0 = arith.constant 0 : i32
    %c0_i32_1 = arith.constant 0 : i32
    return %c0_i32, %c0_i32_0 : i32, i32
  }
  func.func @transform_7(%arg0: i32) -> (i32, i32) {
    %c0_i32 = arith.constant 0 : i32
    %c0_i32_0 = arith.constant 0 : i32
    %c0_i32_1 = arith.constant 0 : i32
    return %c0_i32, %c0_i32_0 : i32, i32
  }
  func.func @transform_8(%arg0: i32) -> (i32, i32) {
    %c0_i32 = arith.constant 0 : i32
    %c0_i32_0 = arith.constant 0 : i32
    %c0_i32_1 = arith.constant 0 : i32
    return %c0_i32, %c0_i32_0 : i32, i32
  }
  func.func @transform_9(%arg0: i32) -> (i32, i32) {
    %c0_i32 = arith.constant 0 : i32
    %c0_i32_0 = arith.constant 0 : i32
    %c0_i32_1 = arith.constant 0 : i32
    return %c0_i32, %c0_i32_0 : i32, i32
  }
  func.func @transform_10(%arg0: i32) -> (i32, i32) {
    %c0_i32 = arith.constant 0 : i32
    %c0_i32_0 = arith.constant 0 : i32
    %c0_i32_1 = arith.constant 0 : i32
    return %c0_i32, %c0_i32_0 : i32, i32
  }
  func.func @transform_11(%arg0: i32) -> (i32, i32) {
    %c0_i32 = arith.constant 0 : i32
    %c0_i32_0 = arith.constant 0 : i32
    %c0_i32_1 = arith.constant 0 : i32
    return %c0_i32, %c0_i32_0 : i32, i32
  }
  func.func @transform_12(%arg0: i32) -> (i32, i32) {
    %c0_i32 = arith.constant 0 : i32
    %c0_i32_0 = arith.constant 0 : i32
    %c0_i32_1 = arith.constant 0 : i32
    return %c0_i32, %c0_i32_0 : i32, i32
  }
  func.func @transform_13(%arg0: i32) -> (i32, i32) {
    %c0_i32 = arith.constant 0 : i32
    %c0_i32_0 = arith.constant 0 : i32
    %c0_i32_1 = arith.constant 0 : i32
    return %c0_i32, %c0_i32_0 : i32, i32
  }
  func.func @transform_14(%arg0: i32) -> (i32, i32) {
    %c0_i32 = arith.constant 0 : i32
    %c0_i32_0 = arith.constant 0 : i32
    %c0_i32_1 = arith.constant 0 : i32
    return %c0_i32, %c0_i32_0 : i32, i32
  }
  func.func @transform_15(%arg0: i32) -> (i32, i32) {
    %c0_i32 = arith.constant 0 : i32
    %c0_i32_0 = arith.constant 0 : i32
    return %arg0, %c0_i32 : i32, i32
  }
}

</mosaic_0001>

<llo_original>
// kernel: neural_cf_forward.1
$region0: #{neural_cf_forward.1}
  #allocation0 [shape = 'u32[]', space=smem, size = 0x4, offset = 0x4, fixed_abs, tag = 'smem constant byte address 0x4 - core index']
  #allocation1 [shape = 'u32[144,128]{1,0:T(1,128)}', space=vmem, size = 0x12000, scoped, tag = 'internal scratch']
  %s0 = inlined_call_operand.vmem [shape: bf16[1024,32], index: 0, kind: input, shape index: {}]
  %s1 = inlined_call_operand.vmem [shape: bf16[1024,32], index: 1, kind: input, shape index: {}]
  %s2 = inlined_call_operand.vmem [shape: f32[1024,16], index: 2, kind: input, shape index: {}]
  %s3 = inlined_call_operand.vmem [shape: f32[1024,24], index: 3, kind: input, shape index: {}]
  %s4 = inlined_call_operand.vmem [shape: bf16[32,128], index: 4, kind: input, shape index: {}]
  %s5 = inlined_call_operand.vmem [shape: bf16[32,128], index: 5, kind: input, shape index: {}]
  %s6 = inlined_call_operand.vmem [shape: bf16[16,128], index: 6, kind: input, shape index: {}]
  %s7 = inlined_call_operand.vmem [shape: bf16[24,128], index: 7, kind: input, shape index: {}]
  %s8 = inlined_call_operand.vmem [shape: f32[1,128], index: 8, kind: input, shape index: {}]
  %s9 = inlined_call_operand.vmem [shape: bf16[128,64], index: 9, kind: input, shape index: {}]
  %s10 = inlined_call_operand.vmem [shape: f32[1,64], index: 10, kind: input, shape index: {}]
  %s11 = inlined_call_operand.vmem [shape: bf16[64,32], index: 11, kind: input, shape index: {}]
  %s12 = inlined_call_operand.vmem [shape: f32[1,32], index: 12, kind: input, shape index: {}]
  %s13 = inlined_call_operand.vmem [shape: f32[32,128], index: 13, kind: input, shape index: {}]
  %s14 = inlined_call_operand.vmem [shape: f32[1,128], index: 14, kind: input, shape index: {}]
  %s15 = inlined_call_operand.vmem [shape: f32[1024,128], index: 15, kind: output, shape index: {}]
  %s16 = sld [smem:[#allocation0]]
  $region93: #{neural_cf_forward.1} parent=0
    _
  %s18 = ssub.s32 1, %s16
  %s19 = scalar_select 0, %s18, %s16
  loop: start=0, step=1, limit=4
  $region2: #{neural_cf_forward.1} parent=0 // loop_pre_header
    _
  $region3: #{neural_cf_forward.1} parent=0 // loop_header
    %s21 = sphi 0, %s25
    %p22 = scmp.ge.s32.totalorder %s21, 4
    %s31 = sphi 0, %s33
    %s34 = sphi 0, %s31
    %s35 = sphi 0, %s34
    %s51 = sphi 0, %s35
    %s57 = sphi 0, %s59
    %s60 = sphi 0, %s57
    %s61 = sphi 0, %s60
    %s77 = sphi 0, %s61
    %s83 = sphi 0, %s85
    %s86 = sphi 0, %s83
    %s87 = sphi 0, %s86
    %s103 = sphi 0, %s87
    %s109 = sphi 0, %s111
    %s112 = sphi 0, %s109
    %s113 = sphi 0, %s112
    %s129 = sphi 0, %s113
    %s133 = sphi 0, %s133
    %s135 = sphi 0, %s133
    %s136 = sphi 0, %s135
    %s150 = sphi 0, %s136
    %s154 = sphi 0, %s154
    %s156 = sphi 0, %s154
    %s157 = sphi 0, %s156
    %s171 = sphi 0, %s157
    %s175 = sphi 0, %s175
    %s177 = sphi 0, %s175
    %s178 = sphi 0, %s177
    %s192 = sphi 0, %s178
    %s196 = sphi 0, %s196
    %s198 = sphi 0, %s196
    %s199 = sphi 0, %s198
    %s213 = sphi 0, %s199
    %s217 = sphi 0, %s217
    %s219 = sphi 0, %s217
    %s220 = sphi 0, %s219
    %s234 = sphi 0, %s220
    %s238 = sphi 0, %s238
    %s240 = sphi 0, %s238
    %s241 = sphi 0, %s240
    %s255 = sphi 0, %s241
    %s259 = sphi 0, %s259
    %s261 = sphi 0, %s259
    %s262 = sphi 0, %s261
    %s276 = sphi 0, %s262
    %s280 = sphi 0, %s280
    %s282 = sphi 0, %s280
    %s283 = sphi 0, %s282
    %s297 = sphi 0, %s283
    %s301 = sphi 0, %s301
    %s303 = sphi 0, %s301
    %s304 = sphi 0, %s303
    %s318 = sphi 0, %s304
    %s322 = sphi 0, %s322
    %s324 = sphi 0, %s322
    %s325 = sphi 0, %s324
    %s339 = sphi 0, %s325
    %s343 = sphi 0, %s343
    %s345 = sphi 0, %s343
    %s346 = sphi 0, %s345
    %s360 = sphi 0, %s346
    %s366 = sphi 0, %s368
    %s369 = sphi 0, %s366
    %s370 = sphi 0, %s369
    %s386 = sphi 0, %s370
  $region4: #{neural_cf_forward.1} parent=0 // loop_header_branch
    %24 = sbr.rel (%p22) target = $region8
  $region5: #{neural_cf_forward.1} parent=0 // loop_body
    %s26 = ssub.s32 %s21, 1
    %s27 = ssub.s32 %s21, 2
    %s28 = sadd.s32 %s21, 1
    %s29 = ssub.s32 %s21, %s28
    %p30 = scmp.eq.s32.totalorder %s29, 0
    %s32 = sadd.s32 %s31, 1
    %s33 = scalar_select %p30, %s31, %s32
    %p36 = pneg %p30
    %p37 = scmp.eq.s32.totalorder %s21, 1
    %p38 = por %p36, %p37
    %p39 = scmp.ne.s32.totalorder %s31, %s34
    %p40 = scmp.eq.s32.totalorder %s21, 0
    %p41 = por %p39, %p40
    %p42 = scmp.ne.s32.totalorder %s31, %s34
    %p43 = scmp.eq.s32.totalorder %s26, 1
    %p44 = por %p42, %p43
    %p45 = scmp.ne.s32.totalorder %s34, %s35
    %p46 = scmp.eq.s32.totalorder %s26, 0
    %p47 = por %p45, %p46
    %p48 = scmp.ne.s32.totalorder %s34, %s35
    %p49 = scmp.eq.s32.totalorder %s27, 1
    %p50 = por %p48, %p49
    %p52 = scmp.ne.s32.totalorder %s35, %s51
    %p53 = scmp.eq.s32.totalorder %s27, 0
    %p54 = por %p52, %p53
    %s55 = ssub.s32 %s21, %s28
    %p56 = scmp.eq.s32.totalorder %s55, 0
    %s58 = sadd.s32 %s57, 1
    %s59 = scalar_select %p56, %s57, %s58
    %p62 = pneg %p56
    %p63 = scmp.eq.s32.totalorder %s21, 1
    %p64 = por %p62, %p63
    %p65 = scmp.ne.s32.totalorder %s57, %s60
    %p66 = scmp.eq.s32.totalorder %s21, 0
    %p67 = por %p65, %p66
    %p68 = scmp.ne.s32.totalorder %s57, %s60
    %p69 = scmp.eq.s32.totalorder %s26, 1
    %p70 = por %p68, %p69
    %p71 = scmp.ne.s32.totalorder %s60, %s61
    %p72 = scmp.eq.s32.totalorder %s26, 0
    %p73 = por %p71, %p72
    %p74 = scmp.ne.s32.totalorder %s60, %s61
    %p75 = scmp.eq.s32.totalorder %s27, 1
    %p76 = por %p74, %p75
    %p78 = scmp.ne.s32.totalorder %s61, %s77
    %p79 = scmp.eq.s32.totalorder %s27, 0
    %p80 = por %p78, %p79
    %s81 = ssub.s32 %s21, %s28
    %p82 = scmp.eq.s32.totalorder %s81, 0
    %s84 = sadd.s32 %s83, 1
    %s85 = scalar_select %p82, %s83, %s84
    %p88 = pneg %p82
    %p89 = scmp.eq.s32.totalorder %s21, 1
    %p90 = por %p88, %p89
    %p91 = scmp.ne.s32.totalorder %s83, %s86
    %p92 = scmp.eq.s32.totalorder %s21, 0
    %p93 = por %p91, %p92
    %p94 = scmp.ne.s32.totalorder %s83, %s86
    %p95 = scmp.eq.s32.totalorder %s26, 1
    %p96 = por %p94, %p95
    %p97 = scmp.ne.s32.totalorder %s86, %s87
    %p98 = scmp.eq.s32.totalorder %s26, 0
    %p99 = por %p97, %p98
    %p100 = scmp.ne.s32.totalorder %s86, %s87
    %p101 = scmp.eq.s32.totalorder %s27, 1
    %p102 = por %p100, %p101
    %p104 = scmp.ne.s32.totalorder %s87, %s103
    %p105 = scmp.eq.s32.totalorder %s27, 0
    %p106 = por %p104, %p105
    %s107 = ssub.s32 %s21, %s28
    %p108 = scmp.eq.s32.totalorder %s107, 0
    %s110 = sadd.s32 %s109, 1
    %s111 = scalar_select %p108, %s109, %s110
    %p114 = pneg %p108
    %p115 = scmp.eq.s32.totalorder %s21, 1
    %p116 = por %p114, %p115
    %p117 = scmp.ne.s32.totalorder %s109, %s112
    %p118 = scmp.eq.s32.totalorder %s21, 0
    %p119 = por %p117, %p118
    %p120 = scmp.ne.s32.totalorder %s109, %s112
    %p121 = scmp.eq.s32.totalorder %s26, 1
    %p122 = por %p120, %p121
    %p123 = scmp.ne.s32.totalorder %s112, %s113
    %p124 = scmp.eq.s32.totalorder %s26, 0
    %p125 = por %p123, %p124
    %p126 = scmp.ne.s32.totalorder %s112, %s113
    %p127 = scmp.eq.s32.totalorder %s27, 1
    %p128 = por %p126, %p127
    %p130 = scmp.ne.s32.totalorder %s113, %s129
    %p131 = scmp.eq.s32.totalorder %s27, 0
    %p132 = por %p130, %p131
    %s134 = sadd.s32 %s133, 1
    %p137 = scmp.eq.s32.totalorder %s21, 1
    %p138 = scmp.ne.s32.totalorder %s133, %s135
    %p139 = scmp.eq.s32.totalorder %s21, 0
    %p140 = por %p138, %p139
    %p141 = scmp.ne.s32.totalorder %s133, %s135
    %p142 = scmp.eq.s32.totalorder %s26, 1
    %p143 = por %p141, %p142
    %p144 = scmp.ne.s32.totalorder %s135, %s136
    %p145 = scmp.eq.s32.totalorder %s26, 0
    %p146 = por %p144, %p145
    %p147 = scmp.ne.s32.totalorder %s135, %s136
    %p148 = scmp.eq.s32.totalorder %s27, 1
    %p149 = por %p147, %p148
    %p151 = scmp.ne.s32.totalorder %s136, %s150
    %p152 = scmp.eq.s32.totalorder %s27, 0
    %p153 = por %p151, %p152
    %s155 = sadd.s32 %s154, 1
    %p158 = scmp.eq.s32.totalorder %s21, 1
    %p159 = scmp.ne.s32.totalorder %s154, %s156
    %p160 = scmp.eq.s32.totalorder %s21, 0
    %p161 = por %p159, %p160
    %p162 = scmp.ne.s32.totalorder %s154, %s156
    %p163 = scmp.eq.s32.totalorder %s26, 1
    %p164 = por %p162, %p163
    %p165 = scmp.ne.s32.totalorder %s156, %s157
    %p166 = scmp.eq.s32.totalorder %s26, 0
    %p167 = por %p165, %p166
    %p168 = scmp.ne.s32.totalorder %s156, %s157
    %p169 = scmp.eq.s32.totalorder %s27, 1
    %p170 = por %p168, %p169
    %p172 = scmp.ne.s32.totalorder %s157, %s171
    %p173 = scmp.eq.s32.totalorder %s27, 0
    %p174 = por %p172, %p173
    %s176 = sadd.s32 %s175, 1
    %p179 = scmp.eq.s32.totalorder %s21, 1
    %p180 = scmp.ne.s32.totalorder %s175, %s177
    %p181 = scmp.eq.s32.totalorder %s21, 0
    %p182 = por %p180, %p181
    %p183 = scmp.ne.s32.totalorder %s175, %s177
    %p184 = scmp.eq.s32.totalorder %s26, 1
    %p185 = por %p183, %p184
    %p186 = scmp.ne.s32.totalorder %s177, %s178
    %p187 = scmp.eq.s32.totalorder %s26, 0
    %p188 = por %p186, %p187
    %p189 = scmp.ne.s32.totalorder %s177, %s178
    %p190 = scmp.eq.s32.totalorder %s27, 1
    %p191 = por %p189, %p190
    %p193 = scmp.ne.s32.totalorder %s178, %s192
    %p194 = scmp.eq.s32.totalorder %s27, 0
    %p195 = por %p193, %p194
    %s197 = sadd.s32 %s196, 1
    %p200 = scmp.eq.s32.totalorder %s21, 1
    %p201 = scmp.ne.s32.totalorder %s196, %s198
    %p202 = scmp.eq.s32.totalorder %s21, 0
    %p203 = por %p201, %p202
    %p204 = scmp.ne.s32.totalorder %s196, %s198
    %p205 = scmp.eq.s32.totalorder %s26, 1
    %p206 = por %p204, %p205
    %p207 = scmp.ne.s32.totalorder %s198, %s199
    %p208 = scmp.eq.s32.totalorder %s26, 0
    %p209 = por %p207, %p208
    %p210 = scmp.ne.s32.totalorder %s198, %s199
    %p211 = scmp.eq.s32.totalorder %s27, 1
    %p212 = por %p210, %p211
    %p214 = scmp.ne.s32.totalorder %s199, %s213
    %p215 = scmp.eq.s32.totalorder %s27, 0
    %p216 = por %p214, %p215
    %s218 = sadd.s32 %s217, 1
    %p221 = scmp.eq.s32.totalorder %s21, 1
    %p222 = scmp.ne.s32.totalorder %s217, %s219
    %p223 = scmp.eq.s32.totalorder %s21, 0
    %p224 = por %p222, %p223
    %p225 = scmp.ne.s32.totalorder %s217, %s219
    %p226 = scmp.eq.s32.totalorder %s26, 1
    %p227 = por %p225, %p226
    %p228 = scmp.ne.s32.totalorder %s219, %s220
    %p229 = scmp.eq.s32.totalorder %s26, 0
    %p230 = por %p228, %p229
    %p231 = scmp.ne.s32.totalorder %s219, %s220
    %p232 = scmp.eq.s32.totalorder %s27, 1
    %p233 = por %p231, %p232
    %p235 = scmp.ne.s32.totalorder %s220, %s234
    %p236 = scmp.eq.s32.totalorder %s27, 0
    %p237 = por %p235, %p236
    %s239 = sadd.s32 %s238, 1
    %p242 = scmp.eq.s32.totalorder %s21, 1
    %p243 = scmp.ne.s32.totalorder %s238, %s240
    %p244 = scmp.eq.s32.totalorder %s21, 0
    %p245 = por %p243, %p244
    %p246 = scmp.ne.s32.totalorder %s238, %s240
    %p247 = scmp.eq.s32.totalorder %s26, 1
    %p248 = por %p246, %p247
    %p249 = scmp.ne.s32.totalorder %s240, %s241
    %p250 = scmp.eq.s32.totalorder %s26, 0
    %p251 = por %p249, %p250
    %p252 = scmp.ne.s32.totalorder %s240, %s241
    %p253 = scmp.eq.s32.totalorder %s27, 1
    %p254 = por %p252, %p253
    %p256 = scmp.ne.s32.totalorder %s241, %s255
    %p257 = scmp.eq.s32.totalorder %s27, 0
    %p258 = por %p256, %p257
    %s260 = sadd.s32 %s259, 1
    %p263 = scmp.eq.s32.totalorder %s21, 1
    %p264 = scmp.ne.s32.totalorder %s259, %s261
    %p265 = scmp.eq.s32.totalorder %s21, 0
    %p266 = por %p264, %p265
    %p267 = scmp.ne.s32.totalorder %s259, %s261
    %p268 = scmp.eq.s32.totalorder %s26, 1
    %p269 = por %p267, %p268
    %p270 = scmp.ne.s32.totalorder %s261, %s262
    %p271 = scmp.eq.s32.totalorder %s26, 0
    %p272 = por %p270, %p271
    %p273 = scmp.ne.s32.totalorder %s261, %s262
    %p274 = scmp.eq.s32.totalorder %s27, 1
    %p275 = por %p273, %p274
    %p277 = scmp.ne.s32.totalorder %s262, %s276
    %p278 = scmp.eq.s32.totalorder %s27, 0
    %p279 = por %p277, %p278
    %s281 = sadd.s32 %s280, 1
    %p284 = scmp.eq.s32.totalorder %s21, 1
    %p285 = scmp.ne.s32.totalorder %s280, %s282
    %p286 = scmp.eq.s32.totalorder %s21, 0
    %p287 = por %p285, %p286
    %p288 = scmp.ne.s32.totalorder %s280, %s282
    %p289 = scmp.eq.s32.totalorder %s26, 1
    %p290 = por %p288, %p289
    %p291 = scmp.ne.s32.totalorder %s282, %s283
    %p292 = scmp.eq.s32.totalorder %s26, 0
    %p293 = por %p291, %p292
    %p294 = scmp.ne.s32.totalorder %s282, %s283
    %p295 = scmp.eq.s32.totalorder %s27, 1
    %p296 = por %p294, %p295
    %p298 = scmp.ne.s32.totalorder %s283, %s297
    %p299 = scmp.eq.s32.totalorder %s27, 0
    %p300 = por %p298, %p299
    %s302 = sadd.s32 %s301, 1
    %p305 = scmp.eq.s32.totalorder %s21, 1
    %p306 = scmp.ne.s32.totalorder %s301, %s303
    %p307 = scmp.eq.s32.totalorder %s21, 0
    %p308 = por %p306, %p307
    %p309 = scmp.ne.s32.totalorder %s301, %s303
    %p310 = scmp.eq.s32.totalorder %s26, 1
    %p311 = por %p309, %p310
    %p312 = scmp.ne.s32.totalorder %s303, %s304
    %p313 = scmp.eq.s32.totalorder %s26, 0
    %p314 = por %p312, %p313
    %p315 = scmp.ne.s32.totalorder %s303, %s304
    %p316 = scmp.eq.s32.totalorder %s27, 1
    %p317 = por %p315, %p316
    %p319 = scmp.ne.s32.totalorder %s304, %s318
    %p320 = scmp.eq.s32.totalorder %s27, 0
    %p321 = por %p319, %p320
    %s323 = sadd.s32 %s322, 1
    %p326 = scmp.eq.s32.totalorder %s21, 1
    %p327 = scmp.ne.s32.totalorder %s322, %s324
    %p328 = scmp.eq.s32.totalorder %s21, 0
    %p329 = por %p327, %p328
    %p330 = scmp.ne.s32.totalorder %s322, %s324
    %p331 = scmp.eq.s32.totalorder %s26, 1
    %p332 = por %p330, %p331
    %p333 = scmp.ne.s32.totalorder %s324, %s325
    %p334 = scmp.eq.s32.totalorder %s26, 0
    %p335 = por %p333, %p334
    %p336 = scmp.ne.s32.totalorder %s324, %s325
    %p337 = scmp.eq.s32.totalorder %s27, 1
    %p338 = por %p336, %p337
    %p340 = scmp.ne.s32.totalorder %s325, %s339
    %p341 = scmp.eq.s32.totalorder %s27, 0
    %p342 = por %p340, %p341
    %s344 = sadd.s32 %s343, 1
    %p347 = scmp.eq.s32.totalorder %s21, 1
    %p348 = scmp.ne.s32.totalorder %s343, %s345
    %p349 = scmp.eq.s32.totalorder %s21, 0
    %p350 = por %p348, %p349
    %p351 = scmp.ne.s32.totalorder %s343, %s345
    %p352 = scmp.eq.s32.totalorder %s26, 1
    %p353 = por %p351, %p352
    %p354 = scmp.ne.s32.totalorder %s345, %s346
    %p355 = scmp.eq.s32.totalorder %s26, 0
    %p356 = por %p354, %p355
    %p357 = scmp.ne.s32.totalorder %s345, %s346
    %p358 = scmp.eq.s32.totalorder %s27, 1
    %p359 = por %p357, %p358
    %p361 = scmp.ne.s32.totalorder %s346, %s360
    %p362 = scmp.eq.s32.totalorder %s27, 0
    %p363 = por %p361, %p362
    %s364 = ssub.s32 %s21, %s28
    %p365 = scmp.eq.s32.totalorder %s364, 0
    %s367 = sadd.s32 %s366, 1
    %s368 = scalar_select %p365, %s366, %s367
    %p371 = pneg %p365
    %p372 = scmp.eq.s32.totalorder %s21, 1
    %p373 = por %p371, %p372
    %p374 = scmp.ne.s32.totalorder %s366, %s369
    %p375 = scmp.eq.s32.totalorder %s21, 0
    %p376 = por %p374, %p375
    %p377 = scmp.ne.s32.totalorder %s366, %s369
    %p378 = scmp.eq.s32.totalorder %s26, 1
    %p379 = por %p377, %p378
    %p380 = scmp.ne.s32.totalorder %s369, %s370
    %p381 = scmp.eq.s32.totalorder %s26, 0
    %p382 = por %p380, %p381
    %p383 = scmp.ne.s32.totalorder %s369, %s370
    %p384 = scmp.eq.s32.totalorder %s27, 1
    %p385 = por %p383, %p384
    %p387 = scmp.ne.s32.totalorder %s370, %s386
    %p388 = scmp.eq.s32.totalorder %s27, 0
    %p389 = por %p387, %p388
    %p390 = scmp.le.s32.totalorder 1, %s21
    %p391 = scmp.lt.s32.totalorder %s21, 3
    %p392 = pnand %p390, %p391
    %p393 = pneg %p392
    // Predicated region
    $region9: #{neural_cf_forward.1} parent=5 // pred_check
      _
    $region10: #{neural_cf_forward.1} parent=5 // pred_check_branch
      %395 = sbr.rel (%p392) target = $region12
    $region11: #{neural_cf_forward.1} parent=5 // pred_region
      %s396 = ssub.s32 %s21, 1
      // Predicated region
      $region13: #{neural_cf_forward.1} parent=11 // pred_check
        %p397 = pneg %p146
      $region14: #{neural_cf_forward.1} parent=11 // pred_check_branch
        %399 = sbr.rel (%p397) target = $region16
      $region15: #{neural_cf_forward.1} parent=11 // pred_region
        _
      $region16: #{neural_cf_forward.1} parent=11 // pred_fallthru
        _
      // Predicated region
      $region17: #{neural_cf_forward.1} parent=11 // pred_check
        %p400 = pneg %p167
      $region18: #{neural_cf_forward.1} parent=11 // pred_check_branch
        %402 = sbr.rel (%p400) target = $region20
      $region19: #{neural_cf_forward.1} parent=11 // pred_region
        _
      $region20: #{neural_cf_forward.1} parent=11 // pred_fallthru
        _
      // Predicated region
      $region21: #{neural_cf_forward.1} parent=11 // pred_check
        %p403 = pneg %p188
      $region22: #{neural_cf_forward.1} parent=11 // pred_check_branch
        %405 = sbr.rel (%p403) target = $region24
      $region23: #{neural_cf_forward.1} parent=11 // pred_region
        _
      $region24: #{neural_cf_forward.1} parent=11 // pred_fallthru
        _
      // Predicated region
      $region25: #{neural_cf_forward.1} parent=11 // pred_check
        %p406 = pneg %p209
      $region26: #{neural_cf_forward.1} parent=11 // pred_check_branch
        %408 = sbr.rel (%p406) target = $region28
      $region27: #{neural_cf_forward.1} parent=11 // pred_region
        _
      $region28: #{neural_cf_forward.1} parent=11 // pred_fallthru
        _
      // Predicated region
      $region29: #{neural_cf_forward.1} parent=11 // pred_check
        %p409 = pneg %p230
      $region30: #{neural_cf_forward.1} parent=11 // pred_check_branch
        %411 = sbr.rel (%p409) target = $region32
      $region31: #{neural_cf_forward.1} parent=11 // pred_region
        _
      $region32: #{neural_cf_forward.1} parent=11 // pred_fallthru
        _
      // Predicated region
      $region33: #{neural_cf_forward.1} parent=11 // pred_check
        %p412 = pneg %p251
      $region34: #{neural_cf_forward.1} parent=11 // pred_check_branch
        %414 = sbr.rel (%p412) target = $region36
      $region35: #{neural_cf_forward.1} parent=11 // pred_region
        _
      $region36: #{neural_cf_forward.1} parent=11 // pred_fallthru
        _
      // Predicated region
      $region37: #{neural_cf_forward.1} parent=11 // pred_check
        %p415 = pneg %p272
      $region38: #{neural_cf_forward.1} parent=11 // pred_check_branch
        %417 = sbr.rel (%p415) target = $region40
      $region39: #{neural_cf_forward.1} parent=11 // pred_region
        _
      $region40: #{neural_cf_forward.1} parent=11 // pred_fallthru
        _
      // Predicated region
      $region41: #{neural_cf_forward.1} parent=11 // pred_check
        %p418 = pneg %p293
      $region42: #{neural_cf_forward.1} parent=11 // pred_check_branch
        %420 = sbr.rel (%p418) target = $region44
      $region43: #{neural_cf_forward.1} parent=11 // pred_region
        _
      $region44: #{neural_cf_forward.1} parent=11 // pred_fallthru
        _
      // Predicated region
      $region45: #{neural_cf_forward.1} parent=11 // pred_check
        %p421 = pneg %p314
      $region46: #{neural_cf_forward.1} parent=11 // pred_check_branch
        %423 = sbr.rel (%p421) target = $region48
      $region47: #{neural_cf_forward.1} parent=11 // pred_region
        _
      $region48: #{neural_cf_forward.1} parent=11 // pred_fallthru
        _
      // Predicated region
      $region49: #{neural_cf_forward.1} parent=11 // pred_check
        %p424 = pneg %p335
      $region50: #{neural_cf_forward.1} parent=11 // pred_check_branch
        %426 = sbr.rel (%p424) target = $region52
      $region51: #{neural_cf_forward.1} parent=11 // pred_region
        _
      $region52: #{neural_cf_forward.1} parent=11 // pred_fallthru
        _
      // Predicated region
      $region53: #{neural_cf_forward.1} parent=11 // pred_check
        %p427 = pneg %p356
      $region54: #{neural_cf_forward.1} parent=11 // pred_check_branch
        %429 = sbr.rel (%p427) target = $region56
      $region55: #{neural_cf_forward.1} parent=11 // pred_region
        _
      $region56: #{neural_cf_forward.1} parent=11 // pred_fallthru
        _
    $region12: #{neural_cf_forward.1} parent=5 // pred_fallthru
      _
    %p430 = scmp.lt.s32.totalorder %s21, 2
    // Predicated region
    $region57: #{neural_cf_forward.1} parent=5 // pred_check
      %p431 = pneg %p430
    $region58: #{neural_cf_forward.1} parent=5 // pred_check_branch
      %433 = sbr.rel (%p431) target = $region60
    $region59: #{neural_cf_forward.1} parent=5 // pred_region
      // Predicated region
      $region61: #{neural_cf_forward.1} parent=59 // pred_check
        %p434 = pneg %p41
      $region62: #{neural_cf_forward.1} parent=59 // pred_check_branch
        %436 = sbr.rel (%p434) target = $region64
      $region63: #{neural_cf_forward.1} parent=59 // pred_region
        %s437 = smul.u32 64, %s21
        %p438 = scmp.lt.s32.totalorder %s437, 127
        %s439 = scalar_select %p438, %s437, 127
        %s440 = smul.addr %s439, 4
        %s441 = scalar_lea.vmem %s0, %s440
        %s442 = smul.u32 64, %s21
      $region64: #{neural_cf_forward.1} parent=59 // pred_fallthru
        _
      // Predicated region
      $region65: #{neural_cf_forward.1} parent=59 // pred_check
        %p443 = pneg %p67
      $region66: #{neural_cf_forward.1} parent=59 // pred_check_branch
        %445 = sbr.rel (%p443) target = $region68
      $region67: #{neural_cf_forward.1} parent=59 // pred_region
        %s446 = smul.u32 64, %s21
        %p447 = scmp.lt.s32.totalorder %s446, 127
        %s448 = scalar_select %p447, %s446, 127
        %s449 = smul.addr %s448, 4
        %s450 = scalar_lea.vmem %s1, %s449
        %s451 = smul.u32 64, %s21
      $region68: #{neural_cf_forward.1} parent=59 // pred_fallthru
        _
      // Predicated region
      $region69: #{neural_cf_forward.1} parent=59 // pred_check
        %p452 = pneg %p93
      $region70: #{neural_cf_forward.1} parent=59 // pred_check_branch
        %454 = sbr.rel (%p452) target = $region72
      $region71: #{neural_cf_forward.1} parent=59 // pred_region
        %s455 = smul.u32 64, %s21
        %p456 = scmp.lt.s32.totalorder %s455, 127
        %s457 = scalar_select %p456, %s455, 127
        %s458 = smul.addr %s457, 8
        %s459 = scalar_lea.vmem %s2, %s458
        %s460 = smul.u32 64, %s21
      $region72: #{neural_cf_forward.1} parent=59 // pred_fallthru
        _
      // Predicated region
      $region73: #{neural_cf_forward.1} parent=59 // pred_check
        %p461 = pneg %p119
      $region74: #{neural_cf_forward.1} parent=59 // pred_check_branch
        %463 = sbr.rel (%p461) target = $region76
      $region75: #{neural_cf_forward.1} parent=59 // pred_region
        %s464 = smul.u32 64, %s21
        %p465 = scmp.lt.s32.totalorder %s464, 127
        %s466 = scalar_select %p465, %s464, 127
        %s467 = smul.addr %s466, 8
        %s468 = scalar_lea.vmem %s3, %s467
        %s469 = smul.u32 64, %s21
      $region76: #{neural_cf_forward.1} parent=59 // pred_fallthru
        _
    $region60: #{neural_cf_forward.1} parent=5 // pred_fallthru
      _
    %p470 = scmp.le.s32.totalorder 1, %s21
    %p471 = scmp.lt.s32.totalorder %s21, 3
    %p472 = pnand %p470, %p471
    %p473 = pneg %p472
    // Predicated region
    $region77: #{neural_cf_forward.1} parent=5 // pred_check
      _
    $region78: #{neural_cf_forward.1} parent=5 // pred_check_branch
      %475 = sbr.rel (%p472) target = $region80
    $region79: #{neural_cf_forward.1} parent=5 // pred_region
      %s476 = ssub.s32 %s21, 1
      %s477 = smul.u32 64, %s26
      %p478 = scmp.lt.s32.totalorder %s477, 127
      %s479 = scalar_select %p478, %s477, 127
      %s480 = smul.addr %s479, 4
      %s481 = scalar_lea.vmem %s0, %s480
      %p482 = pneg %p47
      %p483 = pneg %p44
      %s484 = smul.u32 64, %s26
      %p485 = scmp.lt.s32.totalorder %s484, 127
      %s486 = scalar_select %p485, %s484, 127
      %s487 = smul.addr %s486, 4
      %s488 = scalar_lea.vmem %s1, %s487
      %p489 = pneg %p73
      %p490 = pneg %p70
      %s491 = smul.u32 64, %s26
      %p492 = scmp.lt.s32.totalorder %s491, 127
      %s493 = scalar_select %p492, %s491, 127
      %s494 = smul.addr %s493, 8
      %s495 = scalar_lea.vmem %s2, %s494
      %p496 = pneg %p99
      %p497 = pneg %p96
      %s498 = smul.u32 64, %s26
      %p499 = scmp.lt.s32.totalorder %s498, 127
      %s500 = scalar_select %p499, %s498, 127
      %s501 = smul.addr %s500, 8
      %s502 = scalar_lea.vmem %s3, %s501
      %p503 = pneg %p125
      %p504 = pneg %p122
      %p505 = pneg %p146
      %p506 = pneg %p143
      %p507 = pneg %p167
      %p508 = pneg %p164
      %p509 = pneg %p188
      %p510 = pneg %p185
      %p511 = pneg %p209
      %p512 = pneg %p206
      %p513 = pneg %p230
      %p514 = pneg %p227
      %p515 = pneg %p251
      %p516 = pneg %p248
      %p517 = pneg %p272
      %p518 = pneg %p269
      %p519 = pneg %p293
      %p520 = pneg %p290
      %p521 = pneg %p314
      %p522 = pneg %p311
      %p523 = pneg %p335
      %p524 = pneg %p332
      %p525 = pneg %p356
      %p526 = pneg %p353
      %p527 = pneg %p382
      %p528 = pneg %p379
      %s529 = smul.u32 64, %s26
      %p530 = scmp.lt.s32.totalorder %s529, 127
      %s531 = scalar_select %p530, %s529, 127
      %s532 = smul.addr %s531, 8
      %s533 = scalar_lea.vmem %s15, %s532
      %s534 = smul.u32 64, %s26
      %p535 = scmp.lt.s32.totalorder %s534, 127
      %s536 = scalar_select %p535, %s534, 127
      %s537 = smul.addr %s536, 4
      %s538 = scalar_lea.vmem %s0, %s537
      %s539 = smul.u32 64, %s26
      %s540 = smul.u32 64, %s26
      %p541 = scmp.lt.s32.totalorder %s540, 127
      %s542 = scalar_select %p541, %s540, 127
      %s543 = smul.addr %s542, 4
      %s544 = scalar_lea.vmem %s1, %s543
      %s545 = smul.u32 64, %s26
      %s546 = smul.u32 64, %s26
      %p547 = scmp.lt.s32.totalorder %s546, 127
      %s548 = scalar_select %p547, %s546, 127
      %s549 = smul.addr %s548, 8
      %s550 = scalar_lea.vmem %s2, %s549
      %s551 = smul.u32 64, %s26
      %s552 = smul.u32 64, %s26
      %p553 = scmp.lt.s32.totalorder %s552, 127
      %s554 = scalar_select %p553, %s552, 127
      %s555 = smul.addr %s554, 8
      %s556 = scalar_lea.vmem %s3, %s555
      %s557 = smul.u32 64, %s26
      %s558 = smul.u32 64, %s26
      %p559 = scmp.lt.s32.totalorder %s558, 127
      %s560 = scalar_select %p559, %s558, 127
      %s561 = smul.addr %s560, 8
      %s562 = scalar_lea.vmem %s15, %s561
      %s563 = smul.u32 64, %s26
      %v565 = vld [vmem:[%s538] sm:$0xf]
      %v566 = vld [vmem:[%s538 + $0x4] sm:$0xf]
      %v567 = vld [vmem:[%s538 + $0x8] sm:$0xf]
      %v568 = vld [vmem:[%s538 + $0xc] sm:$0xf]
      %v569 = vld [vmem:[%s538 + $0x10] sm:$0xf]
      %v570 = vld [vmem:[%s538 + $0x14] sm:$0xf]
      %v571 = vld [vmem:[%s538 + $0x18] sm:$0xf]
      %v572 = vld [vmem:[%s538 + $0x1c] sm:$0xf]
      %v573 = vld [vmem:[%s538 + $0x20] sm:$0xf]
      %v574 = vld [vmem:[%s538 + $0x24] sm:$0xf]
      %v575 = vld [vmem:[%s538 + $0x28] sm:$0xf]
      %v576 = vld [vmem:[%s538 + $0x2c] sm:$0xf]
      %v577 = vld [vmem:[%s538 + $0x30] sm:$0xf]
      %v578 = vld [vmem:[%s538 + $0x34] sm:$0xf]
      %v579 = vld [vmem:[%s538 + $0x38] sm:$0xf]
      %v580 = vld [vmem:[%s538 + $0x3c] sm:$0xf]
      %v581 = vld [vmem:[%s538 + $0x40] sm:$0xf]
      %v582 = vld [vmem:[%s538 + $0x44] sm:$0xf]
      %v583 = vld [vmem:[%s538 + $0x48] sm:$0xf]
      %v584 = vld [vmem:[%s538 + $0x4c] sm:$0xf]
      %v585 = vld [vmem:[%s538 + $0x50] sm:$0xf]
      %v586 = vld [vmem:[%s538 + $0x54] sm:$0xf]
      %v587 = vld [vmem:[%s538 + $0x58] sm:$0xf]
      %v588 = vld [vmem:[%s538 + $0x5c] sm:$0xf]
      %v589 = vld [vmem:[%s538 + $0x60] sm:$0xf]
      %v590 = vld [vmem:[%s538 + $0x64] sm:$0xf]
      %v591 = vld [vmem:[%s538 + $0x68] sm:$0xf]
      %v592 = vld [vmem:[%s538 + $0x6c] sm:$0xf]
      %v593 = vld [vmem:[%s538 + $0x70] sm:$0xf]
      %v594 = vld [vmem:[%s538 + $0x74] sm:$0xf]
      %v595 = vld [vmem:[%s538 + $0x78] sm:$0xf]
      %v596 = vld [vmem:[%s538 + $0x7c] sm:$0xf]
      %v597 = vld [vmem:[%s538 + $0x80] sm:$0xf]
      %v598 = vld [vmem:[%s538 + $0x84] sm:$0xf]
      %v599 = vld [vmem:[%s538 + $0x88] sm:$0xf]
      %v600 = vld [vmem:[%s538 + $0x8c] sm:$0xf]
      %v601 = vld [vmem:[%s538 + $0x90] sm:$0xf]
      %v602 = vld [vmem:[%s538 + $0x94] sm:$0xf]
      %v603 = vld [vmem:[%s538 + $0x98] sm:$0xf]
      %v604 = vld [vmem:[%s538 + $0x9c] sm:$0xf]
      %v605 = vld [vmem:[%s538 + $0xa0] sm:$0xf]
      %v606 = vld [vmem:[%s538 + $0xa4] sm:$0xf]
      %v607 = vld [vmem:[%s538 + $0xa8] sm:$0xf]
      %v608 = vld [vmem:[%s538 + $0xac] sm:$0xf]
      %v609 = vld [vmem:[%s538 + $0xb0] sm:$0xf]
      %v610 = vld [vmem:[%s538 + $0xb4] sm:$0xf]
      %v611 = vld [vmem:[%s538 + $0xb8] sm:$0xf]
      %v612 = vld [vmem:[%s538 + $0xbc] sm:$0xf]
      %v613 = vld [vmem:[%s538 + $0xc0] sm:$0xf]
      %v614 = vld [vmem:[%s538 + $0xc4] sm:$0xf]
      %v615 = vld [vmem:[%s538 + $0xc8] sm:$0xf]
      %v616 = vld [vmem:[%s538 + $0xcc] sm:$0xf]
      %v617 = vld [vmem:[%s538 + $0xd0] sm:$0xf]
      %v618 = vld [vmem:[%s538 + $0xd4] sm:$0xf]
      %v619 = vld [vmem:[%s538 + $0xd8] sm:$0xf]
      %v620 = vld [vmem:[%s538 + $0xdc] sm:$0xf]
      %v621 = vld [vmem:[%s538 + $0xe0] sm:$0xf]
      %v622 = vld [vmem:[%s538 + $0xe4] sm:$0xf]
      %v623 = vld [vmem:[%s538 + $0xe8] sm:$0xf]
      %v624 = vld [vmem:[%s538 + $0xec] sm:$0xf]
      %v625 = vld [vmem:[%s538 + $0xf0] sm:$0xf]
      %v626 = vld [vmem:[%s538 + $0xf4] sm:$0xf]
      %v627 = vld [vmem:[%s538 + $0xf8] sm:$0xf]
      %v628 = vld [vmem:[%s538 + $0xfc] sm:$0xf]
      %v629 = vld [vmem:[%s4] sm:$0xf]
      %v630 = vld [vmem:[%s4 + $0x4] sm:$0xf]
      %v631 = vld [vmem:[%s4 + $0x8] sm:$0xf]
      %v632 = vld [vmem:[%s4 + $0xc] sm:$0xf]
      %v633 = vld [vmem:[%s544] sm:$0xf]
      %v634 = vld [vmem:[%s544 + $0x4] sm:$0xf]
      %v635 = vld [vmem:[%s544 + $0x8] sm:$0xf]
      %v636 = vld [vmem:[%s544 + $0xc] sm:$0xf]
      %v637 = vld [vmem:[%s544 + $0x10] sm:$0xf]
      %v638 = vld [vmem:[%s544 + $0x14] sm:$0xf]
      %v639 = vld [vmem:[%s544 + $0x18] sm:$0xf]
      %v640 = vld [vmem:[%s544 + $0x1c] sm:$0xf]
      %v641 = vld [vmem:[%s544 + $0x20] sm:$0xf]
      %v642 = vld [vmem:[%s544 + $0x24] sm:$0xf]
      %v643 = vld [vmem:[%s544 + $0x28] sm:$0xf]
      %v644 = vld [vmem:[%s544 + $0x2c] sm:$0xf]
      %v645 = vld [vmem:[%s544 + $0x30] sm:$0xf]
      %v646 = vld [vmem:[%s544 + $0x34] sm:$0xf]
      %v647 = vld [vmem:[%s544 + $0x38] sm:$0xf]
      %v648 = vld [vmem:[%s544 + $0x3c] sm:$0xf]
      %v649 = vld [vmem:[%s544 + $0x40] sm:$0xf]
      %v650 = vld [vmem:[%s544 + $0x44] sm:$0xf]
      %v651 = vld [vmem:[%s544 + $0x48] sm:$0xf]
      %v652 = vld [vmem:[%s544 + $0x4c] sm:$0xf]
      %v653 = vld [vmem:[%s544 + $0x50] sm:$0xf]
      %v654 = vld [vmem:[%s544 + $0x54] sm:$0xf]
      %v655 = vld [vmem:[%s544 + $0x58] sm:$0xf]
      %v656 = vld [vmem:[%s544 + $0x5c] sm:$0xf]
      %v657 = vld [vmem:[%s544 + $0x60] sm:$0xf]
      %v658 = vld [vmem:[%s544 + $0x64] sm:$0xf]
      %v659 = vld [vmem:[%s544 + $0x68] sm:$0xf]
      %v660 = vld [vmem:[%s544 + $0x6c] sm:$0xf]
      %v661 = vld [vmem:[%s544 + $0x70] sm:$0xf]
      %v662 = vld [vmem:[%s544 + $0x74] sm:$0xf]
      %v663 = vld [vmem:[%s544 + $0x78] sm:$0xf]
      %v664 = vld [vmem:[%s544 + $0x7c] sm:$0xf]
      %v665 = vld [vmem:[%s544 + $0x80] sm:$0xf]
      %v666 = vld [vmem:[%s544 + $0x84] sm:$0xf]
      %v667 = vld [vmem:[%s544 + $0x88] sm:$0xf]
      %v668 = vld [vmem:[%s544 + $0x8c] sm:$0xf]
      %v669 = vld [vmem:[%s544 + $0x90] sm:$0xf]
      %v670 = vld [vmem:[%s544 + $0x94] sm:$0xf]
      %v671 = vld [vmem:[%s544 + $0x98] sm:$0xf]
      %v672 = vld [vmem:[%s544 + $0x9c] sm:$0xf]
      %v673 = vld [vmem:[%s544 + $0xa0] sm:$0xf]
      %v674 = vld [vmem:[%s544 + $0xa4] sm:$0xf]
      %v675 = vld [vmem:[%s544 + $0xa8] sm:$0xf]
      %v676 = vld [vmem:[%s544 + $0xac] sm:$0xf]
      %v677 = vld [vmem:[%s544 + $0xb0] sm:$0xf]
      %v678 = vld [vmem:[%s544 + $0xb4] sm:$0xf]
      %v679 = vld [vmem:[%s544 + $0xb8] sm:$0xf]
      %v680 = vld [vmem:[%s544 + $0xbc] sm:$0xf]
      %v681 = vld [vmem:[%s544 + $0xc0] sm:$0xf]
      %v682 = vld [vmem:[%s544 + $0xc4] sm:$0xf]
      %v683 = vld [vmem:[%s544 + $0xc8] sm:$0xf]
      %v684 = vld [vmem:[%s544 + $0xcc] sm:$0xf]
      %v685 = vld [vmem:[%s544 + $0xd0] sm:$0xf]
      %v686 = vld [vmem:[%s544 + $0xd4] sm:$0xf]
      %v687 = vld [vmem:[%s544 + $0xd8] sm:$0xf]
      %v688 = vld [vmem:[%s544 + $0xdc] sm:$0xf]
      %v689 = vld [vmem:[%s544 + $0xe0] sm:$0xf]
      %v690 = vld [vmem:[%s544 + $0xe4] sm:$0xf]
      %v691 = vld [vmem:[%s544 + $0xe8] sm:$0xf]
      %v692 = vld [vmem:[%s544 + $0xec] sm:$0xf]
      %v693 = vld [vmem:[%s544 + $0xf0] sm:$0xf]
      %v694 = vld [vmem:[%s544 + $0xf4] sm:$0xf]
      %v695 = vld [vmem:[%s544 + $0xf8] sm:$0xf]
      %v696 = vld [vmem:[%s544 + $0xfc] sm:$0xf]
      %v697 = vld [vmem:[%s5] sm:$0xf]
      %v698 = vld [vmem:[%s5 + $0x4] sm:$0xf]
      %v699 = vld [vmem:[%s5 + $0x8] sm:$0xf]
      %v700 = vld [vmem:[%s5 + $0xc] sm:$0xf]
      %v765 = vunpack.c.l.b16 %v633
      %v766 = vunpack.c.l.b16 %v634
      %v767 = vunpack.c.l.b16 %v635
      %v768 = vunpack.c.l.b16 %v636
      %v769 = vunpack.c.l.b16 %v637
      %v770 = vunpack.c.l.b16 %v638
      %v771 = vunpack.c.l.b16 %v639
      %v772 = vunpack.c.l.b16 %v640
      %v773 = vunpack.c.l.b16 %v641
      %v774 = vunpack.c.l.b16 %v642
      %v775 = vunpack.c.l.b16 %v643
      %v776 = vunpack.c.l.b16 %v644
      %v777 = vunpack.c.l.b16 %v645
      %v778 = vunpack.c.l.b16 %v646
      %v779 = vunpack.c.l.b16 %v647
      %v780 = vunpack.c.l.b16 %v648
      %v781 = vunpack.c.l.b16 %v649
      %v782 = vunpack.c.l.b16 %v650
      %v783 = vunpack.c.l.b16 %v651
      %v784 = vunpack.c.l.b16 %v652
      %v785 = vunpack.c.l.b16 %v653
      %v786 = vunpack.c.l.b16 %v654
      %v787 = vunpack.c.l.b16 %v655
      %v788 = vunpack.c.l.b16 %v656
      %v789 = vunpack.c.l.b16 %v657
      %v790 = vunpack.c.l.b16 %v658
      %v791 = vunpack.c.l.b16 %v659
      %v792 = vunpack.c.l.b16 %v660
      %v793 = vunpack.c.l.b16 %v661
      %v794 = vunpack.c.l.b16 %v662
      %v795 = vunpack.c.l.b16 %v663
      %v796 = vunpack.c.l.b16 %v664
      %v797 = vunpack.c.l.b16 %v665
      %v798 = vunpack.c.l.b16 %v666
      %v799 = vunpack.c.l.b16 %v667
      %v800 = vunpack.c.l.b16 %v668
      %v801 = vunpack.c.l.b16 %v669
      %v802 = vunpack.c.l.b16 %v670
      %v803 = vunpack.c.l.b16 %v671
      %v804 = vunpack.c.l.b16 %v672
      %v805 = vunpack.c.l.b16 %v673
      %v806 = vunpack.c.l.b16 %v674
      %v807 = vunpack.c.l.b16 %v675
      %v808 = vunpack.c.l.b16 %v676
      %v809 = vunpack.c.l.b16 %v677
      %v810 = vunpack.c.l.b16 %v678
      %v811 = vunpack.c.l.b16 %v679
      %v812 = vunpack.c.l.b16 %v680
      %v813 = vunpack.c.l.b16 %v681
      %v814 = vunpack.c.l.b16 %v682
      %v815 = vunpack.c.l.b16 %v683
      %v816 = vunpack.c.l.b16 %v684
      %v817 = vunpack.c.l.b16 %v685
      %v818 = vunpack.c.l.b16 %v686
      %v819 = vunpack.c.l.b16 %v687
      %v820 = vunpack.c.l.b16 %v688
      %v821 = vunpack.c.l.b16 %v689
      %v822 = vunpack.c.l.b16 %v690
      %v823 = vunpack.c.l.b16 %v691
      %v824 = vunpack.c.l.b16 %v692
      %v825 = vunpack.c.l.b16 %v693
      %v826 = vunpack.c.l.b16 %v694
      %v827 = vunpack.c.l.b16 %v695
      %v828 = vunpack.c.l.b16 %v696
      %v829 = vpack.c.b16 %v766, %v765
      %v830 = vpack.c.b16 %v768, %v767
      %v831 = vpack.c.b16 %v770, %v769
      %v832 = vpack.c.b16 %v772, %v771
      %v833 = vpack.c.b16 %v774, %v773
      %v834 = vpack.c.b16 %v776, %v775
      %v835 = vpack.c.b16 %v778, %v777
      %v836 = vpack.c.b16 %v780, %v779
      %v837 = vpack.c.b16 %v782, %v781
      %v838 = vpack.c.b16 %v784, %v783
      %v839 = vpack.c.b16 %v786, %v785
      %v840 = vpack.c.b16 %v788, %v787
      %v841 = vpack.c.b16 %v790, %v789
      %v842 = vpack.c.b16 %v792, %v791
      %v843 = vpack.c.b16 %v794, %v793
      %v844 = vpack.c.b16 %v796, %v795
      %v845 = vpack.c.b16 %v798, %v797
      %v846 = vpack.c.b16 %v800, %v799
      %v847 = vpack.c.b16 %v802, %v801
      %v848 = vpack.c.b16 %v804, %v803
      %v849 = vpack.c.b16 %v806, %v805
      %v850 = vpack.c.b16 %v808, %v807
      %v851 = vpack.c.b16 %v810, %v809
      %v852 = vpack.c.b16 %v812, %v811
      %v853 = vpack.c.b16 %v814, %v813
      %v854 = vpack.c.b16 %v816, %v815
      %v855 = vpack.c.b16 %v818, %v817
      %v856 = vpack.c.b16 %v820, %v819
      %v857 = vpack.c.b16 %v822, %v821
      %v858 = vpack.c.b16 %v824, %v823
      %v859 = vpack.c.b16 %v826, %v825
      %v860 = vpack.c.b16 %v828, %v827
      %v865 = vunpack.c.l.b16 %v697
      %v866 = vunpack.c.l.b16 %v698
      %v867 = vunpack.c.l.b16 %v699
      %v868 = vunpack.c.l.b16 %v700
      %v869 = vpack.c.b16 %v866, %v865
      %v870 = vpack.c.b16 %v868, %v867
      %vm873 = vcmask 261120
      %v875 = vsel %vm873, %v829, 0
      %v878 = vsel %vm873, %v830, 0
      %v881 = vsel %vm873, %v831, 0
      %v884 = vsel %vm873, %v832, 0
      %v887 = vsel %vm873, %v833, 0
      %v890 = vsel %vm873, %v834, 0
      %v893 = vsel %vm873, %v835, 0
      %v896 = vsel %vm873, %v836, 0
      %v899 = vsel %vm873, %v837, 0
      %v902 = vsel %vm873, %v838, 0
      %v905 = vsel %vm873, %v839, 0
      %v908 = vsel %vm873, %v840, 0
      %v911 = vsel %vm873, %v841, 0
      %v914 = vsel %vm873, %v842, 0
      %v917 = vsel %vm873, %v843, 0
      %v920 = vsel %vm873, %v844, 0
      %v923 = vsel %vm873, %v845, 0
      %v926 = vsel %vm873, %v846, 0
      %v929 = vsel %vm873, %v847, 0
      %v932 = vsel %vm873, %v848, 0
      %v935 = vsel %vm873, %v849, 0
      %v938 = vsel %vm873, %v850, 0
      %v941 = vsel %vm873, %v851, 0
      %v944 = vsel %vm873, %v852, 0
      %v947 = vsel %vm873, %v853, 0
      %v950 = vsel %vm873, %v854, 0
      %v953 = vsel %vm873, %v855, 0
      %v956 = vsel %vm873, %v856, 0
      %v959 = vsel %vm873, %v857, 0
      %v962 = vsel %vm873, %v858, 0
      %v965 = vsel %vm873, %v859, 0
      %v968 = vsel %vm873, %v860, 0
      %970 = vmatprep.subr.bf16.mxu0 0
      %971 = vmatpush1.bf16.msra.mxu0 %v869
      %972 = vmatprep.subr.bf16.mxu0 0
      %973 = vmatpush1.bf16.msra.mxu0 %v870
      %974 = vmatprep.subr.bf16.mxu0 0
      %975 = vmatpush1.bf16.msra.mxu0 0
      %976 = vmatprep.subr.bf16.mxu0 0
      %977 = vmatpush1.bf16.msra.mxu0 0
      %978 = vmatprep.subr.bf16.mxu0 0
      %979 = vmatpush1.bf16.msra.mxu0 0
      %980 = vmatprep.subr.bf16.mxu0 0
      %981 = vmatpush1.bf16.msra.mxu0 0
      %982 = vmatprep.subr.bf16.mxu0 0
      %983 = vmatpush1.bf16.msra.mxu0 0
      %984 = vmatprep.subr.bf16.mxu0 0
      %985 = vmatpush1.bf16.msra.mxu0 0
      %986 = vmatprep.subr.bf16.mxu0 0
      %987 = vmatpush1.bf16.msra.mxu0 0
      %988 = vmatprep.subr.bf16.mxu0 0
      %989 = vmatpush1.bf16.msra.mxu0 0
      %990 = vmatprep.subr.bf16.mxu0 0
      %991 = vmatpush1.bf16.msra.mxu0 0
      %992 = vmatprep.subr.bf16.mxu0 0
      %993 = vmatpush1.bf16.msra.mxu0 0
      %994 = vmatprep.subr.bf16.mxu0 0
      %995 = vmatpush1.bf16.msra.mxu0 0
      %996 = vmatprep.subr.bf16.mxu0 0
      %997 = vmatpush1.bf16.msra.mxu0 0
      %998 = vmatprep.subr.bf16.mxu0 0
      %999 = vmatpush1.bf16.msra.mxu0 0
      %1000 = vmatprep.subr.bf16.mxu0 0
      %1001 = vmatpush1.bf16.msra.mxu0 0
      %1002 = vmatprep.mubr.bf16.mxu0 0
      %1003 = vmatmul.mubr.bf16.gmra.mrb[0].mxu0 %v875
      %v1004 = vpop.f32.mrb[0].mxu0
      %v1005 = vadd.f32 0.0, %v1004
      %v1006 = vpop.f32.mrb[0].mxu0
      %v1007 = vpop.f32.mrb[0].mxu0
      %v1008 = vadd.f32 0.0, %v1007
      %v1009 = vpop.f32.mrb[0].mxu0
      %1010 = vmatprep.mubr.bf16.mxu0 0
      %1011 = vmatmul.mubr.bf16.gmra.mrb[0].mxu0 %v878
      %v1012 = vpop.f32.mrb[0].mxu0
      %v1013 = vadd.f32 0.0, %v1012
      %v1014 = vpop.f32.mrb[0].mxu0
      %v1015 = vpop.f32.mrb[0].mxu0
      %v1016 = vadd.f32 0.0, %v1015
      %v1017 = vpop.f32.mrb[0].mxu0
      %1018 = vmatprep.mubr.bf16.mxu0 0
      %1019 = vmatmul.mubr.bf16.gmra.mrb[0].mxu0 %v881
      %v1020 = vpop.f32.mrb[0].mxu0
      %v1021 = vadd.f32 0.0, %v1020
      %v1022 = vpop.f32.mrb[0].mxu0
      %v1023 = vpop.f32.mrb[0].mxu0
      %v1024 = vadd.f32 0.0, %v1023
      %v1025 = vpop.f32.mrb[0].mxu0
      %1026 = vmatprep.mubr.bf16.mxu0 0
      %1027 = vmatmul.mubr.bf16.gmra.mrb[0].mxu0 %v884
      %v1028 = vpop.f32.mrb[0].mxu0
      %v1029 = vadd.f32 0.0, %v1028
      %v1030 = vpop.f32.mrb[0].mxu0
      %v1031 = vpop.f32.mrb[0].mxu0
      %v1032 = vadd.f32 0.0, %v1031
      %v1033 = vpop.f32.mrb[0].mxu0
      %1034 = vmatprep.mubr.bf16.mxu0 0
      %1035 = vmatmul.mubr.bf16.gmra.mrb[0].mxu0 %v887
      %v1036 = vpop.f32.mrb[0].mxu0
      %v1037 = vadd.f32 0.0, %v1036
      %v1038 = vpop.f32.mrb[0].mxu0
      %v1039 = vpop.f32.mrb[0].mxu0
      %v1040 = vadd.f32 0.0, %v1039
      %v1041 = vpop.f32.mrb[0].mxu0
      %1042 = vmatprep.mubr.bf16.mxu0 0
      %1043 = vmatmul.mubr.bf16.gmra.mrb[0].mxu0 %v890
      %v1044 = vpop.f32.mrb[0].mxu0
      %v1045 = vadd.f32 0.0, %v1044
      %v1046 = vpop.f32.mrb[0].mxu0
      %v1047 = vpop.f32.mrb[0].mxu0
      %v1048 = vadd.f32 0.0, %v1047
      %v1049 = vpop.f32.mrb[0].mxu0
      %1050 = vmatprep.mubr.bf16.mxu0 0
      %1051 = vmatmul.mubr.bf16.gmra.mrb[0].mxu0 %v893
      %v1052 = vpop.f32.mrb[0].mxu0
      %v1053 = vadd.f32 0.0, %v1052
      %v1054 = vpop.f32.mrb[0].mxu0
      %v1055 = vpop.f32.mrb[0].mxu0
      %v1056 = vadd.f32 0.0, %v1055
      %v1057 = vpop.f32.mrb[0].mxu0
      %1058 = vmatprep.mubr.bf16.mxu0 0
      %1059 = vmatmul.mubr.bf16.gmra.mrb[0].mxu0 %v896
      %v1060 = vpop.f32.mrb[0].mxu0
      %v1061 = vadd.f32 0.0, %v1060
      %v1062 = vpop.f32.mrb[0].mxu0
      %v1063 = vpop.f32.mrb[0].mxu0
      %v1064 = vadd.f32 0.0, %v1063
      %v1065 = vpop.f32.mrb[0].mxu0
      %1066 = vmatprep.mubr.bf16.mxu0 0
      %1067 = vmatmul.mubr.bf16.gmra.mrb[0].mxu0 %v899
      %v1068 = vpop.f32.mrb[0].mxu0
      %v1069 = vadd.f32 0.0, %v1068
      %v1070 = vpop.f32.mrb[0].mxu0
      %v1071 = vpop.f32.mrb[0].mxu0
      %v1072 = vadd.f32 0.0, %v1071
      %v1073 = vpop.f32.mrb[0].mxu0
      %1074 = vmatprep.mubr.bf16.mxu0 0
      %1075 = vmatmul.mubr.bf16.gmra.mrb[0].mxu0 %v902
      %v1076 = vpop.f32.mrb[0].mxu0
      %v1077 = vadd.f32 0.0, %v1076
      %v1078 = vpop.f32.mrb[0].mxu0
      %v1079 = vpop.f32.mrb[0].mxu0
      %v1080 = vadd.f32 0.0, %v1079
      %v1081 = vpop.f32.mrb[0].mxu0
      %1082 = vmatprep.mubr.bf16.mxu0 0
      %1083 = vmatmul.mubr.bf16.gmra.mrb[0].mxu0 %v905
      %v1084 = vpop.f32.mrb[0].mxu0
      %v1085 = vadd.f32 0.0, %v1084
      %v1086 = vpop.f32.mrb[0].mxu0
      %v1087 = vpop.f32.mrb[0].mxu0
      %v1088 = vadd.f32 0.0, %v1087
      %v1089 = vpop.f32.mrb[0].mxu0
      %1090 = vmatprep.mubr.bf16.mxu0 0
      %1091 = vmatmul.mubr.bf16.gmra.mrb[0].mxu0 %v908
      %v1092 = vpop.f32.mrb[0].mxu0
      %v1093 = vadd.f32 0.0, %v1092
      %v1094 = vpop.f32.mrb[0].mxu0
      %v1095 = vpop.f32.mrb[0].mxu0
      %v1096 = vadd.f32 0.0, %v1095
      %v1097 = vpop.f32.mrb[0].mxu0
      %1098 = vmatprep.mubr.bf16.mxu0 0
      %1099 = vmatmul.mubr.bf16.gmra.mrb[0].mxu0 %v911
      %v1100 = vpop.f32.mrb[0].mxu0
      %v1101 = vadd.f32 0.0, %v1100
      %v1102 = vpop.f32.mrb[0].mxu0
      %v1103 = vpop.f32.mrb[0].mxu0
      %v1104 = vadd.f32 0.0, %v1103
      %v1105 = vpop.f32.mrb[0].mxu0
      %1106 = vmatprep.mubr.bf16.mxu0 0
      %1107 = vmatmul.mubr.bf16.gmra.mrb[0].mxu0 %v914
      %v1108 = vpop.f32.mrb[0].mxu0
      %v1109 = vadd.f32 0.0, %v1108
      %v1110 = vpop.f32.mrb[0].mxu0
      %v1111 = vpop.f32.mrb[0].mxu0
      %v1112 = vadd.f32 0.0, %v1111
      %v1113 = vpop.f32.mrb[0].mxu0
      %1114 = vmatprep.mubr.bf16.mxu0 0
      %1115 = vmatmul.mubr.bf16.gmra.mrb[0].mxu0 %v917
      %v1116 = vpop.f32.mrb[0].mxu0
      %v1117 = vadd.f32 0.0, %v1116
      %v1118 = vpop.f32.mrb[0].mxu0
      %v1119 = vpop.f32.mrb[0].mxu0
      %v1120 = vadd.f32 0.0, %v1119
      %v1121 = vpop.f32.mrb[0].mxu0
      %1122 = vmatprep.mubr.bf16.mxu0 0
      %1123 = vmatmul.mubr.bf16.gmra.mrb[0].mxu0 %v920
      %v1124 = vpop.f32.mrb[0].mxu0
      %v1125 = vadd.f32 0.0, %v1124
      %v1126 = vpop.f32.mrb[0].mxu0
      %v1127 = vpop.f32.mrb[0].mxu0
      %v1128 = vadd.f32 0.0, %v1127
      %v1129 = vpop.f32.mrb[0].mxu0
      %1130 = vmatprep.mubr.bf16.mxu0 0
      %1131 = vmatmul.mubr.bf16.gmra.mrb[0].mxu0 %v923
      %v1132 = vpop.f32.mrb[0].mxu0
      %v1133 = vadd.f32 0.0, %v1132
      %v1134 = vpop.f32.mrb[0].mxu0
      %v1135 = vpop.f32.mrb[0].mxu0
      %v1136 = vadd.f32 0.0, %v1135
      %v1137 = vpop.f32.mrb[0].mxu0
      %1138 = vmatprep.mubr.bf16.mxu0 0
      %1139 = vmatmul.mubr.bf16.gmra.mrb[0].mxu0 %v926
      %v1140 = vpop.f32.mrb[0].mxu0
      %v1141 = vadd.f32 0.0, %v1140
      %v1142 = vpop.f32.mrb[0].mxu0
      %v1143 = vpop.f32.mrb[0].mxu0
      %v1144 = vadd.f32 0.0, %v1143
      %v1145 = vpop.f32.mrb[0].mxu0
      %1146 = vmatprep.mubr.bf16.mxu0 0
      %1147 = vmatmul.mubr.bf16.gmra.mrb[0].mxu0 %v929
      %v1148 = vpop.f32.mrb[0].mxu0
      %v1149 = vadd.f32 0.0, %v1148
      %v1150 = vpop.f32.mrb[0].mxu0
      %v1151 = vpop.f32.mrb[0].mxu0
      %v1152 = vadd.f32 0.0, %v1151
      %v1153 = vpop.f32.mrb[0].mxu0
      %1154 = vmatprep.mubr.bf16.mxu0 0
      %1155 = vmatmul.mubr.bf16.gmra.mrb[0].mxu0 %v932
      %v1156 = vpop.f32.mrb[0].mxu0
      %v1157 = vadd.f32 0.0, %v1156
      %v1158 = vpop.f32.mrb[0].mxu0
      %v1159 = vpop.f32.mrb[0].mxu0
      %v1160 = vadd.f32 0.0, %v1159
      %v1161 = vpop.f32.mrb[0].mxu0
      %1162 = vmatprep.mubr.bf16.mxu0 0
      %1163 = vmatmul.mubr.bf16.gmra.mrb[0].mxu0 %v935
      %v1164 = vpop.f32.mrb[0].mxu0
      %v1165 = vadd.f32 0.0, %v1164
      %v1166 = vpop.f32.mrb[0].mxu0
      %v1167 = vpop.f32.mrb[0].mxu0
      %v1168 = vadd.f32 0.0, %v1167
      %v1169 = vpop.f32.mrb[0].mxu0
      %1170 = vmatprep.mubr.bf16.mxu0 0
      %1171 = vmatmul.mubr.bf16.gmra.mrb[0].mxu0 %v938
      %v1172 = vpop.f32.mrb[0].mxu0
      %v1173 = vadd.f32 0.0, %v1172
      %v1174 = vpop.f32.mrb[0].mxu0
      %v1175 = vpop.f32.mrb[0].mxu0
      %v1176 = vadd.f32 0.0, %v1175
      %v1177 = vpop.f32.mrb[0].mxu0
      %1178 = vmatprep.mubr.bf16.mxu0 0
      %1179 = vmatmul.mubr.bf16.gmra.mrb[0].mxu0 %v941
      %v1180 = vpop.f32.mrb[0].mxu0
      %v1181 = vadd.f32 0.0, %v1180
      %v1182 = vpop.f32.mrb[0].mxu0
      %v1183 = vpop.f32.mrb[0].mxu0
      %v1184 = vadd.f32 0.0, %v1183
      %v1185 = vpop.f32.mrb[0].mxu0
      %1186 = vmatprep.mubr.bf16.mxu0 0
      %1187 = vmatmul.mubr.bf16.gmra.mrb[0].mxu0 %v944
      %v1188 = vpop.f32.mrb[0].mxu0
      %v1189 = vadd.f32 0.0, %v1188
      %v1190 = vpop.f32.mrb[0].mxu0
      %v1191 = vpop.f32.mrb[0].mxu0
      %v1192 = vadd.f32 0.0, %v1191
      %v1193 = vpop.f32.mrb[0].mxu0
      %1194 = vmatprep.mubr.bf16.mxu0 0
      %1195 = vmatmul.mubr.bf16.gmra.mrb[0].mxu0 %v947
      %v1196 = vpop.f32.mrb[0].mxu0
      %v1197 = vadd.f32 0.0, %v1196
      %v1198 = vpop.f32.mrb[0].mxu0
      %v1199 = vpop.f32.mrb[0].mxu0
      %v1200 = vadd.f32 0.0, %v1199
      %v1201 = vpop.f32.mrb[0].mxu0
      %1202 = vmatprep.mubr.bf16.mxu0 0
      %1203 = vmatmul.mubr.bf16.gmra.mrb[0].mxu0 %v950
      %v1204 = vpop.f32.mrb[0].mxu0
      %v1205 = vadd.f32 0.0, %v1204
      %v1206 = vpop.f32.mrb[0].mxu0
      %v1207 = vpop.f32.mrb[0].mxu0
      %v1208 = vadd.f32 0.0, %v1207
      %v1209 = vpop.f32.mrb[0].mxu0
      %1210 = vmatprep.mubr.bf16.mxu0 0
      %1211 = vmatmul.mubr.bf16.gmra.mrb[0].mxu0 %v953
      %v1212 = vpop.f32.mrb[0].mxu0
      %v1213 = vadd.f32 0.0, %v1212
      %v1214 = vpop.f32.mrb[0].mxu0
      %v1215 = vpop.f32.mrb[0].mxu0
      %v1216 = vadd.f32 0.0, %v1215
      %v1217 = vpop.f32.mrb[0].mxu0
      %1218 = vmatprep.mubr.bf16.mxu0 0
      %1219 = vmatmul.mubr.bf16.gmra.mrb[0].mxu0 %v956
      %v1220 = vpop.f32.mrb[0].mxu0
      %v1221 = vadd.f32 0.0, %v1220
      %v1222 = vpop.f32.mrb[0].mxu0
      %v1223 = vpop.f32.mrb[0].mxu0
      %v1224 = vadd.f32 0.0, %v1223
      %v1225 = vpop.f32.mrb[0].mxu0
      %1226 = vmatprep.mubr.bf16.mxu0 0
      %1227 = vmatmul.mubr.bf16.gmra.mrb[0].mxu0 %v959
      %v1228 = vpop.f32.mrb[0].mxu0
      %v1229 = vadd.f32 0.0, %v1228
      %v1230 = vpop.f32.mrb[0].mxu0
      %v1231 = vpop.f32.mrb[0].mxu0
      %v1232 = vadd.f32 0.0, %v1231
      %v1233 = vpop.f32.mrb[0].mxu0
      %1234 = vmatprep.mubr.bf16.mxu0 0
      %1235 = vmatmul.mubr.bf16.gmra.mrb[0].mxu0 %v962
      %v1236 = vpop.f32.mrb[0].mxu0
      %v1237 = vadd.f32 0.0, %v1236
      %v1238 = vpop.f32.mrb[0].mxu0
      %v1239 = vpop.f32.mrb[0].mxu0
      %v1240 = vadd.f32 0.0, %v1239
      %v1241 = vpop.f32.mrb[0].mxu0
      %1242 = vmatprep.mubr.bf16.mxu0 0
      %1243 = vmatmul.mubr.bf16.gmra.mrb[0].mxu0 %v965
      %v1244 = vpop.f32.mrb[0].mxu0
      %v1245 = vadd.f32 0.0, %v1244
      %v1246 = vpop.f32.mrb[0].mxu0
      %v1247 = vpop.f32.mrb[0].mxu0
      %v1248 = vadd.f32 0.0, %v1247
      %v1249 = vpop.f32.mrb[0].mxu0
      %1250 = vmatprep.mubr.bf16.mxu0 0
      %1251 = vmatmul.mubr.bf16.gmra.mrb[0].mxu0 %v968
      %v1252 = vpop.f32.mrb[0].mxu0
      %v1253 = vadd.f32 0.0, %v1252
      %v1254 = vpop.f32.mrb[0].mxu0
      %v1255 = vpop.f32.mrb[0].mxu0
      %v1256 = vadd.f32 0.0, %v1255
      %v1257 = vpop.f32.mrb[0].mxu0
      %1258 = vdwg.mxu0
      %v1323 = vunpack.c.l.b16 %v565
      %v1324 = vunpack.c.l.b16 %v566
      %v1325 = vunpack.c.l.b16 %v567
      %v1326 = vunpack.c.l.b16 %v568
      %v1327 = vunpack.c.l.b16 %v569
      %v1328 = vunpack.c.l.b16 %v570
      %v1329 = vunpack.c.l.b16 %v571
      %v1330 = vunpack.c.l.b16 %v572
      %v1331 = vunpack.c.l.b16 %v573
      %v1332 = vunpack.c.l.b16 %v574
      %v1333 = vunpack.c.l.b16 %v575
      %v1334 = vunpack.c.l.b16 %v576
      %v1335 = vunpack.c.l.b16 %v577
      %v1336 = vunpack.c.l.b16 %v578
      %v1337 = vunpack.c.l.b16 %v579
      %v1338 = vunpack.c.l.b16 %v580
      %v1339 = vunpack.c.l.b16 %v581
      %v1340 = vunpack.c.l.b16 %v582
      %v1341 = vunpack.c.l.b16 %v583
      %v1342 = vunpack.c.l.b16 %v584
      %v1343 = vunpack.c.l.b16 %v585
      %v1344 = vunpack.c.l.b16 %v586
      %v1345 = vunpack.c.l.b16 %v587
      %v1346 = vunpack.c.l.b16 %v588
      %v1347 = vunpack.c.l.b16 %v589
      %v1348 = vunpack.c.l.b16 %v590
      %v1349 = vunpack.c.l.b16 %v591
      %v1350 = vunpack.c.l.b16 %v592
      %v1351 = vunpack.c.l.b16 %v593
      %v1352 = vunpack.c.l.b16 %v594
      %v1353 = vunpack.c.l.b16 %v595
      %v1354 = vunpack.c.l.b16 %v596
      %v1355 = vunpack.c.l.b16 %v597
      %v1356 = vunpack.c.l.b16 %v598
      %v1357 = vunpack.c.l.b16 %v599
      %v1358 = vunpack.c.l.b16 %v600
      %v1359 = vunpack.c.l.b16 %v601
      %v1360 = vunpack.c.l.b16 %v602
      %v1361 = vunpack.c.l.b16 %v603
      %v1362 = vunpack.c.l.b16 %v604
      %v1363 = vunpack.c.l.b16 %v605
      %v1364 = vunpack.c.l.b16 %v606
      %v1365 = vunpack.c.l.b16 %v607
      %v1366 = vunpack.c.l.b16 %v608
      %v1367 = vunpack.c.l.b16 %v609
      %v1368 = vunpack.c.l.b16 %v610
      %v1369 = vunpack.c.l.b16 %v611
      %v1370 = vunpack.c.l.b16 %v612
      %v1371 = vunpack.c.l.b16 %v613
      %v1372 = vunpack.c.l.b16 %v614
      %v1373 = vunpack.c.l.b16 %v615
      %v1374 = vunpack.c.l.b16 %v616
      %v1375 = vunpack.c.l.b16 %v617
      %v1376 = vunpack.c.l.b16 %v618
      %v1377 = vunpack.c.l.b16 %v619
      %v1378 = vunpack.c.l.b16 %v620
      %v1379 = vunpack.c.l.b16 %v621
      %v1380 = vunpack.c.l.b16 %v622
      %v1381 = vunpack.c.l.b16 %v623
      %v1382 = vunpack.c.l.b16 %v624
      %v1383 = vunpack.c.l.b16 %v625
      %v1384 = vunpack.c.l.b16 %v626
      %v1385 = vunpack.c.l.b16 %v627
      %v1386 = vunpack.c.l.b16 %v628
      %v1387 = vpack.c.b16 %v1324, %v1323
      %v1388 = vpack.c.b16 %v1326, %v1325
      %v1389 = vpack.c.b16 %v1328, %v1327
      %v1390 = vpack.c.b16 %v1330, %v1329
      %v1391 = vpack.c.b16 %v1332, %v1331
      %v1392 = vpack.c.b16 %v1334, %v1333
      %v1393 = vpack.c.b16 %v1336, %v1335
      %v1394 = vpack.c.b16 %v1338, %v1337
      %v1395 = vpack.c.b16 %v1340, %v1339
      %v1396 = vpack.c.b16 %v1342, %v1341
      %v1397 = vpack.c.b16 %v1344, %v1343
      %v1398 = vpack.c.b16 %v1346, %v1345
      %v1399 = vpack.c.b16 %v1348, %v1347
      %v1400 = vpack.c.b16 %v1350, %v1349
      %v1401 = vpack.c.b16 %v1352, %v1351
      %v1402 = vpack.c.b16 %v1354, %v1353
      %v1403 = vpack.c.b16 %v1356, %v1355
      %v1404 = vpack.c.b16 %v1358, %v1357
      %v1405 = vpack.c.b16 %v1360, %v1359
      %v1406 = vpack.c.b16 %v1362, %v1361
      %v1407 = vpack.c.b16 %v1364, %v1363
      %v1408 = vpack.c.b16 %v1366, %v1365
      %v1409 = vpack.c.b16 %v1368, %v1367
      %v1410 = vpack.c.b16 %v1370, %v1369
      %v1411 = vpack.c.b16 %v1372, %v1371
      %v1412 = vpack.c.b16 %v1374, %v1373
      %v1413 = vpack.c.b16 %v1376, %v1375
      %v1414 = vpack.c.b16 %v1378, %v1377
      %v1415 = vpack.c.b16 %v1380, %v1379
      %v1416 = vpack.c.b16 %v1382, %v1381
      %v1417 = vpack.c.b16 %v1384, %v1383
      %v1418 = vpack.c.b16 %v1386, %v1385
      %v1423 = vunpack.c.l.b16 %v629
      %v1424 = vunpack.c.l.b16 %v630
      %v1425 = vunpack.c.l.b16 %v631
      %v1426 = vunpack.c.l.b16 %v632
      %v1427 = vpack.c.b16 %v1424, %v1423
      %v1428 = vpack.c.b16 %v1426, %v1425
      %v1432 = vsel %vm873, %v1387, 0
      %v1435 = vsel %vm873, %v1388, 0
      %v1438 = vsel %vm873, %v1389, 0
      %v1441 = vsel %vm873, %v1390, 0
      %v1444 = vsel %vm873, %v1391, 0
      %v1447 = vsel %vm873, %v1392, 0
      %v1450 = vsel %vm873, %v1393, 0
      %v1453 = vsel %vm873, %v1394, 0
      %v1456 = vsel %vm873, %v1395, 0
      %v1459 = vsel %vm873, %v1396, 0
      %v1462 = vsel %vm873, %v1397, 0
      %v1465 = vsel %vm873, %v1398, 0
      %v1468 = vsel %vm873, %v1399, 0
      %v1471 = vsel %vm873, %v1400, 0
      %v1474 = vsel %vm873, %v1401, 0
      %v1477 = vsel %vm873, %v1402, 0
      %v1480 = vsel %vm873, %v1403, 0
      %v1483 = vsel %vm873, %v1404, 0
      %v1486 = vsel %vm873, %v1405, 0
      %v1489 = vsel %vm873, %v1406, 0
      %v1492 = vsel %vm873, %v1407, 0
      %v1495 = vsel %vm873, %v1408, 0
      %v1498 = vsel %vm873, %v1409, 0
      %v1501 = vsel %vm873, %v1410, 0
      %v1504 = vsel %vm873, %v1411, 0
      %v1507 = vsel %vm873, %v1412, 0
      %v1510 = vsel %vm873, %v1413, 0
      %v1513 = vsel %vm873, %v1414, 0
      %v1516 = vsel %vm873, %v1415, 0
      %v1519 = vsel %vm873, %v1416, 0
      %v1522 = vsel %vm873, %v1417, 0
      %v1525 = vsel %vm873, %v1418, 0
      %1527 = vmatprep.subr.bf16.mxu0 0
      %1528 = vmatpush1.bf16.msra.mxu0 %v1427
      %1529 = vmatprep.subr.bf16.mxu0 0
      %1530 = vmatpush1.bf16.msra.mxu0 %v1428
      %1531 = vmatprep.subr.bf16.mxu0 0
      %1532 = vmatpush1.bf16.msra.mxu0 0
      %1533 = vmatprep.subr.bf16.mxu0 0
      %1534 = vmatpush1.bf16.msra.mxu0 0
      %1535 = vmatprep.subr.bf16.mxu0 0
      %1536 = vmatpush1.bf16.msra.mxu0 0
      %1537 = vmatprep.subr.bf16.mxu0 0
      %1538 = vmatpush1.bf16.msra.mxu0 0
      %1539 = vmatprep.subr.bf16.mxu0 0
      %1540 = vmatpush1.bf16.msra.mxu0 0
      %1541 = vmatprep.subr.bf16.mxu0 0
      %1542 = vmatpush1.bf16.msra.mxu0 0
      %1543 = vmatprep.subr.bf16.mxu0 0
      %1544 = vmatpush1.bf16.msra.mxu0 0
      %1545 = vmatprep.subr.bf16.mxu0 0
      %1546 = vmatpush1.bf16.msra.mxu0 0
      %1547 = vmatprep.subr.bf16.mxu0 0
      %1548 = vmatpush1.bf16.msra.mxu0 0
      %1549 = vmatprep.subr.bf16.mxu0 0
      %1550 = vmatpush1.bf16.msra.mxu0 0
      %1551 = vmatprep.subr.bf16.mxu0 0
      %1552 = vmatpush1.bf16.msra.mxu0 0
      %1553 = vmatprep.subr.bf16.mxu0 0
      %1554 = vmatpush1.bf16.msra.mxu0 0
      %1555 = vmatprep.subr.bf16.mxu0 0
      %1556 = vmatpush1.bf16.msra.mxu0 0
      %1557 = vmatprep.subr.bf16.mxu0 0
      %1558 = vmatpush1.bf16.msra.mxu0 0
      %1559 = vmatprep.mubr.bf16.mxu0 0
      %1560 = vmatmul.mubr.bf16.gmra.mrb[0].mxu0 %v1432
      %v1561 = vpop.f32.mrb[0].mxu0
      %v1562 = vadd.f32 %v1005, %v1561
      %v1563 = vpop.f32.mrb[0].mxu0
      %v1564 = vpop.f32.mrb[0].mxu0
      %v1565 = vadd.f32 %v1008, %v1564
      %v1566 = vpop.f32.mrb[0].mxu0
      %1567 = vmatprep.mubr.bf16.mxu0 0
      %1568 = vmatmul.mubr.bf16.gmra.mrb[0].mxu0 %v1435
      %v1569 = vpop.f32.mrb[0].mxu0
      %v1570 = vadd.f32 %v1013, %v1569
      %v1571 = vpop.f32.mrb[0].mxu0
      %v1572 = vpop.f32.mrb[0].mxu0
      %v1573 = vadd.f32 %v1016, %v1572
      %v1574 = vpop.f32.mrb[0].mxu0
      %1575 = vmatprep.mubr.bf16.mxu0 0
      %1576 = vmatmul.mubr.bf16.gmra.mrb[0].mxu0 %v1438
      %v1577 = vpop.f32.mrb[0].mxu0
      %v1578 = vadd.f32 %v1021, %v1577
      %v1579 = vpop.f32.mrb[0].mxu0
      %v1580 = vpop.f32.mrb[0].mxu0
      %v1581 = vadd.f32 %v1024, %v1580
      %v1582 = vpop.f32.mrb[0].mxu0
      %1583 = vmatprep.mubr.bf16.mxu0 0
      %1584 = vmatmul.mubr.bf16.gmra.mrb[0].mxu0 %v1441
      %v1585 = vpop.f32.mrb[0].mxu0
      %v1586 = vadd.f32 %v1029, %v1585
      %v1587 = vpop.f32.mrb[0].mxu0
      %v1588 = vpop.f32.mrb[0].mxu0
      %v1589 = vadd.f32 %v1032, %v1588
      %v1590 = vpop.f32.mrb[0].mxu0
      %1591 = vmatprep.mubr.bf16.mxu0 0
      %1592 = vmatmul.mubr.bf16.gmra.mrb[0].mxu0 %v1444
      %v1593 = vpop.f32.mrb[0].mxu0
      %v1594 = vadd.f32 %v1037, %v1593
      %v1595 = vpop.f32.mrb[0].mxu0
      %v1596 = vpop.f32.mrb[0].mxu0
      %v1597 = vadd.f32 %v1040, %v1596
      %v1598 = vpop.f32.mrb[0].mxu0
      %1599 = vmatprep.mubr.bf16.mxu0 0
      %1600 = vmatmul.mubr.bf16.gmra.mrb[0].mxu0 %v1447
      %v1601 = vpop.f32.mrb[0].mxu0
      %v1602 = vadd.f32 %v1045, %v1601
      %v1603 = vpop.f32.mrb[0].mxu0
      %v1604 = vpop.f32.mrb[0].mxu0
      %v1605 = vadd.f32 %v1048, %v1604
      %v1606 = vpop.f32.mrb[0].mxu0
      %1607 = vmatprep.mubr.bf16.mxu0 0
      %1608 = vmatmul.mubr.bf16.gmra.mrb[0].mxu0 %v1450
      %v1609 = vpop.f32.mrb[0].mxu0
      %v1610 = vadd.f32 %v1053, %v1609
      %v1611 = vpop.f32.mrb[0].mxu0
      %v1612 = vpop.f32.mrb[0].mxu0
      %v1613 = vadd.f32 %v1056, %v1612
      %v1614 = vpop.f32.mrb[0].mxu0
      %1615 = vmatprep.mubr.bf16.mxu0 0
      %1616 = vmatmul.mubr.bf16.gmra.mrb[0].mxu0 %v1453
      %v1617 = vpop.f32.mrb[0].mxu0
      %v1618 = vadd.f32 %v1061, %v1617
      %v1619 = vpop.f32.mrb[0].mxu0
      %v1620 = vpop.f32.mrb[0].mxu0
      %v1621 = vadd.f32 %v1064, %v1620
      %v1622 = vpop.f32.mrb[0].mxu0
      %1623 = vmatprep.mubr.bf16.mxu0 0
      %1624 = vmatmul.mubr.bf16.gmra.mrb[0].mxu0 %v1456
      %v1625 = vpop.f32.mrb[0].mxu0
      %v1626 = vadd.f32 %v1069, %v1625
      %v1627 = vpop.f32.mrb[0].mxu0
      %v1628 = vpop.f32.mrb[0].mxu0
      %v1629 = vadd.f32 %v1072, %v1628
      %v1630 = vpop.f32.mrb[0].mxu0
      %1631 = vmatprep.mubr.bf16.mxu0 0
      %1632 = vmatmul.mubr.bf16.gmra.mrb[0].mxu0 %v1459
      %v1633 = vpop.f32.mrb[0].mxu0
      %v1634 = vadd.f32 %v1077, %v1633
      %v1635 = vpop.f32.mrb[0].mxu0
      %v1636 = vpop.f32.mrb[0].mxu0
      %v1637 = vadd.f32 %v1080, %v1636
      %v1638 = vpop.f32.mrb[0].mxu0
      %1639 = vmatprep.mubr.bf16.mxu0 0
      %1640 = vmatmul.mubr.bf16.gmra.mrb[0].mxu0 %v1462
      %v1641 = vpop.f32.mrb[0].mxu0
      %v1642 = vadd.f32 %v1085, %v1641
      %v1643 = vpop.f32.mrb[0].mxu0
      %v1644 = vpop.f32.mrb[0].mxu0
      %v1645 = vadd.f32 %v1088, %v1644
      %v1646 = vpop.f32.mrb[0].mxu0
      %1647 = vmatprep.mubr.bf16.mxu0 0
      %1648 = vmatmul.mubr.bf16.gmra.mrb[0].mxu0 %v1465
      %v1649 = vpop.f32.mrb[0].mxu0
      %v1650 = vadd.f32 %v1093, %v1649
      %v1651 = vpop.f32.mrb[0].mxu0
      %v1652 = vpop.f32.mrb[0].mxu0
      %v1653 = vadd.f32 %v1096, %v1652
      %v1654 = vpop.f32.mrb[0].mxu0
      %1655 = vmatprep.mubr.bf16.mxu0 0
      %1656 = vmatmul.mubr.bf16.gmra.mrb[0].mxu0 %v1468
      %v1657 = vpop.f32.mrb[0].mxu0
      %v1658 = vadd.f32 %v1101, %v1657
      %v1659 = vpop.f32.mrb[0].mxu0
      %v1660 = vpop.f32.mrb[0].mxu0
      %v1661 = vadd.f32 %v1104, %v1660
      %v1662 = vpop.f32.mrb[0].mxu0
      %1663 = vmatprep.mubr.bf16.mxu0 0
      %1664 = vmatmul.mubr.bf16.gmra.mrb[0].mxu0 %v1471
      %v1665 = vpop.f32.mrb[0].mxu0
      %v1666 = vadd.f32 %v1109, %v1665
      %v1667 = vpop.f32.mrb[0].mxu0
      %v1668 = vpop.f32.mrb[0].mxu0
      %v1669 = vadd.f32 %v1112, %v1668
      %v1670 = vpop.f32.mrb[0].mxu0
      %1671 = vmatprep.mubr.bf16.mxu0 0
      %1672 = vmatmul.mubr.bf16.gmra.mrb[0].mxu0 %v1474
      %v1673 = vpop.f32.mrb[0].mxu0
      %v1674 = vadd.f32 %v1117, %v1673
      %v1675 = vpop.f32.mrb[0].mxu0
      %v1676 = vpop.f32.mrb[0].mxu0
      %v1677 = vadd.f32 %v1120, %v1676
      %v1678 = vpop.f32.mrb[0].mxu0
      %1679 = vmatprep.mubr.bf16.mxu0 0
      %1680 = vmatmul.mubr.bf16.gmra.mrb[0].mxu0 %v1477
      %v1681 = vpop.f32.mrb[0].mxu0
      %v1682 = vadd.f32 %v1125, %v1681
      %v1683 = vpop.f32.mrb[0].mxu0
      %v1684 = vpop.f32.mrb[0].mxu0
      %v1685 = vadd.f32 %v1128, %v1684
      %v1686 = vpop.f32.mrb[0].mxu0
      %1687 = vmatprep.mubr.bf16.mxu0 0
      %1688 = vmatmul.mubr.bf16.gmra.mrb[0].mxu0 %v1480
      %v1689 = vpop.f32.mrb[0].mxu0
      %v1690 = vadd.f32 %v1133, %v1689
      %v1691 = vpop.f32.mrb[0].mxu0
      %v1692 = vpop.f32.mrb[0].mxu0
      %v1693 = vadd.f32 %v1136, %v1692
      %v1694 = vpop.f32.mrb[0].mxu0
      %1695 = vmatprep.mubr.bf16.mxu0 0
      %1696 = vmatmul.mubr.bf16.gmra.mrb[0].mxu0 %v1483
      %v1697 = vpop.f32.mrb[0].mxu0
      %v1698 = vadd.f32 %v1141, %v1697
      %v1699 = vpop.f32.mrb[0].mxu0
      %v1700 = vpop.f32.mrb[0].mxu0
      %v1701 = vadd.f32 %v1144, %v1700
      %v1702 = vpop.f32.mrb[0].mxu0
      %1703 = vmatprep.mubr.bf16.mxu0 0
      %1704 = vmatmul.mubr.bf16.gmra.mrb[0].mxu0 %v1486
      %v1705 = vpop.f32.mrb[0].mxu0
      %v1706 = vadd.f32 %v1149, %v1705
      %v1707 = vpop.f32.mrb[0].mxu0
      %v1708 = vpop.f32.mrb[0].mxu0
      %v1709 = vadd.f32 %v1152, %v1708
      %v1710 = vpop.f32.mrb[0].mxu0
      %1711 = vmatprep.mubr.bf16.mxu0 0
      %1712 = vmatmul.mubr.bf16.gmra.mrb[0].mxu0 %v1489
      %v1713 = vpop.f32.mrb[0].mxu0
      %v1714 = vadd.f32 %v1157, %v1713
      %v1715 = vpop.f32.mrb[0].mxu0
      %v1716 = vpop.f32.mrb[0].mxu0
      %v1717 = vadd.f32 %v1160, %v1716
      %v1718 = vpop.f32.mrb[0].mxu0
      %1719 = vmatprep.mubr.bf16.mxu0 0
      %1720 = vmatmul.mubr.bf16.gmra.mrb[0].mxu0 %v1492
      %v1721 = vpop.f32.mrb[0].mxu0
      %v1722 = vadd.f32 %v1165, %v1721
      %v1723 = vpop.f32.mrb[0].mxu0
      %v1724 = vpop.f32.mrb[0].mxu0
      %v1725 = vadd.f32 %v1168, %v1724
      %v1726 = vpop.f32.mrb[0].mxu0
      %1727 = vmatprep.mubr.bf16.mxu0 0
      %1728 = vmatmul.mubr.bf16.gmra.mrb[0].mxu0 %v1495
      %v1729 = vpop.f32.mrb[0].mxu0
      %v1730 = vadd.f32 %v1173, %v1729
      %v1731 = vpop.f32.mrb[0].mxu0
      %v1732 = vpop.f32.mrb[0].mxu0
      %v1733 = vadd.f32 %v1176, %v1732
      %v1734 = vpop.f32.mrb[0].mxu0
      %1735 = vmatprep.mubr.bf16.mxu0 0
      %1736 = vmatmul.mubr.bf16.gmra.mrb[0].mxu0 %v1498
      %v1737 = vpop.f32.mrb[0].mxu0
      %v1738 = vadd.f32 %v1181, %v1737
      %v1739 = vpop.f32.mrb[0].mxu0
      %v1740 = vpop.f32.mrb[0].mxu0
      %v1741 = vadd.f32 %v1184, %v1740
      %v1742 = vpop.f32.mrb[0].mxu0
      %1743 = vmatprep.mubr.bf16.mxu0 0
      %1744 = vmatmul.mubr.bf16.gmra.mrb[0].mxu0 %v1501
      %v1745 = vpop.f32.mrb[0].mxu0
      %v1746 = vadd.f32 %v1189, %v1745
      %v1747 = vpop.f32.mrb[0].mxu0
      %v1748 = vpop.f32.mrb[0].mxu0
      %v1749 = vadd.f32 %v1192, %v1748
      %v1750 = vpop.f32.mrb[0].mxu0
      %1751 = vmatprep.mubr.bf16.mxu0 0
      %1752 = vmatmul.mubr.bf16.gmra.mrb[0].mxu0 %v1504
      %v1753 = vpop.f32.mrb[0].mxu0
      %v1754 = vadd.f32 %v1197, %v1753
      %v1755 = vpop.f32.mrb[0].mxu0
      %v1756 = vpop.f32.mrb[0].mxu0
      %v1757 = vadd.f32 %v1200, %v1756
      %v1758 = vpop.f32.mrb[0].mxu0
      %1759 = vmatprep.mubr.bf16.mxu0 0
      %1760 = vmatmul.mubr.bf16.gmra.mrb[0].mxu0 %v1507
      %v1761 = vpop.f32.mrb[0].mxu0
      %v1762 = vadd.f32 %v1205, %v1761
      %v1763 = vpop.f32.mrb[0].mxu0
      %v1764 = vpop.f32.mrb[0].mxu0
      %v1765 = vadd.f32 %v1208, %v1764
      %v1766 = vpop.f32.mrb[0].mxu0
      %1767 = vmatprep.mubr.bf16.mxu0 0
      %1768 = vmatmul.mubr.bf16.gmra.mrb[0].mxu0 %v1510
      %v1769 = vpop.f32.mrb[0].mxu0
      %v1770 = vadd.f32 %v1213, %v1769
      %v1771 = vpop.f32.mrb[0].mxu0
      %v1772 = vpop.f32.mrb[0].mxu0
      %v1773 = vadd.f32 %v1216, %v1772
      %v1774 = vpop.f32.mrb[0].mxu0
      %1775 = vmatprep.mubr.bf16.mxu0 0
      %1776 = vmatmul.mubr.bf16.gmra.mrb[0].mxu0 %v1513
      %v1777 = vpop.f32.mrb[0].mxu0
      %v1778 = vadd.f32 %v1221, %v1777
      %v1779 = vpop.f32.mrb[0].mxu0
      %v1780 = vpop.f32.mrb[0].mxu0
      %v1781 = vadd.f32 %v1224, %v1780
      %v1782 = vpop.f32.mrb[0].mxu0
      %1783 = vmatprep.mubr.bf16.mxu0 0
      %1784 = vmatmul.mubr.bf16.gmra.mrb[0].mxu0 %v1516
      %v1785 = vpop.f32.mrb[0].mxu0
      %v1786 = vadd.f32 %v1229, %v1785
      %v1787 = vpop.f32.mrb[0].mxu0
      %v1788 = vpop.f32.mrb[0].mxu0
      %v1789 = vadd.f32 %v1232, %v1788
      %v1790 = vpop.f32.mrb[0].mxu0
      %1791 = vmatprep.mubr.bf16.mxu0 0
      %1792 = vmatmul.mubr.bf16.gmra.mrb[0].mxu0 %v1519
      %v1793 = vpop.f32.mrb[0].mxu0
      %v1794 = vadd.f32 %v1237, %v1793
      %v1795 = vpop.f32.mrb[0].mxu0
      %v1796 = vpop.f32.mrb[0].mxu0
      %v1797 = vadd.f32 %v1240, %v1796
      %v1798 = vpop.f32.mrb[0].mxu0
      %1799 = vmatprep.mubr.bf16.mxu0 0
      %1800 = vmatmul.mubr.bf16.gmra.mrb[0].mxu0 %v1522
      %v1801 = vpop.f32.mrb[0].mxu0
      %v1802 = vadd.f32 %v1245, %v1801
      %v1803 = vpop.f32.mrb[0].mxu0
      %v1804 = vpop.f32.mrb[0].mxu0
      %v1805 = vadd.f32 %v1248, %v1804
      %v1806 = vpop.f32.mrb[0].mxu0
      %1807 = vmatprep.mubr.bf16.mxu0 0
      %1808 = vmatmul.mubr.bf16.gmra.mrb[0].mxu0 %v1525
      %v1809 = vpop.f32.mrb[0].mxu0
      %v1810 = vadd.f32 %v1253, %v1809
      %v1811 = vpop.f32.mrb[0].mxu0
      %v1812 = vpop.f32.mrb[0].mxu0
      %v1813 = vadd.f32 %v1256, %v1812
      %v1814 = vpop.f32.mrb[0].mxu0
      %1815 = vdwg.mxu0
      %v1816 = vld [vmem:[%s550] sm:$0xff]
      %v1817 = vld [vmem:[%s550 + $0x8] sm:$0xff]
      %v1818 = vld [vmem:[%s550 + $0x10] sm:$0xff]
      %v1819 = vld [vmem:[%s550 + $0x18] sm:$0xff]
      %v1820 = vld [vmem:[%s550 + $0x20] sm:$0xff]
      %v1821 = vld [vmem:[%s550 + $0x28] sm:$0xff]
      %v1822 = vld [vmem:[%s550 + $0x30] sm:$0xff]
      %v1823 = vld [vmem:[%s550 + $0x38] sm:$0xff]
      %v1824 = vld [vmem:[%s550 + $0x40] sm:$0xff]
      %v1825 = vld [vmem:[%s550 + $0x48] sm:$0xff]
      %v1826 = vld [vmem:[%s550 + $0x50] sm:$0xff]
      %v1827 = vld [vmem:[%s550 + $0x58] sm:$0xff]
      %v1828 = vld [vmem:[%s550 + $0x60] sm:$0xff]
      %v1829 = vld [vmem:[%s550 + $0x68] sm:$0xff]
      %v1830 = vld [vmem:[%s550 + $0x70] sm:$0xff]
      %v1831 = vld [vmem:[%s550 + $0x78] sm:$0xff]
      %v1832 = vld [vmem:[%s550 + $0x80] sm:$0xff]
      %v1833 = vld [vmem:[%s550 + $0x88] sm:$0xff]
      %v1834 = vld [vmem:[%s550 + $0x90] sm:$0xff]
      %v1835 = vld [vmem:[%s550 + $0x98] sm:$0xff]
      %v1836 = vld [vmem:[%s550 + $0xa0] sm:$0xff]
      %v1837 = vld [vmem:[%s550 + $0xa8] sm:$0xff]
      %v1838 = vld [vmem:[%s550 + $0xb0] sm:$0xff]
      %v1839 = vld [vmem:[%s550 + $0xb8] sm:$0xff]
      %v1840 = vld [vmem:[%s550 + $0xc0] sm:$0xff]
      %v1841 = vld [vmem:[%s550 + $0xc8] sm:$0xff]
      %v1842 = vld [vmem:[%s550 + $0xd0] sm:$0xff]
      %v1843 = vld [vmem:[%s550 + $0xd8] sm:$0xff]
      %v1844 = vld [vmem:[%s550 + $0xe0] sm:$0xff]
      %v1845 = vld [vmem:[%s550 + $0xe8] sm:$0xff]
      %v1846 = vld [vmem:[%s550 + $0xf0] sm:$0xff]
      %v1847 = vld [vmem:[%s550 + $0xf8] sm:$0xff]
      %v1848 = vld [vmem:[%s550 + $0x100] sm:$0xff]
      %v1849 = vld [vmem:[%s550 + $0x108] sm:$0xff]
      %v1850 = vld [vmem:[%s550 + $0x110] sm:$0xff]
      %v1851 = vld [vmem:[%s550 + $0x118] sm:$0xff]
      %v1852 = vld [vmem:[%s550 + $0x120] sm:$0xff]
      %v1853 = vld [vmem:[%s550 + $0x128] sm:$0xff]
      %v1854 = vld [vmem:[%s550 + $0x130] sm:$0xff]
      %v1855 = vld [vmem:[%s550 + $0x138] sm:$0xff]
      %v1856 = vld [vmem:[%s550 + $0x140] sm:$0xff]
      %v1857 = vld [vmem:[%s550 + $0x148] sm:$0xff]
      %v1858 = vld [vmem:[%s550 + $0x150] sm:$0xff]
      %v1859 = vld [vmem:[%s550 + $0x158] sm:$0xff]
      %v1860 = vld [vmem:[%s550 + $0x160] sm:$0xff]
      %v1861 = vld [vmem:[%s550 + $0x168] sm:$0xff]
      %v1862 = vld [vmem:[%s550 + $0x170] sm:$0xff]
      %v1863 = vld [vmem:[%s550 + $0x178] sm:$0xff]
      %v1864 = vld [vmem:[%s550 + $0x180] sm:$0xff]
      %v1865 = vld [vmem:[%s550 + $0x188] sm:$0xff]
      %v1866 = vld [vmem:[%s550 + $0x190] sm:$0xff]
      %v1867 = vld [vmem:[%s550 + $0x198] sm:$0xff]
      %v1868 = vld [vmem:[%s550 + $0x1a0] sm:$0xff]
      %v1869 = vld [vmem:[%s550 + $0x1a8] sm:$0xff]
      %v1870 = vld [vmem:[%s550 + $0x1b0] sm:$0xff]
      %v1871 = vld [vmem:[%s550 + $0x1b8] sm:$0xff]
      %v1872 = vld [vmem:[%s550 + $0x1c0] sm:$0xff]
      %v1873 = vld [vmem:[%s550 + $0x1c8] sm:$0xff]
      %v1874 = vld [vmem:[%s550 + $0x1d0] sm:$0xff]
      %v1875 = vld [vmem:[%s550 + $0x1d8] sm:$0xff]
      %v1876 = vld [vmem:[%s550 + $0x1e0] sm:$0xff]
      %v1877 = vld [vmem:[%s550 + $0x1e8] sm:$0xff]
      %v1878 = vld [vmem:[%s550 + $0x1f0] sm:$0xff]
      %v1879 = vld [vmem:[%s550 + $0x1f8] sm:$0xff]
      %v1880 = vpack.c.bf16 %v1817, %v1816
      %v1881 = vpack.c.bf16 %v1819, %v1818
      %v1882 = vpack.c.bf16 %v1821, %v1820
      %v1883 = vpack.c.bf16 %v1823, %v1822
      %v1884 = vpack.c.bf16 %v1825, %v1824
      %v1885 = vpack.c.bf16 %v1827, %v1826
      %v1886 = vpack.c.bf16 %v1829, %v1828
      %v1887 = vpack.c.bf16 %v1831, %v1830
      %v1888 = vpack.c.bf16 %v1833, %v1832
      %v1889 = vpack.c.bf16 %v1835, %v1834
      %v1890 = vpack.c.bf16 %v1837, %v1836
      %v1891 = vpack.c.bf16 %v1839, %v1838
      %v1892 = vpack.c.bf16 %v1841, %v1840
      %v1893 = vpack.c.bf16 %v1843, %v1842
      %v1894 = vpack.c.bf16 %v1845, %v1844
      %v1895 = vpack.c.bf16 %v1847, %v1846
      %v1896 = vpack.c.bf16 %v1849, %v1848
      %v1897 = vpack.c.bf16 %v1851, %v1850
      %v1898 = vpack.c.bf16 %v1853, %v1852
      %v1899 = vpack.c.bf16 %v1855, %v1854
      %v1900 = vpack.c.bf16 %v1857, %v1856
      %v1901 = vpack.c.bf16 %v1859, %v1858
      %v1902 = vpack.c.bf16 %v1861, %v1860
      %v1903 = vpack.c.bf16 %v1863, %v1862
      %v1904 = vpack.c.bf16 %v1865, %v1864
      %v1905 = vpack.c.bf16 %v1867, %v1866
      %v1906 = vpack.c.bf16 %v1869, %v1868
      %v1907 = vpack.c.bf16 %v1871, %v1870
      %v1908 = vpack.c.bf16 %v1873, %v1872
      %v1909 = vpack.c.bf16 %v1875, %v1874
      %v1910 = vpack.c.bf16 %v1877, %v1876
      %v1911 = vpack.c.bf16 %v1879, %v1878
      %v1912 = vld [vmem:[%s6] sm:$0xf]
      %v1913 = vld [vmem:[%s6 + $0x4] sm:$0xf]
      %v1916 = vunpack.c.l.b16 %v1912
      %v1917 = vunpack.c.l.b16 %v1913
      %v1918 = vpack.c.b16 %v1917, %v1916
      %vm1920 = vcmask 130048
      %v1922 = vsel %vm1920, %v1880, 0
      %v1925 = vsel %vm1920, %v1881, 0
      %v1928 = vsel %vm1920, %v1882, 0
      %v1931 = vsel %vm1920, %v1883, 0
      %v1934 = vsel %vm1920, %v1884, 0
      %v1937 = vsel %vm1920, %v1885, 0
      %v1940 = vsel %vm1920, %v1886, 0
      %v1943 = vsel %vm1920, %v1887, 0
      %v1946 = vsel %vm1920, %v1888, 0
      %v1949 = vsel %vm1920, %v1889, 0
      %v1952 = vsel %vm1920, %v1890, 0
      %v1955 = vsel %vm1920, %v1891, 0
      %v1958 = vsel %vm1920, %v1892, 0
      %v1961 = vsel %vm1920, %v1893, 0
      %v1964 = vsel %vm1920, %v1894, 0
      %v1967 = vsel %vm1920, %v1895, 0
      %v1970 = vsel %vm1920, %v1896, 0
      %v1973 = vsel %vm1920, %v1897, 0
      %v1976 = vsel %vm1920, %v1898, 0
      %v1979 = vsel %vm1920, %v1899, 0
      %v1982 = vsel %vm1920, %v1900, 0
      %v1985 = vsel %vm1920, %v1901, 0
      %v1988 = vsel %vm1920, %v1902, 0
      %v1991 = vsel %vm1920, %v1903, 0
      %v1994 = vsel %vm1920, %v1904, 0
      %v1997 = vsel %vm1920, %v1905, 0
      %v2000 = vsel %vm1920, %v1906, 0
      %v2003 = vsel %vm1920, %v1907, 0
      %v2006 = vsel %vm1920, %v1908, 0
      %v2009 = vsel %vm1920, %v1909, 0
      %v2012 = vsel %vm1920, %v1910, 0
      %v2015 = vsel %vm1920, %v1911, 0
      %2017 = vmatprep.subr.bf16.mxu0 0
      %2018 = vmatpush1.bf16.msra.mxu0 %v1918
      %2019 = vmatprep.subr.bf16.mxu0 0
      %2020 = vmatpush1.bf16.msra.mxu0 0
      %2021 = vmatprep.subr.bf16.mxu0 0
      %2022 = vmatpush1.bf16.msra.mxu0 0
      %2023 = vmatprep.subr.bf16.mxu0 0
      %2024 = vmatpush1.bf16.msra.mxu0 0
      %2025 = vmatprep.subr.bf16.mxu0 0
      %2026 = vmatpush1.bf16.msra.mxu0 0
      %2027 = vmatprep.subr.bf16.mxu0 0
      %2028 = vmatpush1.bf16.msra.mxu0 0
      %2029 = vmatprep.subr.bf16.mxu0 0
      %2030 = vmatpush1.bf16.msra.mxu0 0
      %2031 = vmatprep.subr.bf16.mxu0 0
      %2032 = vmatpush1.bf16.msra.mxu0 0
      %2033 = vmatprep.subr.bf16.mxu0 0
      %2034 = vmatpush1.bf16.msra.mxu0 0
      %2035 = vmatprep.subr.bf16.mxu0 0
      %2036 = vmatpush1.bf16.msra.mxu0 0
      %2037 = vmatprep.subr.bf16.mxu0 0
      %2038 = vmatpush1.bf16.msra.mxu0 0
      %2039 = vmatprep.subr.bf16.mxu0 0
      %2040 = vmatpush1.bf16.msra.mxu0 0
      %2041 = vmatprep.subr.bf16.mxu0 0
      %2042 = vmatpush1.bf16.msra.mxu0 0
      %2043 = vmatprep.subr.bf16.mxu0 0
      %2044 = vmatpush1.bf16.msra.mxu0 0
      %2045 = vmatprep.subr.bf16.mxu0 0
      %2046 = vmatpush1.bf16.msra.mxu0 0
      %2047 = vmatprep.subr.bf16.mxu0 0
      %2048 = vmatpush1.bf16.msra.mxu0 0
      %2049 = vmatprep.mubr.bf16.mxu0 0
      %2050 = vmatmul.mubr.bf16.gmra.mrb[0].mxu0 %v1922
      %v2051 = vpop.f32.mrb[0].mxu0
      %v2052 = vadd.f32 0.0, %v2051
      %v2053 = vpop.f32.mrb[0].mxu0
      %v2054 = vpop.f32.mrb[0].mxu0
      %v2055 = vadd.f32 0.0, %v2054
      %v2056 = vpop.f32.mrb[0].mxu0
      %2057 = vmatprep.mubr.bf16.mxu0 0
      %2058 = vmatmul.mubr.bf16.gmra.mrb[0].mxu0 %v1925
      %v2059 = vpop.f32.mrb[0].mxu0
      %v2060 = vadd.f32 0.0, %v2059
      %v2061 = vpop.f32.mrb[0].mxu0
      %v2062 = vpop.f32.mrb[0].mxu0
      %v2063 = vadd.f32 0.0, %v2062
      %v2064 = vpop.f32.mrb[0].mxu0
      %2065 = vmatprep.mubr.bf16.mxu0 0
      %2066 = vmatmul.mubr.bf16.gmra.mrb[0].mxu0 %v1928
      %v2067 = vpop.f32.mrb[0].mxu0
      %v2068 = vadd.f32 0.0, %v2067
      %v2069 = vpop.f32.mrb[0].mxu0
      %v2070 = vpop.f32.mrb[0].mxu0
      %v2071 = vadd.f32 0.0, %v2070
      %v2072 = vpop.f32.mrb[0].mxu0
      %2073 = vmatprep.mubr.bf16.mxu0 0
      %2074 = vmatmul.mubr.bf16.gmra.mrb[0].mxu0 %v1931
      %v2075 = vpop.f32.mrb[0].mxu0
      %v2076 = vadd.f32 0.0, %v2075
      %v2077 = vpop.f32.mrb[0].mxu0
      %v2078 = vpop.f32.mrb[0].mxu0
      %v2079 = vadd.f32 0.0, %v2078
      %v2080 = vpop.f32.mrb[0].mxu0
      %2081 = vmatprep.mubr.bf16.mxu0 0
      %2082 = vmatmul.mubr.bf16.gmra.mrb[0].mxu0 %v1934
      %v2083 = vpop.f32.mrb[0].mxu0
      %v2084 = vadd.f32 0.0, %v2083
      %v2085 = vpop.f32.mrb[0].mxu0
      %v2086 = vpop.f32.mrb[0].mxu0
      %v2087 = vadd.f32 0.0, %v2086
      %v2088 = vpop.f32.mrb[0].mxu0
      %2089 = vmatprep.mubr.bf16.mxu0 0
      %2090 = vmatmul.mubr.bf16.gmra.mrb[0].mxu0 %v1937
      %v2091 = vpop.f32.mrb[0].mxu0
      %v2092 = vadd.f32 0.0, %v2091
      %v2093 = vpop.f32.mrb[0].mxu0
      %v2094 = vpop.f32.mrb[0].mxu0
      %v2095 = vadd.f32 0.0, %v2094
      %v2096 = vpop.f32.mrb[0].mxu0
      %2097 = vmatprep.mubr.bf16.mxu0 0
      %2098 = vmatmul.mubr.bf16.gmra.mrb[0].mxu0 %v1940
      %v2099 = vpop.f32.mrb[0].mxu0
      %v2100 = vadd.f32 0.0, %v2099
      %v2101 = vpop.f32.mrb[0].mxu0
      %v2102 = vpop.f32.mrb[0].mxu0
      %v2103 = vadd.f32 0.0, %v2102
      %v2104 = vpop.f32.mrb[0].mxu0
      %2105 = vmatprep.mubr.bf16.mxu0 0
      %2106 = vmatmul.mubr.bf16.gmra.mrb[0].mxu0 %v1943
      %v2107 = vpop.f32.mrb[0].mxu0
      %v2108 = vadd.f32 0.0, %v2107
      %v2109 = vpop.f32.mrb[0].mxu0
      %v2110 = vpop.f32.mrb[0].mxu0
      %v2111 = vadd.f32 0.0, %v2110
      %v2112 = vpop.f32.mrb[0].mxu0
      %2113 = vmatprep.mubr.bf16.mxu0 0
      %2114 = vmatmul.mubr.bf16.gmra.mrb[0].mxu0 %v1946
      %v2115 = vpop.f32.mrb[0].mxu0
      %v2116 = vadd.f32 0.0, %v2115
      %v2117 = vpop.f32.mrb[0].mxu0
      %v2118 = vpop.f32.mrb[0].mxu0
      %v2119 = vadd.f32 0.0, %v2118
      %v2120 = vpop.f32.mrb[0].mxu0
      %2121 = vmatprep.mubr.bf16.mxu0 0
      %2122 = vmatmul.mubr.bf16.gmra.mrb[0].mxu0 %v1949
      %v2123 = vpop.f32.mrb[0].mxu0
      %v2124 = vadd.f32 0.0, %v2123
      %v2125 = vpop.f32.mrb[0].mxu0
      %v2126 = vpop.f32.mrb[0].mxu0
      %v2127 = vadd.f32 0.0, %v2126
      %v2128 = vpop.f32.mrb[0].mxu0
      %2129 = vmatprep.mubr.bf16.mxu0 0
      %2130 = vmatmul.mubr.bf16.gmra.mrb[0].mxu0 %v1952
      %v2131 = vpop.f32.mrb[0].mxu0
      %v2132 = vadd.f32 0.0, %v2131
      %v2133 = vpop.f32.mrb[0].mxu0
      %v2134 = vpop.f32.mrb[0].mxu0
      %v2135 = vadd.f32 0.0, %v2134
      %v2136 = vpop.f32.mrb[0].mxu0
      %2137 = vmatprep.mubr.bf16.mxu0 0
      %2138 = vmatmul.mubr.bf16.gmra.mrb[0].mxu0 %v1955
      %v2139 = vpop.f32.mrb[0].mxu0
      %v2140 = vadd.f32 0.0, %v2139
      %v2141 = vpop.f32.mrb[0].mxu0
      %v2142 = vpop.f32.mrb[0].mxu0
      %v2143 = vadd.f32 0.0, %v2142
      %v2144 = vpop.f32.mrb[0].mxu0
      %2145 = vmatprep.mubr.bf16.mxu0 0
      %2146 = vmatmul.mubr.bf16.gmra.mrb[0].mxu0 %v1958
      %v2147 = vpop.f32.mrb[0].mxu0
      %v2148 = vadd.f32 0.0, %v2147
      %v2149 = vpop.f32.mrb[0].mxu0
      %v2150 = vpop.f32.mrb[0].mxu0
      %v2151 = vadd.f32 0.0, %v2150
      %v2152 = vpop.f32.mrb[0].mxu0
      %2153 = vmatprep.mubr.bf16.mxu0 0
      %2154 = vmatmul.mubr.bf16.gmra.mrb[0].mxu0 %v1961
      %v2155 = vpop.f32.mrb[0].mxu0
      %v2156 = vadd.f32 0.0, %v2155
      %v2157 = vpop.f32.mrb[0].mxu0
      %v2158 = vpop.f32.mrb[0].mxu0
      %v2159 = vadd.f32 0.0, %v2158
      %v2160 = vpop.f32.mrb[0].mxu0
      %2161 = vmatprep.mubr.bf16.mxu0 0
      %2162 = vmatmul.mubr.bf16.gmra.mrb[0].mxu0 %v1964
      %v2163 = vpop.f32.mrb[0].mxu0
      %v2164 = vadd.f32 0.0, %v2163
      %v2165 = vpop.f32.mrb[0].mxu0
      %v2166 = vpop.f32.mrb[0].mxu0
      %v2167 = vadd.f32 0.0, %v2166
      %v2168 = vpop.f32.mrb[0].mxu0
      %2169 = vmatprep.mubr.bf16.mxu0 0
      %2170 = vmatmul.mubr.bf16.gmra.mrb[0].mxu0 %v1967
      %v2171 = vpop.f32.mrb[0].mxu0
      %v2172 = vadd.f32 0.0, %v2171
      %v2173 = vpop.f32.mrb[0].mxu0
      %v2174 = vpop.f32.mrb[0].mxu0
      %v2175 = vadd.f32 0.0, %v2174
      %v2176 = vpop.f32.mrb[0].mxu0
      %2177 = vmatprep.mubr.bf16.mxu0 0
      %2178 = vmatmul.mubr.bf16.gmra.mrb[0].mxu0 %v1970
      %v2179 = vpop.f32.mrb[0].mxu0
      %v2180 = vadd.f32 0.0, %v2179
      %v2181 = vpop.f32.mrb[0].mxu0
      %v2182 = vpop.f32.mrb[0].mxu0
      %v2183 = vadd.f32 0.0, %v2182
      %v2184 = vpop.f32.mrb[0].mxu0
      %2185 = vmatprep.mubr.bf16.mxu0 0
      %2186 = vmatmul.mubr.bf16.gmra.mrb[0].mxu0 %v1973
      %v2187 = vpop.f32.mrb[0].mxu0
      %v2188 = vadd.f32 0.0, %v2187
      %v2189 = vpop.f32.mrb[0].mxu0
      %v2190 = vpop.f32.mrb[0].mxu0
      %v2191 = vadd.f32 0.0, %v2190
      %v2192 = vpop.f32.mrb[0].mxu0
      %2193 = vmatprep.mubr.bf16.mxu0 0
      %2194 = vmatmul.mubr.bf16.gmra.mrb[0].mxu0 %v1976
      %v2195 = vpop.f32.mrb[0].mxu0
      %v2196 = vadd.f32 0.0, %v2195
      %v2197 = vpop.f32.mrb[0].mxu0
      %v2198 = vpop.f32.mrb[0].mxu0
      %v2199 = vadd.f32 0.0, %v2198
      %v2200 = vpop.f32.mrb[0].mxu0
      %2201 = vmatprep.mubr.bf16.mxu0 0
      %2202 = vmatmul.mubr.bf16.gmra.mrb[0].mxu0 %v1979
      %v2203 = vpop.f32.mrb[0].mxu0
      %v2204 = vadd.f32 0.0, %v2203
      %v2205 = vpop.f32.mrb[0].mxu0
      %v2206 = vpop.f32.mrb[0].mxu0
      %v2207 = vadd.f32 0.0, %v2206
      %v2208 = vpop.f32.mrb[0].mxu0
      %2209 = vmatprep.mubr.bf16.mxu0 0
      %2210 = vmatmul.mubr.bf16.gmra.mrb[0].mxu0 %v1982
      %v2211 = vpop.f32.mrb[0].mxu0
      %v2212 = vadd.f32 0.0, %v2211
      %v2213 = vpop.f32.mrb[0].mxu0
      %v2214 = vpop.f32.mrb[0].mxu0
      %v2215 = vadd.f32 0.0, %v2214
      %v2216 = vpop.f32.mrb[0].mxu0
      %2217 = vmatprep.mubr.bf16.mxu0 0
      %2218 = vmatmul.mubr.bf16.gmra.mrb[0].mxu0 %v1985
      %v2219 = vpop.f32.mrb[0].mxu0
      %v2220 = vadd.f32 0.0, %v2219
      %v2221 = vpop.f32.mrb[0].mxu0
      %v2222 = vpop.f32.mrb[0].mxu0
      %v2223 = vadd.f32 0.0, %v2222
      %v2224 = vpop.f32.mrb[0].mxu0
      %2225 = vmatprep.mubr.bf16.mxu0 0
      %2226 = vmatmul.mubr.bf16.gmra.mrb[0].mxu0 %v1988
      %v2227 = vpop.f32.mrb[0].mxu0
      %v2228 = vadd.f32 0.0, %v2227
      %v2229 = vpop.f32.mrb[0].mxu0
      %v2230 = vpop.f32.mrb[0].mxu0
      %v2231 = vadd.f32 0.0, %v2230
      %v2232 = vpop.f32.mrb[0].mxu0
      %2233 = vmatprep.mubr.bf16.mxu0 0
      %2234 = vmatmul.mubr.bf16.gmra.mrb[0].mxu0 %v1991
      %v2235 = vpop.f32.mrb[0].mxu0
      %v2236 = vadd.f32 0.0, %v2235
      %v2237 = vpop.f32.mrb[0].mxu0
      %v2238 = vpop.f32.mrb[0].mxu0
      %v2239 = vadd.f32 0.0, %v2238
      %v2240 = vpop.f32.mrb[0].mxu0
      %2241 = vmatprep.mubr.bf16.mxu0 0
      %2242 = vmatmul.mubr.bf16.gmra.mrb[0].mxu0 %v1994
      %v2243 = vpop.f32.mrb[0].mxu0
      %v2244 = vadd.f32 0.0, %v2243
      %v2245 = vpop.f32.mrb[0].mxu0
      %v2246 = vpop.f32.mrb[0].mxu0
      %v2247 = vadd.f32 0.0, %v2246
      %v2248 = vpop.f32.mrb[0].mxu0
      %2249 = vmatprep.mubr.bf16.mxu0 0
      %2250 = vmatmul.mubr.bf16.gmra.mrb[0].mxu0 %v1997
      %v2251 = vpop.f32.mrb[0].mxu0
      %v2252 = vadd.f32 0.0, %v2251
      %v2253 = vpop.f32.mrb[0].mxu0
      %v2254 = vpop.f32.mrb[0].mxu0
      %v2255 = vadd.f32 0.0, %v2254
      %v2256 = vpop.f32.mrb[0].mxu0
      %2257 = vmatprep.mubr.bf16.mxu0 0
      %2258 = vmatmul.mubr.bf16.gmra.mrb[0].mxu0 %v2000
      %v2259 = vpop.f32.mrb[0].mxu0
      %v2260 = vadd.f32 0.0, %v2259
      %v2261 = vpop.f32.mrb[0].mxu0
      %v2262 = vpop.f32.mrb[0].mxu0
      %v2263 = vadd.f32 0.0, %v2262
      %v2264 = vpop.f32.mrb[0].mxu0
      %2265 = vmatprep.mubr.bf16.mxu0 0
      %2266 = vmatmul.mubr.bf16.gmra.mrb[0].mxu0 %v2003
      %v2267 = vpop.f32.mrb[0].mxu0
      %v2268 = vadd.f32 0.0, %v2267
      %v2269 = vpop.f32.mrb[0].mxu0
      %v2270 = vpop.f32.mrb[0].mxu0
      %v2271 = vadd.f32 0.0, %v2270
      %v2272 = vpop.f32.mrb[0].mxu0
      %2273 = vmatprep.mubr.bf16.mxu0 0
      %2274 = vmatmul.mubr.bf16.gmra.mrb[0].mxu0 %v2006
      %v2275 = vpop.f32.mrb[0].mxu0
      %v2276 = vadd.f32 0.0, %v2275
      %v2277 = vpop.f32.mrb[0].mxu0
      %v2278 = vpop.f32.mrb[0].mxu0
      %v2279 = vadd.f32 0.0, %v2278
      %v2280 = vpop.f32.mrb[0].mxu0
      %2281 = vmatprep.mubr.bf16.mxu0 0
      %2282 = vmatmul.mubr.bf16.gmra.mrb[0].mxu0 %v2009
      %v2283 = vpop.f32.mrb[0].mxu0
      %v2284 = vadd.f32 0.0, %v2283
      %v2285 = vpop.f32.mrb[0].mxu0
      %v2286 = vpop.f32.mrb[0].mxu0
      %v2287 = vadd.f32 0.0, %v2286
      %v2288 = vpop.f32.mrb[0].mxu0
      %2289 = vmatprep.mubr.bf16.mxu0 0
      %2290 = vmatmul.mubr.bf16.gmra.mrb[0].mxu0 %v2012
      %v2291 = vpop.f32.mrb[0].mxu0
      %v2292 = vadd.f32 0.0, %v2291
      %v2293 = vpop.f32.mrb[0].mxu0
      %v2294 = vpop.f32.mrb[0].mxu0
      %v2295 = vadd.f32 0.0, %v2294
      %v2296 = vpop.f32.mrb[0].mxu0
      %2297 = vmatprep.mubr.bf16.mxu0 0
      %2298 = vmatmul.mubr.bf16.gmra.mrb[0].mxu0 %v2015
      %v2299 = vpop.f32.mrb[0].mxu0
      %v2300 = vadd.f32 0.0, %v2299
      %v2301 = vpop.f32.mrb[0].mxu0
      %v2302 = vpop.f32.mrb[0].mxu0
      %v2303 = vadd.f32 0.0, %v2302
      %v2304 = vpop.f32.mrb[0].mxu0
      %2305 = vdwg.mxu0
      %v2306 = vadd.f32 %v1562, %v2052
      %v2307 = vadd.f32 %v1565, %v2055
      %v2308 = vadd.f32 %v1570, %v2060
      %v2309 = vadd.f32 %v1573, %v2063
      %v2310 = vadd.f32 %v1578, %v2068
      %v2311 = vadd.f32 %v1581, %v2071
      %v2312 = vadd.f32 %v1586, %v2076
      %v2313 = vadd.f32 %v1589, %v2079
      %v2314 = vadd.f32 %v1594, %v2084
      %v2315 = vadd.f32 %v1597, %v2087
      %v2316 = vadd.f32 %v1602, %v2092
      %v2317 = vadd.f32 %v1605, %v2095
      %v2318 = vadd.f32 %v1610, %v2100
      %v2319 = vadd.f32 %v1613, %v2103
      %v2320 = vadd.f32 %v1618, %v2108
      %v2321 = vadd.f32 %v1621, %v2111
      %v2322 = vadd.f32 %v1626, %v2116
      %v2323 = vadd.f32 %v1629, %v2119
      %v2324 = vadd.f32 %v1634, %v2124
      %v2325 = vadd.f32 %v1637, %v2127
      %v2326 = vadd.f32 %v1642, %v2132
      %v2327 = vadd.f32 %v1645, %v2135
      %v2328 = vadd.f32 %v1650, %v2140
      %v2329 = vadd.f32 %v1653, %v2143
      %v2330 = vadd.f32 %v1658, %v2148
      %v2331 = vadd.f32 %v1661, %v2151
      %v2332 = vadd.f32 %v1666, %v2156
      %v2333 = vadd.f32 %v1669, %v2159
      %v2334 = vadd.f32 %v1674, %v2164
      %v2335 = vadd.f32 %v1677, %v2167
      %v2336 = vadd.f32 %v1682, %v2172
      %v2337 = vadd.f32 %v1685, %v2175
      %v2338 = vadd.f32 %v1690, %v2180
      %v2339 = vadd.f32 %v1693, %v2183
      %v2340 = vadd.f32 %v1698, %v2188
      %v2341 = vadd.f32 %v1701, %v2191
      %v2342 = vadd.f32 %v1706, %v2196
      %v2343 = vadd.f32 %v1709, %v2199
      %v2344 = vadd.f32 %v1714, %v2204
      %v2345 = vadd.f32 %v1717, %v2207
      %v2346 = vadd.f32 %v1722, %v2212
      %v2347 = vadd.f32 %v1725, %v2215
      %v2348 = vadd.f32 %v1730, %v2220
      %v2349 = vadd.f32 %v1733, %v2223
      %v2350 = vadd.f32 %v1738, %v2228
      %v2351 = vadd.f32 %v1741, %v2231
      %v2352 = vadd.f32 %v1746, %v2236
      %v2353 = vadd.f32 %v1749, %v2239
      %v2354 = vadd.f32 %v1754, %v2244
      %v2355 = vadd.f32 %v1757, %v2247
      %v2356 = vadd.f32 %v1762, %v2252
      %v2357 = vadd.f32 %v1765, %v2255
      %v2358 = vadd.f32 %v1770, %v2260
      %v2359 = vadd.f32 %v1773, %v2263
      %v2360 = vadd.f32 %v1778, %v2268
      %v2361 = vadd.f32 %v1781, %v2271
      %v2362 = vadd.f32 %v1786, %v2276
      %v2363 = vadd.f32 %v1789, %v2279
      %v2364 = vadd.f32 %v1794, %v2284
      %v2365 = vadd.f32 %v1797, %v2287
      %v2366 = vadd.f32 %v1802, %v2292
      %v2367 = vadd.f32 %v1805, %v2295
      %v2368 = vadd.f32 %v1810, %v2300
      %v2369 = vadd.f32 %v1813, %v2303
      %v2370 = vld [vmem:[%s556] sm:$0xff]
      %v2371 = vld [vmem:[%s556 + $0x8] sm:$0xff]
      %v2372 = vld [vmem:[%s556 + $0x10] sm:$0xff]
      %v2373 = vld [vmem:[%s556 + $0x18] sm:$0xff]
      %v2374 = vld [vmem:[%s556 + $0x20] sm:$0xff]
      %v2375 = vld [vmem:[%s556 + $0x28] sm:$0xff]
      %v2376 = vld [vmem:[%s556 + $0x30] sm:$0xff]
      %v2377 = vld [vmem:[%s556 + $0x38] sm:$0xff]
      %v2378 = vld [vmem:[%s556 + $0x40] sm:$0xff]
      %v2379 = vld [vmem:[%s556 + $0x48] sm:$0xff]
      %v2380 = vld [vmem:[%s556 + $0x50] sm:$0xff]
      %v2381 = vld [vmem:[%s556 + $0x58] sm:$0xff]
      %v2382 = vld [vmem:[%s556 + $0x60] sm:$0xff]
      %v2383 = vld [vmem:[%s556 + $0x68] sm:$0xff]
      %v2384 = vld [vmem:[%s556 + $0x70] sm:$0xff]
      %v2385 = vld [vmem:[%s556 + $0x78] sm:$0xff]
      %v2386 = vld [vmem:[%s556 + $0x80] sm:$0xff]
      %v2387 = vld [vmem:[%s556 + $0x88] sm:$0xff]
      %v2388 = vld [vmem:[%s556 + $0x90] sm:$0xff]
      %v2389 = vld [vmem:[%s556 + $0x98] sm:$0xff]
      %v2390 = vld [vmem:[%s556 + $0xa0] sm:$0xff]
      %v2391 = vld [vmem:[%s556 + $0xa8] sm:$0xff]
      %v2392 = vld [vmem:[%s556 + $0xb0] sm:$0xff]
      %v2393 = vld [vmem:[%s556 + $0xb8] sm:$0xff]
      %v2394 = vld [vmem:[%s556 + $0xc0] sm:$0xff]
      %v2395 = vld [vmem:[%s556 + $0xc8] sm:$0xff]
      %v2396 = vld [vmem:[%s556 + $0xd0] sm:$0xff]
      %v2397 = vld [vmem:[%s556 + $0xd8] sm:$0xff]
      %v2398 = vld [vmem:[%s556 + $0xe0] sm:$0xff]
      %v2399 = vld [vmem:[%s556 + $0xe8] sm:$0xff]
      %v2400 = vld [vmem:[%s556 + $0xf0] sm:$0xff]
      %v2401 = vld [vmem:[%s556 + $0xf8] sm:$0xff]
      %v2402 = vld [vmem:[%s556 + $0x100] sm:$0xff]
      %v2403 = vld [vmem:[%s556 + $0x108] sm:$0xff]
      %v2404 = vld [vmem:[%s556 + $0x110] sm:$0xff]
      %v2405 = vld [vmem:[%s556 + $0x118] sm:$0xff]
      %v2406 = vld [vmem:[%s556 + $0x120] sm:$0xff]
      %v2407 = vld [vmem:[%s556 + $0x128] sm:$0xff]
      %v2408 = vld [vmem:[%s556 + $0x130] sm:$0xff]
      %v2409 = vld [vmem:[%s556 + $0x138] sm:$0xff]
      %v2410 = vld [vmem:[%s556 + $0x140] sm:$0xff]
      %v2411 = vld [vmem:[%s556 + $0x148] sm:$0xff]
      %v2412 = vld [vmem:[%s556 + $0x150] sm:$0xff]
      %v2413 = vld [vmem:[%s556 + $0x158] sm:$0xff]
      %v2414 = vld [vmem:[%s556 + $0x160] sm:$0xff]
      %v2415 = vld [vmem:[%s556 + $0x168] sm:$0xff]
      %v2416 = vld [vmem:[%s556 + $0x170] sm:$0xff]
      %v2417 = vld [vmem:[%s556 + $0x178] sm:$0xff]
      %v2418 = vld [vmem:[%s556 + $0x180] sm:$0xff]
      %v2419 = vld [vmem:[%s556 + $0x188] sm:$0xff]
      %v2420 = vld [vmem:[%s556 + $0x190] sm:$0xff]
      %v2421 = vld [vmem:[%s556 + $0x198] sm:$0xff]
      %v2422 = vld [vmem:[%s556 + $0x1a0] sm:$0xff]
      %v2423 = vld [vmem:[%s556 + $0x1a8] sm:$0xff]
      %v2424 = vld [vmem:[%s556 + $0x1b0] sm:$0xff]
      %v2425 = vld [vmem:[%s556 + $0x1b8] sm:$0xff]
      %v2426 = vld [vmem:[%s556 + $0x1c0] sm:$0xff]
      %v2427 = vld [vmem:[%s556 + $0x1c8] sm:$0xff]
      %v2428 = vld [vmem:[%s556 + $0x1d0] sm:$0xff]
      %v2429 = vld [vmem:[%s556 + $0x1d8] sm:$0xff]
      %v2430 = vld [vmem:[%s556 + $0x1e0] sm:$0xff]
      %v2431 = vld [vmem:[%s556 + $0x1e8] sm:$0xff]
      %v2432 = vld [vmem:[%s556 + $0x1f0] sm:$0xff]
      %v2433 = vld [vmem:[%s556 + $0x1f8] sm:$0xff]
      %v2434 = vpack.c.bf16 %v2371, %v2370
      %v2435 = vpack.c.bf16 %v2373, %v2372
      %v2436 = vpack.c.bf16 %v2375, %v2374
      %v2437 = vpack.c.bf16 %v2377, %v2376
      %v2438 = vpack.c.bf16 %v2379, %v2378
      %v2439 = vpack.c.bf16 %v2381, %v2380
      %v2440 = vpack.c.bf16 %v2383, %v2382
      %v2441 = vpack.c.bf16 %v2385, %v2384
      %v2442 = vpack.c.bf16 %v2387, %v2386
      %v2443 = vpack.c.bf16 %v2389, %v2388
      %v2444 = vpack.c.bf16 %v2391, %v2390
      %v2445 = vpack.c.bf16 %v2393, %v2392
      %v2446 = vpack.c.bf16 %v2395, %v2394
      %v2447 = vpack.c.bf16 %v2397, %v2396
      %v2448 = vpack.c.bf16 %v2399, %v2398
      %v2449 = vpack.c.bf16 %v2401, %v2400
      %v2450 = vpack.c.bf16 %v2403, %v2402
      %v2451 = vpack.c.bf16 %v2405, %v2404
      %v2452 = vpack.c.bf16 %v2407, %v2406
      %v2453 = vpack.c.bf16 %v2409, %v2408
      %v2454 = vpack.c.bf16 %v2411, %v2410
      %v2455 = vpack.c.bf16 %v2413, %v2412
      %v2456 = vpack.c.bf16 %v2415, %v2414
      %v2457 = vpack.c.bf16 %v2417, %v2416
      %v2458 = vpack.c.bf16 %v2419, %v2418
      %v2459 = vpack.c.bf16 %v2421, %v2420
      %v2460 = vpack.c.bf16 %v2423, %v2422
      %v2461 = vpack.c.bf16 %v2425, %v2424
      %v2462 = vpack.c.bf16 %v2427, %v2426
      %v2463 = vpack.c.bf16 %v2429, %v2428
      %v2464 = vpack.c.bf16 %v2431, %v2430
      %v2465 = vpack.c.bf16 %v2433, %v2432
      %v2466 = vld [vmem:[%s7] sm:$0xf]
      %v2467 = vld [vmem:[%s7 + $0x4] sm:$0xf]
      %v2468 = vld [vmem:[%s7 + $0x8] sm:$0xf]
      %v2472 = vunpack.c.l.b16 %v2466
      %v2473 = vunpack.c.l.b16 %v2467
      %v2474 = vunpack.c.l.b16 %v2468
      %v2475 = vpack.c.b16 %v2473, %v2472
      %v2476 = vpack.c.b16 %v2474, %v2474
      %vm2478 = vcmask 195584
      %v2480 = vsel %vm2478, %v2434, 0
      %v2483 = vsel %vm2478, %v2435, 0
      %v2486 = vsel %vm2478, %v2436, 0
      %v2489 = vsel %vm2478, %v2437, 0
      %v2492 = vsel %vm2478, %v2438, 0
      %v2495 = vsel %vm2478, %v2439, 0
      %v2498 = vsel %vm2478, %v2440, 0
      %v2501 = vsel %vm2478, %v2441, 0
      %v2504 = vsel %vm2478, %v2442, 0
      %v2507 = vsel %vm2478, %v2443, 0
      %v2510 = vsel %vm2478, %v2444, 0
      %v2513 = vsel %vm2478, %v2445, 0
      %v2516 = vsel %vm2478, %v2446, 0
      %v2519 = vsel %vm2478, %v2447, 0
      %v2522 = vsel %vm2478, %v2448, 0
      %v2525 = vsel %vm2478, %v2449, 0
      %v2528 = vsel %vm2478, %v2450, 0
      %v2531 = vsel %vm2478, %v2451, 0
      %v2534 = vsel %vm2478, %v2452, 0
      %v2537 = vsel %vm2478, %v2453, 0
      %v2540 = vsel %vm2478, %v2454, 0
      %v2543 = vsel %vm2478, %v2455, 0
      %v2546 = vsel %vm2478, %v2456, 0
      %v2549 = vsel %vm2478, %v2457, 0
      %v2552 = vsel %vm2478, %v2458, 0
      %v2555 = vsel %vm2478, %v2459, 0
      %v2558 = vsel %vm2478, %v2460, 0
      %v2561 = vsel %vm2478, %v2461, 0
      %v2564 = vsel %vm2478, %v2462, 0
      %v2567 = vsel %vm2478, %v2463, 0
      %v2570 = vsel %vm2478, %v2464, 0
      %v2573 = vsel %vm2478, %v2465, 0
      %vm2575 = vcmask 1043456
      %v2577 = vsel %vm2575, %v2476, 0
      %2579 = vmatprep.subr.bf16.mxu0 0
      %2580 = vmatpush1.bf16.msra.mxu0 %v2475
      %2581 = vmatprep.subr.bf16.mxu0 0
      %2582 = vmatpush1.bf16.msra.mxu0 %v2577
      %2583 = vmatprep.subr.bf16.mxu0 0
      %2584 = vmatpush1.bf16.msra.mxu0 0
      %2585 = vmatprep.subr.bf16.mxu0 0
      %2586 = vmatpush1.bf16.msra.mxu0 0
      %2587 = vmatprep.subr.bf16.mxu0 0
      %2588 = vmatpush1.bf16.msra.mxu0 0
      %2589 = vmatprep.subr.bf16.mxu0 0
      %2590 = vmatpush1.bf16.msra.mxu0 0
      %2591 = vmatprep.subr.bf16.mxu0 0
      %2592 = vmatpush1.bf16.msra.mxu0 0
      %2593 = vmatprep.subr.bf16.mxu0 0
      %2594 = vmatpush1.bf16.msra.mxu0 0
      %2595 = vmatprep.subr.bf16.mxu0 0
      %2596 = vmatpush1.bf16.msra.mxu0 0
      %2597 = vmatprep.subr.bf16.mxu0 0
      %2598 = vmatpush1.bf16.msra.mxu0 0
      %2599 = vmatprep.subr.bf16.mxu0 0
      %2600 = vmatpush1.bf16.msra.mxu0 0
      %2601 = vmatprep.subr.bf16.mxu0 0
      %2602 = vmatpush1.bf16.msra.mxu0 0
      %2603 = vmatprep.subr.bf16.mxu0 0
      %2604 = vmatpush1.bf16.msra.mxu0 0
      %2605 = vmatprep.subr.bf16.mxu0 0
      %2606 = vmatpush1.bf16.msra.mxu0 0
      %2607 = vmatprep.subr.bf16.mxu0 0
      %2608 = vmatpush1.bf16.msra.mxu0 0
      %2609 = vmatprep.subr.bf16.mxu0 0
      %2610 = vmatpush1.bf16.msra.mxu0 0
      %2611 = vmatprep.mubr.bf16.mxu0 0
      %2612 = vmatmul.mubr.bf16.gmra.mrb[0].mxu0 %v2480
      %v2613 = vpop.f32.mrb[0].mxu0
      %v2614 = vadd.f32 0.0, %v2613
      %v2615 = vpop.f32.mrb[0].mxu0
      %v2616 = vpop.f32.mrb[0].mxu0
      %v2617 = vadd.f32 0.0, %v2616
      %v2618 = vpop.f32.mrb[0].mxu0
      %2619 = vmatprep.mubr.bf16.mxu0 0
      %2620 = vmatmul.mubr.bf16.gmra.mrb[0].mxu0 %v2483
      %v2621 = vpop.f32.mrb[0].mxu0
      %v2622 = vadd.f32 0.0, %v2621
      %v2623 = vpop.f32.mrb[0].mxu0
      %v2624 = vpop.f32.mrb[0].mxu0
      %v2625 = vadd.f32 0.0, %v2624
      %v2626 = vpop.f32.mrb[0].mxu0
      %2627 = vmatprep.mubr.bf16.mxu0 0
      %2628 = vmatmul.mubr.bf16.gmra.mrb[0].mxu0 %v2486
      %v2629 = vpop.f32.mrb[0].mxu0
      %v2630 = vadd.f32 0.0, %v2629
      %v2631 = vpop.f32.mrb[0].mxu0
      %v2632 = vpop.f32.mrb[0].mxu0
      %v2633 = vadd.f32 0.0, %v2632
      %v2634 = vpop.f32.mrb[0].mxu0
      %2635 = vmatprep.mubr.bf16.mxu0 0
      %2636 = vmatmul.mubr.bf16.gmra.mrb[0].mxu0 %v2489
      %v2637 = vpop.f32.mrb[0].mxu0
      %v2638 = vadd.f32 0.0, %v2637
      %v2639 = vpop.f32.mrb[0].mxu0
      %v2640 = vpop.f32.mrb[0].mxu0
      %v2641 = vadd.f32 0.0, %v2640
      %v2642 = vpop.f32.mrb[0].mxu0
      %2643 = vmatprep.mubr.bf16.mxu0 0
      %2644 = vmatmul.mubr.bf16.gmra.mrb[0].mxu0 %v2492
      %v2645 = vpop.f32.mrb[0].mxu0
      %v2646 = vadd.f32 0.0, %v2645
      %v2647 = vpop.f32.mrb[0].mxu0
      %v2648 = vpop.f32.mrb[0].mxu0
      %v2649 = vadd.f32 0.0, %v2648
      %v2650 = vpop.f32.mrb[0].mxu0
      %2651 = vmatprep.mubr.bf16.mxu0 0
      %2652 = vmatmul.mubr.bf16.gmra.mrb[0].mxu0 %v2495
      %v2653 = vpop.f32.mrb[0].mxu0
      %v2654 = vadd.f32 0.0, %v2653
      %v2655 = vpop.f32.mrb[0].mxu0
      %v2656 = vpop.f32.mrb[0].mxu0
      %v2657 = vadd.f32 0.0, %v2656
      %v2658 = vpop.f32.mrb[0].mxu0
      %2659 = vmatprep.mubr.bf16.mxu0 0
      %2660 = vmatmul.mubr.bf16.gmra.mrb[0].mxu0 %v2498
      %v2661 = vpop.f32.mrb[0].mxu0
      %v2662 = vadd.f32 0.0, %v2661
      %v2663 = vpop.f32.mrb[0].mxu0
      %v2664 = vpop.f32.mrb[0].mxu0
      %v2665 = vadd.f32 0.0, %v2664
      %v2666 = vpop.f32.mrb[0].mxu0
      %2667 = vmatprep.mubr.bf16.mxu0 0
      %2668 = vmatmul.mubr.bf16.gmra.mrb[0].mxu0 %v2501
      %v2669 = vpop.f32.mrb[0].mxu0
      %v2670 = vadd.f32 0.0, %v2669
      %v2671 = vpop.f32.mrb[0].mxu0
      %v2672 = vpop.f32.mrb[0].mxu0
      %v2673 = vadd.f32 0.0, %v2672
      %v2674 = vpop.f32.mrb[0].mxu0
      %2675 = vmatprep.mubr.bf16.mxu0 0
      %2676 = vmatmul.mubr.bf16.gmra.mrb[0].mxu0 %v2504
      %v2677 = vpop.f32.mrb[0].mxu0
      %v2678 = vadd.f32 0.0, %v2677
      %v2679 = vpop.f32.mrb[0].mxu0
      %v2680 = vpop.f32.mrb[0].mxu0
      %v2681 = vadd.f32 0.0, %v2680
      %v2682 = vpop.f32.mrb[0].mxu0
      %2683 = vmatprep.mubr.bf16.mxu0 0
      %2684 = vmatmul.mubr.bf16.gmra.mrb[0].mxu0 %v2507
      %v2685 = vpop.f32.mrb[0].mxu0
      %v2686 = vadd.f32 0.0, %v2685
      %v2687 = vpop.f32.mrb[0].mxu0
      %v2688 = vpop.f32.mrb[0].mxu0
      %v2689 = vadd.f32 0.0, %v2688
      %v2690 = vpop.f32.mrb[0].mxu0
      %2691 = vmatprep.mubr.bf16.mxu0 0
      %2692 = vmatmul.mubr.bf16.gmra.mrb[0].mxu0 %v2510
      %v2693 = vpop.f32.mrb[0].mxu0
      %v2694 = vadd.f32 0.0, %v2693
      %v2695 = vpop.f32.mrb[0].mxu0
      %v2696 = vpop.f32.mrb[0].mxu0
      %v2697 = vadd.f32 0.0, %v2696
      %v2698 = vpop.f32.mrb[0].mxu0
      %2699 = vmatprep.mubr.bf16.mxu0 0
      %2700 = vmatmul.mubr.bf16.gmra.mrb[0].mxu0 %v2513
      %v2701 = vpop.f32.mrb[0].mxu0
      %v2702 = vadd.f32 0.0, %v2701
      %v2703 = vpop.f32.mrb[0].mxu0
      %v2704 = vpop.f32.mrb[0].mxu0
      %v2705 = vadd.f32 0.0, %v2704
      %v2706 = vpop.f32.mrb[0].mxu0
      %2707 = vmatprep.mubr.bf16.mxu0 0
      %2708 = vmatmul.mubr.bf16.gmra.mrb[0].mxu0 %v2516
      %v2709 = vpop.f32.mrb[0].mxu0
      %v2710 = vadd.f32 0.0, %v2709
      %v2711 = vpop.f32.mrb[0].mxu0
      %v2712 = vpop.f32.mrb[0].mxu0
      %v2713 = vadd.f32 0.0, %v2712
      %v2714 = vpop.f32.mrb[0].mxu0
      %2715 = vmatprep.mubr.bf16.mxu0 0
      %2716 = vmatmul.mubr.bf16.gmra.mrb[0].mxu0 %v2519
      %v2717 = vpop.f32.mrb[0].mxu0
      %v2718 = vadd.f32 0.0, %v2717
      %v2719 = vpop.f32.mrb[0].mxu0
      %v2720 = vpop.f32.mrb[0].mxu0
      %v2721 = vadd.f32 0.0, %v2720
      %v2722 = vpop.f32.mrb[0].mxu0
      %2723 = vmatprep.mubr.bf16.mxu0 0
      %2724 = vmatmul.mubr.bf16.gmra.mrb[0].mxu0 %v2522
      %v2725 = vpop.f32.mrb[0].mxu0
      %v2726 = vadd.f32 0.0, %v2725
      %v2727 = vpop.f32.mrb[0].mxu0
      %v2728 = vpop.f32.mrb[0].mxu0
      %v2729 = vadd.f32 0.0, %v2728
      %v2730 = vpop.f32.mrb[0].mxu0
      %2731 = vmatprep.mubr.bf16.mxu0 0
      %2732 = vmatmul.mubr.bf16.gmra.mrb[0].mxu0 %v2525
      %v2733 = vpop.f32.mrb[0].mxu0
      %v2734 = vadd.f32 0.0, %v2733
      %v2735 = vpop.f32.mrb[0].mxu0
      %v2736 = vpop.f32.mrb[0].mxu0
      %v2737 = vadd.f32 0.0, %v2736
      %v2738 = vpop.f32.mrb[0].mxu0
      %2739 = vmatprep.mubr.bf16.mxu0 0
      %2740 = vmatmul.mubr.bf16.gmra.mrb[0].mxu0 %v2528
      %v2741 = vpop.f32.mrb[0].mxu0
      %v2742 = vadd.f32 0.0, %v2741
      %v2743 = vpop.f32.mrb[0].mxu0
      %v2744 = vpop.f32.mrb[0].mxu0
      %v2745 = vadd.f32 0.0, %v2744
      %v2746 = vpop.f32.mrb[0].mxu0
      %2747 = vmatprep.mubr.bf16.mxu0 0
      %2748 = vmatmul.mubr.bf16.gmra.mrb[0].mxu0 %v2531
      %v2749 = vpop.f32.mrb[0].mxu0
      %v2750 = vadd.f32 0.0, %v2749
      %v2751 = vpop.f32.mrb[0].mxu0
      %v2752 = vpop.f32.mrb[0].mxu0
      %v2753 = vadd.f32 0.0, %v2752
      %v2754 = vpop.f32.mrb[0].mxu0
      %2755 = vmatprep.mubr.bf16.mxu0 0
      %2756 = vmatmul.mubr.bf16.gmra.mrb[0].mxu0 %v2534
      %v2757 = vpop.f32.mrb[0].mxu0
      %v2758 = vadd.f32 0.0, %v2757
      %v2759 = vpop.f32.mrb[0].mxu0
      %v2760 = vpop.f32.mrb[0].mxu0
      %v2761 = vadd.f32 0.0, %v2760
      %v2762 = vpop.f32.mrb[0].mxu0
      %2763 = vmatprep.mubr.bf16.mxu0 0
      %2764 = vmatmul.mubr.bf16.gmra.mrb[0].mxu0 %v2537
      %v2765 = vpop.f32.mrb[0].mxu0
      %v2766 = vadd.f32 0.0, %v2765
      %v2767 = vpop.f32.mrb[0].mxu0
      %v2768 = vpop.f32.mrb[0].mxu0
      %v2769 = vadd.f32 0.0, %v2768
      %v2770 = vpop.f32.mrb[0].mxu0
      %2771 = vmatprep.mubr.bf16.mxu0 0
      %2772 = vmatmul.mubr.bf16.gmra.mrb[0].mxu0 %v2540
      %v2773 = vpop.f32.mrb[0].mxu0
      %v2774 = vadd.f32 0.0, %v2773
      %v2775 = vpop.f32.mrb[0].mxu0
      %v2776 = vpop.f32.mrb[0].mxu0
      %v2777 = vadd.f32 0.0, %v2776
      %v2778 = vpop.f32.mrb[0].mxu0
      %2779 = vmatprep.mubr.bf16.mxu0 0
      %2780 = vmatmul.mubr.bf16.gmra.mrb[0].mxu0 %v2543
      %v2781 = vpop.f32.mrb[0].mxu0
      %v2782 = vadd.f32 0.0, %v2781
      %v2783 = vpop.f32.mrb[0].mxu0
      %v2784 = vpop.f32.mrb[0].mxu0
      %v2785 = vadd.f32 0.0, %v2784
      %v2786 = vpop.f32.mrb[0].mxu0
      %2787 = vmatprep.mubr.bf16.mxu0 0
      %2788 = vmatmul.mubr.bf16.gmra.mrb[0].mxu0 %v2546
      %v2789 = vpop.f32.mrb[0].mxu0
      %v2790 = vadd.f32 0.0, %v2789
      %v2791 = vpop.f32.mrb[0].mxu0
      %v2792 = vpop.f32.mrb[0].mxu0
      %v2793 = vadd.f32 0.0, %v2792
      %v2794 = vpop.f32.mrb[0].mxu0
      %2795 = vmatprep.mubr.bf16.mxu0 0
      %2796 = vmatmul.mubr.bf16.gmra.mrb[0].mxu0 %v2549
      %v2797 = vpop.f32.mrb[0].mxu0
      %v2798 = vadd.f32 0.0, %v2797
      %v2799 = vpop.f32.mrb[0].mxu0
      %v2800 = vpop.f32.mrb[0].mxu0
      %v2801 = vadd.f32 0.0, %v2800
      %v2802 = vpop.f32.mrb[0].mxu0
      %2803 = vmatprep.mubr.bf16.mxu0 0
      %2804 = vmatmul.mubr.bf16.gmra.mrb[0].mxu0 %v2552
      %v2805 = vpop.f32.mrb[0].mxu0
      %v2806 = vadd.f32 0.0, %v2805
      %v2807 = vpop.f32.mrb[0].mxu0
      %v2808 = vpop.f32.mrb[0].mxu0
      %v2809 = vadd.f32 0.0, %v2808
      %v2810 = vpop.f32.mrb[0].mxu0
      %2811 = vmatprep.mubr.bf16.mxu0 0
      %2812 = vmatmul.mubr.bf16.gmra.mrb[0].mxu0 %v2555
      %v2813 = vpop.f32.mrb[0].mxu0
      %v2814 = vadd.f32 0.0, %v2813
      %v2815 = vpop.f32.mrb[0].mxu0
      %v2816 = vpop.f32.mrb[0].mxu0
      %v2817 = vadd.f32 0.0, %v2816
      %v2818 = vpop.f32.mrb[0].mxu0
      %2819 = vmatprep.mubr.bf16.mxu0 0
      %2820 = vmatmul.mubr.bf16.gmra.mrb[0].mxu0 %v2558
      %v2821 = vpop.f32.mrb[0].mxu0
      %v2822 = vadd.f32 0.0, %v2821
      %v2823 = vpop.f32.mrb[0].mxu0
      %v2824 = vpop.f32.mrb[0].mxu0
      %v2825 = vadd.f32 0.0, %v2824
      %v2826 = vpop.f32.mrb[0].mxu0
      %2827 = vmatprep.mubr.bf16.mxu0 0
      %2828 = vmatmul.mubr.bf16.gmra.mrb[0].mxu0 %v2561
      %v2829 = vpop.f32.mrb[0].mxu0
      %v2830 = vadd.f32 0.0, %v2829
      %v2831 = vpop.f32.mrb[0].mxu0
      %v2832 = vpop.f32.mrb[0].mxu0
      %v2833 = vadd.f32 0.0, %v2832
      %v2834 = vpop.f32.mrb[0].mxu0
      %2835 = vmatprep.mubr.bf16.mxu0 0
      %2836 = vmatmul.mubr.bf16.gmra.mrb[0].mxu0 %v2564
      %v2837 = vpop.f32.mrb[0].mxu0
      %v2838 = vadd.f32 0.0, %v2837
      %v2839 = vpop.f32.mrb[0].mxu0
      %v2840 = vpop.f32.mrb[0].mxu0
      %v2841 = vadd.f32 0.0, %v2840
      %v2842 = vpop.f32.mrb[0].mxu0
      %2843 = vmatprep.mubr.bf16.mxu0 0
      %2844 = vmatmul.mubr.bf16.gmra.mrb[0].mxu0 %v2567
      %v2845 = vpop.f32.mrb[0].mxu0
      %v2846 = vadd.f32 0.0, %v2845
      %v2847 = vpop.f32.mrb[0].mxu0
      %v2848 = vpop.f32.mrb[0].mxu0
      %v2849 = vadd.f32 0.0, %v2848
      %v2850 = vpop.f32.mrb[0].mxu0
      %2851 = vmatprep.mubr.bf16.mxu0 0
      %2852 = vmatmul.mubr.bf16.gmra.mrb[0].mxu0 %v2570
      %v2853 = vpop.f32.mrb[0].mxu0
      %v2854 = vadd.f32 0.0, %v2853
      %v2855 = vpop.f32.mrb[0].mxu0
      %v2856 = vpop.f32.mrb[0].mxu0
      %v2857 = vadd.f32 0.0, %v2856
      %v2858 = vpop.f32.mrb[0].mxu0
      %2859 = vmatprep.mubr.bf16.mxu0 0
      %2860 = vmatmul.mubr.bf16.gmra.mrb[0].mxu0 %v2573
      %v2861 = vpop.f32.mrb[0].mxu0
      %v2862 = vadd.f32 0.0, %v2861
      %v2863 = vpop.f32.mrb[0].mxu0
      %v2864 = vpop.f32.mrb[0].mxu0
      %v2865 = vadd.f32 0.0, %v2864
      %v2866 = vpop.f32.mrb[0].mxu0
      %2867 = vdwg.mxu0
      %v2868 = vadd.f32 %v2306, %v2614
      %v2869 = vadd.f32 %v2307, %v2617
      %v2870 = vadd.f32 %v2308, %v2622
      %v2871 = vadd.f32 %v2309, %v2625
      %v2872 = vadd.f32 %v2310, %v2630
      %v2873 = vadd.f32 %v2311, %v2633
      %v2874 = vadd.f32 %v2312, %v2638
      %v2875 = vadd.f32 %v2313, %v2641
      %v2876 = vadd.f32 %v2314, %v2646
      %v2877 = vadd.f32 %v2315, %v2649
      %v2878 = vadd.f32 %v2316, %v2654
      %v2879 = vadd.f32 %v2317, %v2657
      %v2880 = vadd.f32 %v2318, %v2662
      %v2881 = vadd.f32 %v2319, %v2665
      %v2882 = vadd.f32 %v2320, %v2670
      %v2883 = vadd.f32 %v2321, %v2673
      %v2884 = vadd.f32 %v2322, %v2678
      %v2885 = vadd.f32 %v2323, %v2681
      %v2886 = vadd.f32 %v2324, %v2686
      %v2887 = vadd.f32 %v2325, %v2689
      %v2888 = vadd.f32 %v2326, %v2694
      %v2889 = vadd.f32 %v2327, %v2697
      %v2890 = vadd.f32 %v2328, %v2702
      %v2891 = vadd.f32 %v2329, %v2705
      %v2892 = vadd.f32 %v2330, %v2710
      %v2893 = vadd.f32 %v2331, %v2713
      %v2894 = vadd.f32 %v2332, %v2718
      %v2895 = vadd.f32 %v2333, %v2721
      %v2896 = vadd.f32 %v2334, %v2726
      %v2897 = vadd.f32 %v2335, %v2729
      %v2898 = vadd.f32 %v2336, %v2734
      %v2899 = vadd.f32 %v2337, %v2737
      %v2900 = vadd.f32 %v2338, %v2742
      %v2901 = vadd.f32 %v2339, %v2745
      %v2902 = vadd.f32 %v2340, %v2750
      %v2903 = vadd.f32 %v2341, %v2753
      %v2904 = vadd.f32 %v2342, %v2758
      %v2905 = vadd.f32 %v2343, %v2761
      %v2906 = vadd.f32 %v2344, %v2766
      %v2907 = vadd.f32 %v2345, %v2769
      %v2908 = vadd.f32 %v2346, %v2774
      %v2909 = vadd.f32 %v2347, %v2777
      %v2910 = vadd.f32 %v2348, %v2782
      %v2911 = vadd.f32 %v2349, %v2785
      %v2912 = vadd.f32 %v2350, %v2790
      %v2913 = vadd.f32 %v2351, %v2793
      %v2914 = vadd.f32 %v2352, %v2798
      %v2915 = vadd.f32 %v2353, %v2801
      %v2916 = vadd.f32 %v2354, %v2806
      %v2917 = vadd.f32 %v2355, %v2809
      %v2918 = vadd.f32 %v2356, %v2814
      %v2919 = vadd.f32 %v2357, %v2817
      %v2920 = vadd.f32 %v2358, %v2822
      %v2921 = vadd.f32 %v2359, %v2825
      %v2922 = vadd.f32 %v2360, %v2830
      %v2923 = vadd.f32 %v2361, %v2833
      %v2924 = vadd.f32 %v2362, %v2838
      %v2925 = vadd.f32 %v2363, %v2841
      %v2926 = vadd.f32 %v2364, %v2846
      %v2927 = vadd.f32 %v2365, %v2849
      %v2928 = vadd.f32 %v2366, %v2854
      %v2929 = vadd.f32 %v2367, %v2857
      %v2930 = vadd.f32 %v2368, %v2862
      %v2931 = vadd.f32 %v2369, %v2865
      %v2932 = vld [vmem:[%s8] sm:$0x1]
      %v2934 = vlaneseq
      %v2935 = vshrl.u32 %v2934, 7
      %v2936 = vsub.s32 0, %v2935
      %v2937 = vrot.slane %v2932, %v2936
      %v2939 = vadd.f32 %v2868, %v2937
      %v2940 = vadd.f32 %v2869, %v2937
      %v2941 = vadd.f32 %v2870, %v2937
      %v2942 = vadd.f32 %v2871, %v2937
      %v2943 = vadd.f32 %v2872, %v2937
      %v2944 = vadd.f32 %v2873, %v2937
      %v2945 = vadd.f32 %v2874, %v2937
      %v2946 = vadd.f32 %v2875, %v2937
      %v2947 = vadd.f32 %v2876, %v2937
      %v2948 = vadd.f32 %v2877, %v2937
      %v2949 = vadd.f32 %v2878, %v2937
      %v2950 = vadd.f32 %v2879, %v2937
      %v2951 = vadd.f32 %v2880, %v2937
      %v2952 = vadd.f32 %v2881, %v2937
      %v2953 = vadd.f32 %v2882, %v2937
      %v2954 = vadd.f32 %v2883, %v2937
      %v2955 = vadd.f32 %v2884, %v2937
      %v2956 = vadd.f32 %v2885, %v2937
      %v2957 = vadd.f32 %v2886, %v2937
      %v2958 = vadd.f32 %v2887, %v2937
      %v2959 = vadd.f32 %v2888, %v2937
      %v2960 = vadd.f32 %v2889, %v2937
      %v2961 = vadd.f32 %v2890, %v2937
      %v2962 = vadd.f32 %v2891, %v2937
      %v2963 = vadd.f32 %v2892, %v2937
      %v2964 = vadd.f32 %v2893, %v2937
      %v2965 = vadd.f32 %v2894, %v2937
      %v2966 = vadd.f32 %v2895, %v2937
      %v2967 = vadd.f32 %v2896, %v2937
      %v2968 = vadd.f32 %v2897, %v2937
      %v2969 = vadd.f32 %v2898, %v2937
      %v2970 = vadd.f32 %v2899, %v2937
      %v2971 = vadd.f32 %v2900, %v2937
      %v2972 = vadd.f32 %v2901, %v2937
      %v2973 = vadd.f32 %v2902, %v2937
      %v2974 = vadd.f32 %v2903, %v2937
      %v2975 = vadd.f32 %v2904, %v2937
      %v2976 = vadd.f32 %v2905, %v2937
      %v2977 = vadd.f32 %v2906, %v2937
      %v2978 = vadd.f32 %v2907, %v2937
      %v2979 = vadd.f32 %v2908, %v2937
      %v2980 = vadd.f32 %v2909, %v2937
      %v2981 = vadd.f32 %v2910, %v2937
      %v2982 = vadd.f32 %v2911, %v2937
      %v2983 = vadd.f32 %v2912, %v2937
      %v2984 = vadd.f32 %v2913, %v2937
      %v2985 = vadd.f32 %v2914, %v2937
      %v2986 = vadd.f32 %v2915, %v2937
      %v2987 = vadd.f32 %v2916, %v2937
      %v2988 = vadd.f32 %v2917, %v2937
      %v2989 = vadd.f32 %v2918, %v2937
      %v2990 = vadd.f32 %v2919, %v2937
      %v2991 = vadd.f32 %v2920, %v2937
      %v2992 = vadd.f32 %v2921, %v2937
      %v2993 = vadd.f32 %v2922, %v2937
      %v2994 = vadd.f32 %v2923, %v2937
      %v2995 = vadd.f32 %v2924, %v2937
      %v2996 = vadd.f32 %v2925, %v2937
      %v2997 = vadd.f32 %v2926, %v2937
      %v2998 = vadd.f32 %v2927, %v2937
      %v2999 = vadd.f32 %v2928, %v2937
      %v3000 = vadd.f32 %v2929, %v2937
      %v3001 = vadd.f32 %v2930, %v2937
      %v3002 = vadd.f32 %v2931, %v2937
      %v3003 = vpack.c.bf16 %v2940, %v2939
      %v3004 = vpack.c.bf16 %v2942, %v2941
      %v3005 = vpack.c.bf16 %v2944, %v2943
      %v3006 = vpack.c.bf16 %v2946, %v2945
      %v3007 = vpack.c.bf16 %v2948, %v2947
      %v3008 = vpack.c.bf16 %v2950, %v2949
      %v3009 = vpack.c.bf16 %v2952, %v2951
      %v3010 = vpack.c.bf16 %v2954, %v2953
      %v3011 = vpack.c.bf16 %v2956, %v2955
      %v3012 = vpack.c.bf16 %v2958, %v2957
      %v3013 = vpack.c.bf16 %v2960, %v2959
      %v3014 = vpack.c.bf16 %v2962, %v2961
      %v3015 = vpack.c.bf16 %v2964, %v2963
      %v3016 = vpack.c.bf16 %v2966, %v2965
      %v3017 = vpack.c.bf16 %v2968, %v2967
      %v3018 = vpack.c.bf16 %v2970, %v2969
      %v3019 = vpack.c.bf16 %v2972, %v2971
      %v3020 = vpack.c.bf16 %v2974, %v2973
      %v3021 = vpack.c.bf16 %v2976, %v2975
      %v3022 = vpack.c.bf16 %v2978, %v2977
      %v3023 = vpack.c.bf16 %v2980, %v2979
      %v3024 = vpack.c.bf16 %v2982, %v2981
      %v3025 = vpack.c.bf16 %v2984, %v2983
      %v3026 = vpack.c.bf16 %v2986, %v2985
      %v3027 = vpack.c.bf16 %v2988, %v2987
      %v3028 = vpack.c.bf16 %v2990, %v2989
      %v3029 = vpack.c.bf16 %v2992, %v2991
      %v3030 = vpack.c.bf16 %v2994, %v2993
      %v3031 = vpack.c.bf16 %v2996, %v2995
      %v3032 = vpack.c.bf16 %v2998, %v2997
      %v3033 = vpack.c.bf16 %v3000, %v2999
      %v3034 = vpack.c.bf16 %v3002, %v3001
      %v3035 = vld [vmem:[%s9] sm:$0xf]
      %v3036 = vld [vmem:[%s9 + $0x4] sm:$0xf]
      %v3037 = vld [vmem:[%s9 + $0x8] sm:$0xf]
      %v3038 = vld [vmem:[%s9 + $0xc] sm:$0xf]
      %v3039 = vld [vmem:[%s9 + $0x10] sm:$0xf]
      %v3040 = vld [vmem:[%s9 + $0x14] sm:$0xf]
      %v3041 = vld [vmem:[%s9 + $0x18] sm:$0xf]
      %v3042 = vld [vmem:[%s9 + $0x1c] sm:$0xf]
      %v3043 = vld [vmem:[%s9 + $0x20] sm:$0xf]
      %v3044 = vld [vmem:[%s9 + $0x24] sm:$0xf]
      %v3045 = vld [vmem:[%s9 + $0x28] sm:$0xf]
      %v3046 = vld [vmem:[%s9 + $0x2c] sm:$0xf]
      %v3047 = vld [vmem:[%s9 + $0x30] sm:$0xf]
      %v3048 = vld [vmem:[%s9 + $0x34] sm:$0xf]
      %v3049 = vld [vmem:[%s9 + $0x38] sm:$0xf]
      %v3050 = vld [vmem:[%s9 + $0x3c] sm:$0xf]
      %v3051 = vld [vmem:[%s10] sm:$0x1]
      %v3053 = vlaneseq
      %v3054 = vshrl.u32 %v3053, 7
      %v3055 = vsub.s32 0, %v3054
      %v3056 = vrot.slane %v3051, %v3055
      %v3074 = vunpack.c.l.b16 %v3035
      %v3075 = vunpack.c.l.b16 %v3036
      %v3076 = vunpack.c.l.b16 %v3037
      %v3077 = vunpack.c.l.b16 %v3038
      %v3078 = vunpack.c.l.b16 %v3039
      %v3079 = vunpack.c.l.b16 %v3040
      %v3080 = vunpack.c.l.b16 %v3041
      %v3081 = vunpack.c.l.b16 %v3042
      %v3082 = vunpack.c.l.b16 %v3043
      %v3083 = vunpack.c.l.b16 %v3044
      %v3084 = vunpack.c.l.b16 %v3045
      %v3085 = vunpack.c.l.b16 %v3046
      %v3086 = vunpack.c.l.b16 %v3047
      %v3087 = vunpack.c.l.b16 %v3048
      %v3088 = vunpack.c.l.b16 %v3049
      %v3089 = vunpack.c.l.b16 %v3050
      %v3090 = vpack.c.b16 %v3075, %v3074
      %v3091 = vpack.c.b16 %v3077, %v3076
      %v3092 = vpack.c.b16 %v3079, %v3078
      %v3093 = vpack.c.b16 %v3081, %v3080
      %v3094 = vpack.c.b16 %v3083, %v3082
      %v3095 = vpack.c.b16 %v3085, %v3084
      %v3096 = vpack.c.b16 %v3087, %v3086
      %v3097 = vpack.c.b16 %v3089, %v3088
      %3106 = vmatprep.subr.bf16.mxu0 0
      %3107 = vmatpush1.bf16.msra.mxu0 %v3090
      %3108 = vmatprep.subr.bf16.mxu0 0
      %3109 = vmatpush1.bf16.msra.mxu0 %v3091
      %3110 = vmatprep.subr.bf16.mxu0 0
      %3111 = vmatpush1.bf16.msra.mxu0 %v3092
      %3112 = vmatprep.subr.bf16.mxu0 0
      %3113 = vmatpush1.bf16.msra.mxu0 %v3093
      %3114 = vmatprep.subr.bf16.mxu0 0
      %3115 = vmatpush1.bf16.msra.mxu0 %v3094
      %3116 = vmatprep.subr.bf16.mxu0 0
      %3117 = vmatpush1.bf16.msra.mxu0 %v3095
      %3118 = vmatprep.subr.bf16.mxu0 0
      %3119 = vmatpush1.bf16.msra.mxu0 %v3096
      %3120 = vmatprep.subr.bf16.mxu0 0
      %3121 = vmatpush1.bf16.msra.mxu0 %v3097
      %3122 = vmatprep.subr.bf16.mxu0 0
      %3123 = vmatpush1.bf16.msra.mxu0 0
      %3124 = vmatprep.subr.bf16.mxu0 0
      %3125 = vmatpush1.bf16.msra.mxu0 0
      %3126 = vmatprep.subr.bf16.mxu0 0
      %3127 = vmatpush1.bf16.msra.mxu0 0
      %3128 = vmatprep.subr.bf16.mxu0 0
      %3129 = vmatpush1.bf16.msra.mxu0 0
      %3130 = vmatprep.subr.bf16.mxu0 0
      %3131 = vmatpush1.bf16.msra.mxu0 0
      %3132 = vmatprep.subr.bf16.mxu0 0
      %3133 = vmatpush1.bf16.msra.mxu0 0
      %3134 = vmatprep.subr.bf16.mxu0 0
      %3135 = vmatpush1.bf16.msra.mxu0 0
      %3136 = vmatprep.subr.bf16.mxu0 0
      %3137 = vmatpush1.bf16.msra.mxu0 0
      %3138 = vmatprep.mubr.bf16.mxu0 0
      %3139 = vmatmul.mubr.bf16.gmra.mrb[0].mxu0 %v3003
      %v3140 = vpop.f32.mrb[0].mxu0
      %v3141 = vadd.f32 %v3056, %v3140
      %v3142 = vpop.f32.mrb[0].mxu0
      %v3143 = vpop.f32.mrb[0].mxu0
      %v3144 = vadd.f32 %v3056, %v3143
      %v3145 = vpop.f32.mrb[0].mxu0
      %3146 = vmatprep.mubr.bf16.mxu0 0
      %3147 = vmatmul.mubr.bf16.gmra.mrb[0].mxu0 %v3004
      %v3148 = vpop.f32.mrb[0].mxu0
      %v3149 = vadd.f32 %v3056, %v3148
      %v3150 = vpop.f32.mrb[0].mxu0
      %v3151 = vpop.f32.mrb[0].mxu0
      %v3152 = vadd.f32 %v3056, %v3151
      %v3153 = vpop.f32.mrb[0].mxu0
      %3154 = vmatprep.mubr.bf16.mxu0 0
      %3155 = vmatmul.mubr.bf16.gmra.mrb[0].mxu0 %v3005
      %v3156 = vpop.f32.mrb[0].mxu0
      %v3157 = vadd.f32 %v3056, %v3156
      %v3158 = vpop.f32.mrb[0].mxu0
      %v3159 = vpop.f32.mrb[0].mxu0
      %v3160 = vadd.f32 %v3056, %v3159
      %v3161 = vpop.f32.mrb[0].mxu0
      %3162 = vmatprep.mubr.bf16.mxu0 0
      %3163 = vmatmul.mubr.bf16.gmra.mrb[0].mxu0 %v3006
      %v3164 = vpop.f32.mrb[0].mxu0
      %v3165 = vadd.f32 %v3056, %v3164
      %v3166 = vpop.f32.mrb[0].mxu0
      %v3167 = vpop.f32.mrb[0].mxu0
      %v3168 = vadd.f32 %v3056, %v3167
      %v3169 = vpop.f32.mrb[0].mxu0
      %3170 = vmatprep.mubr.bf16.mxu0 0
      %3171 = vmatmul.mubr.bf16.gmra.mrb[0].mxu0 %v3007
      %v3172 = vpop.f32.mrb[0].mxu0
      %v3173 = vadd.f32 %v3056, %v3172
      %v3174 = vpop.f32.mrb[0].mxu0
      %v3175 = vpop.f32.mrb[0].mxu0
      %v3176 = vadd.f32 %v3056, %v3175
      %v3177 = vpop.f32.mrb[0].mxu0
      %3178 = vmatprep.mubr.bf16.mxu0 0
      %3179 = vmatmul.mubr.bf16.gmra.mrb[0].mxu0 %v3008
      %v3180 = vpop.f32.mrb[0].mxu0
      %v3181 = vadd.f32 %v3056, %v3180
      %v3182 = vpop.f32.mrb[0].mxu0
      %v3183 = vpop.f32.mrb[0].mxu0
      %v3184 = vadd.f32 %v3056, %v3183
      %v3185 = vpop.f32.mrb[0].mxu0
      %3186 = vmatprep.mubr.bf16.mxu0 0
      %3187 = vmatmul.mubr.bf16.gmra.mrb[0].mxu0 %v3009
      %v3188 = vpop.f32.mrb[0].mxu0
      %v3189 = vadd.f32 %v3056, %v3188
      %v3190 = vpop.f32.mrb[0].mxu0
      %v3191 = vpop.f32.mrb[0].mxu0
      %v3192 = vadd.f32 %v3056, %v3191
      %v3193 = vpop.f32.mrb[0].mxu0
      %3194 = vmatprep.mubr.bf16.mxu0 0
      %3195 = vmatmul.mubr.bf16.gmra.mrb[0].mxu0 %v3010
      %v3196 = vpop.f32.mrb[0].mxu0
      %v3197 = vadd.f32 %v3056, %v3196
      %v3198 = vpop.f32.mrb[0].mxu0
      %v3199 = vpop.f32.mrb[0].mxu0
      %v3200 = vadd.f32 %v3056, %v3199
      %v3201 = vpop.f32.mrb[0].mxu0
      %3202 = vmatprep.mubr.bf16.mxu0 0
      %3203 = vmatmul.mubr.bf16.gmra.mrb[0].mxu0 %v3011
      %v3204 = vpop.f32.mrb[0].mxu0
      %v3205 = vadd.f32 %v3056, %v3204
      %v3206 = vpop.f32.mrb[0].mxu0
      %v3207 = vpop.f32.mrb[0].mxu0
      %v3208 = vadd.f32 %v3056, %v3207
      %v3209 = vpop.f32.mrb[0].mxu0
      %3210 = vmatprep.mubr.bf16.mxu0 0
      %3211 = vmatmul.mubr.bf16.gmra.mrb[0].mxu0 %v3012
      %v3212 = vpop.f32.mrb[0].mxu0
      %v3213 = vadd.f32 %v3056, %v3212
      %v3214 = vpop.f32.mrb[0].mxu0
      %v3215 = vpop.f32.mrb[0].mxu0
      %v3216 = vadd.f32 %v3056, %v3215
      %v3217 = vpop.f32.mrb[0].mxu0
      %3218 = vmatprep.mubr.bf16.mxu0 0
      %3219 = vmatmul.mubr.bf16.gmra.mrb[0].mxu0 %v3013
      %v3220 = vpop.f32.mrb[0].mxu0
      %v3221 = vadd.f32 %v3056, %v3220
      %v3222 = vpop.f32.mrb[0].mxu0
      %v3223 = vpop.f32.mrb[0].mxu0
      %v3224 = vadd.f32 %v3056, %v3223
      %v3225 = vpop.f32.mrb[0].mxu0
      %3226 = vmatprep.mubr.bf16.mxu0 0
      %3227 = vmatmul.mubr.bf16.gmra.mrb[0].mxu0 %v3014
      %v3228 = vpop.f32.mrb[0].mxu0
      %v3229 = vadd.f32 %v3056, %v3228
      %v3230 = vpop.f32.mrb[0].mxu0
      %v3231 = vpop.f32.mrb[0].mxu0
      %v3232 = vadd.f32 %v3056, %v3231
      %v3233 = vpop.f32.mrb[0].mxu0
      %3234 = vmatprep.mubr.bf16.mxu0 0
      %3235 = vmatmul.mubr.bf16.gmra.mrb[0].mxu0 %v3015
      %v3236 = vpop.f32.mrb[0].mxu0
      %v3237 = vadd.f32 %v3056, %v3236
      %v3238 = vpop.f32.mrb[0].mxu0
      %v3239 = vpop.f32.mrb[0].mxu0
      %v3240 = vadd.f32 %v3056, %v3239
      %v3241 = vpop.f32.mrb[0].mxu0
      %3242 = vmatprep.mubr.bf16.mxu0 0
      %3243 = vmatmul.mubr.bf16.gmra.mrb[0].mxu0 %v3016
      %v3244 = vpop.f32.mrb[0].mxu0
      %v3245 = vadd.f32 %v3056, %v3244
      %v3246 = vpop.f32.mrb[0].mxu0
      %v3247 = vpop.f32.mrb[0].mxu0
      %v3248 = vadd.f32 %v3056, %v3247
      %v3249 = vpop.f32.mrb[0].mxu0
      %3250 = vmatprep.mubr.bf16.mxu0 0
      %3251 = vmatmul.mubr.bf16.gmra.mrb[0].mxu0 %v3017
      %v3252 = vpop.f32.mrb[0].mxu0
      %v3253 = vadd.f32 %v3056, %v3252
      %v3254 = vpop.f32.mrb[0].mxu0
      %v3255 = vpop.f32.mrb[0].mxu0
      %v3256 = vadd.f32 %v3056, %v3255
      %v3257 = vpop.f32.mrb[0].mxu0
      %3258 = vmatprep.mubr.bf16.mxu0 0
      %3259 = vmatmul.mubr.bf16.gmra.mrb[0].mxu0 %v3018
      %v3260 = vpop.f32.mrb[0].mxu0
      %v3261 = vadd.f32 %v3056, %v3260
      %v3262 = vpop.f32.mrb[0].mxu0
      %v3263 = vpop.f32.mrb[0].mxu0
      %v3264 = vadd.f32 %v3056, %v3263
      %v3265 = vpop.f32.mrb[0].mxu0
      %3266 = vmatprep.mubr.bf16.mxu0 0
      %3267 = vmatmul.mubr.bf16.gmra.mrb[0].mxu0 %v3019
      %v3268 = vpop.f32.mrb[0].mxu0
      %v3269 = vadd.f32 %v3056, %v3268
      %v3270 = vpop.f32.mrb[0].mxu0
      %v3271 = vpop.f32.mrb[0].mxu0
      %v3272 = vadd.f32 %v3056, %v3271
      %v3273 = vpop.f32.mrb[0].mxu0
      %3274 = vmatprep.mubr.bf16.mxu0 0
      %3275 = vmatmul.mubr.bf16.gmra.mrb[0].mxu0 %v3020
      %v3276 = vpop.f32.mrb[0].mxu0
      %v3277 = vadd.f32 %v3056, %v3276
      %v3278 = vpop.f32.mrb[0].mxu0
      %v3279 = vpop.f32.mrb[0].mxu0
      %v3280 = vadd.f32 %v3056, %v3279
      %v3281 = vpop.f32.mrb[0].mxu0
      %3282 = vmatprep.mubr.bf16.mxu0 0
      %3283 = vmatmul.mubr.bf16.gmra.mrb[0].mxu0 %v3021
      %v3284 = vpop.f32.mrb[0].mxu0
      %v3285 = vadd.f32 %v3056, %v3284
      %v3286 = vpop.f32.mrb[0].mxu0
      %v3287 = vpop.f32.mrb[0].mxu0
      %v3288 = vadd.f32 %v3056, %v3287
      %v3289 = vpop.f32.mrb[0].mxu0
      %3290 = vmatprep.mubr.bf16.mxu0 0
      %3291 = vmatmul.mubr.bf16.gmra.mrb[0].mxu0 %v3022
      %v3292 = vpop.f32.mrb[0].mxu0
      %v3293 = vadd.f32 %v3056, %v3292
      %v3294 = vpop.f32.mrb[0].mxu0
      %v3295 = vpop.f32.mrb[0].mxu0
      %v3296 = vadd.f32 %v3056, %v3295
      %v3297 = vpop.f32.mrb[0].mxu0
      %3298 = vmatprep.mubr.bf16.mxu0 0
      %3299 = vmatmul.mubr.bf16.gmra.mrb[0].mxu0 %v3023
      %v3300 = vpop.f32.mrb[0].mxu0
      %v3301 = vadd.f32 %v3056, %v3300
      %v3302 = vpop.f32.mrb[0].mxu0
      %v3303 = vpop.f32.mrb[0].mxu0
      %v3304 = vadd.f32 %v3056, %v3303
      %v3305 = vpop.f32.mrb[0].mxu0
      %3306 = vmatprep.mubr.bf16.mxu0 0
      %3307 = vmatmul.mubr.bf16.gmra.mrb[0].mxu0 %v3024
      %v3308 = vpop.f32.mrb[0].mxu0
      %v3309 = vadd.f32 %v3056, %v3308
      %v3310 = vpop.f32.mrb[0].mxu0
      %v3311 = vpop.f32.mrb[0].mxu0
      %v3312 = vadd.f32 %v3056, %v3311
      %v3313 = vpop.f32.mrb[0].mxu0
      %3314 = vmatprep.mubr.bf16.mxu0 0
      %3315 = vmatmul.mubr.bf16.gmra.mrb[0].mxu0 %v3025
      %v3316 = vpop.f32.mrb[0].mxu0
      %v3317 = vadd.f32 %v3056, %v3316
      %v3318 = vpop.f32.mrb[0].mxu0
      %v3319 = vpop.f32.mrb[0].mxu0
      %v3320 = vadd.f32 %v3056, %v3319
      %v3321 = vpop.f32.mrb[0].mxu0
      %3322 = vmatprep.mubr.bf16.mxu0 0
      %3323 = vmatmul.mubr.bf16.gmra.mrb[0].mxu0 %v3026
      %v3324 = vpop.f32.mrb[0].mxu0
      %v3325 = vadd.f32 %v3056, %v3324
      %v3326 = vpop.f32.mrb[0].mxu0
      %v3327 = vpop.f32.mrb[0].mxu0
      %v3328 = vadd.f32 %v3056, %v3327
      %v3329 = vpop.f32.mrb[0].mxu0
      %3330 = vmatprep.mubr.bf16.mxu0 0
      %3331 = vmatmul.mubr.bf16.gmra.mrb[0].mxu0 %v3027
      %v3332 = vpop.f32.mrb[0].mxu0
      %v3333 = vadd.f32 %v3056, %v3332
      %v3334 = vpop.f32.mrb[0].mxu0
      %v3335 = vpop.f32.mrb[0].mxu0
      %v3336 = vadd.f32 %v3056, %v3335
      %v3337 = vpop.f32.mrb[0].mxu0
      %3338 = vmatprep.mubr.bf16.mxu0 0
      %3339 = vmatmul.mubr.bf16.gmra.mrb[0].mxu0 %v3028
      %v3340 = vpop.f32.mrb[0].mxu0
      %v3341 = vadd.f32 %v3056, %v3340
      %v3342 = vpop.f32.mrb[0].mxu0
      %v3343 = vpop.f32.mrb[0].mxu0
      %v3344 = vadd.f32 %v3056, %v3343
      %v3345 = vpop.f32.mrb[0].mxu0
      %3346 = vmatprep.mubr.bf16.mxu0 0
      %3347 = vmatmul.mubr.bf16.gmra.mrb[0].mxu0 %v3029
      %v3348 = vpop.f32.mrb[0].mxu0
      %v3349 = vadd.f32 %v3056, %v3348
      %v3350 = vpop.f32.mrb[0].mxu0
      %v3351 = vpop.f32.mrb[0].mxu0
      %v3352 = vadd.f32 %v3056, %v3351
      %v3353 = vpop.f32.mrb[0].mxu0
      %3354 = vmatprep.mubr.bf16.mxu0 0
      %3355 = vmatmul.mubr.bf16.gmra.mrb[0].mxu0 %v3030
      %v3356 = vpop.f32.mrb[0].mxu0
      %v3357 = vadd.f32 %v3056, %v3356
      %v3358 = vpop.f32.mrb[0].mxu0
      %v3359 = vpop.f32.mrb[0].mxu0
      %v3360 = vadd.f32 %v3056, %v3359
      %v3361 = vpop.f32.mrb[0].mxu0
      %3362 = vmatprep.mubr.bf16.mxu0 0
      %3363 = vmatmul.mubr.bf16.gmra.mrb[0].mxu0 %v3031
      %v3364 = vpop.f32.mrb[0].mxu0
      %v3365 = vadd.f32 %v3056, %v3364
      %v3366 = vpop.f32.mrb[0].mxu0
      %v3367 = vpop.f32.mrb[0].mxu0
      %v3368 = vadd.f32 %v3056, %v3367
      %v3369 = vpop.f32.mrb[0].mxu0
      %3370 = vmatprep.mubr.bf16.mxu0 0
      %3371 = vmatmul.mubr.bf16.gmra.mrb[0].mxu0 %v3032
      %v3372 = vpop.f32.mrb[0].mxu0
      %v3373 = vadd.f32 %v3056, %v3372
      %v3374 = vpop.f32.mrb[0].mxu0
      %v3375 = vpop.f32.mrb[0].mxu0
      %v3376 = vadd.f32 %v3056, %v3375
      %v3377 = vpop.f32.mrb[0].mxu0
      %3378 = vmatprep.mubr.bf16.mxu0 0
      %3379 = vmatmul.mubr.bf16.gmra.mrb[0].mxu0 %v3033
      %v3380 = vpop.f32.mrb[0].mxu0
      %v3381 = vadd.f32 %v3056, %v3380
      %v3382 = vpop.f32.mrb[0].mxu0
      %v3383 = vpop.f32.mrb[0].mxu0
      %v3384 = vadd.f32 %v3056, %v3383
      %v3385 = vpop.f32.mrb[0].mxu0
      %3386 = vmatprep.mubr.bf16.mxu0 0
      %3387 = vmatmul.mubr.bf16.gmra.mrb[0].mxu0 %v3034
      %v3388 = vpop.f32.mrb[0].mxu0
      %v3389 = vadd.f32 %v3056, %v3388
      %v3390 = vpop.f32.mrb[0].mxu0
      %v3391 = vpop.f32.mrb[0].mxu0
      %v3392 = vadd.f32 %v3056, %v3391
      %v3393 = vpop.f32.mrb[0].mxu0
      %3394 = vdwg.mxu0
      %v3395 = vmax.f32 %v3141, 0.0
      %v3396 = vmax.f32 %v3144, 0.0
      %v3397 = vmax.f32 %v3149, 0.0
      %v3398 = vmax.f32 %v3152, 0.0
      %v3399 = vmax.f32 %v3157, 0.0
      %v3400 = vmax.f32 %v3160, 0.0
      %v3401 = vmax.f32 %v3165, 0.0
      %v3402 = vmax.f32 %v3168, 0.0
      %v3403 = vmax.f32 %v3173, 0.0
      %v3404 = vmax.f32 %v3176, 0.0
      %v3405 = vmax.f32 %v3181, 0.0
      %v3406 = vmax.f32 %v3184, 0.0
      %v3407 = vmax.f32 %v3189, 0.0
      %v3408 = vmax.f32 %v3192, 0.0
      %v3409 = vmax.f32 %v3197, 0.0
      %v3410 = vmax.f32 %v3200, 0.0
      %v3411 = vmax.f32 %v3205, 0.0
      %v3412 = vmax.f32 %v3208, 0.0
      %v3413 = vmax.f32 %v3213, 0.0
      %v3414 = vmax.f32 %v3216, 0.0
      %v3415 = vmax.f32 %v3221, 0.0
      %v3416 = vmax.f32 %v3224, 0.0
      %v3417 = vmax.f32 %v3229, 0.0
      %v3418 = vmax.f32 %v3232, 0.0
      %v3419 = vmax.f32 %v3237, 0.0
      %v3420 = vmax.f32 %v3240, 0.0
      %v3421 = vmax.f32 %v3245, 0.0
      %v3422 = vmax.f32 %v3248, 0.0
      %v3423 = vmax.f32 %v3253, 0.0
      %v3424 = vmax.f32 %v3256, 0.0
      %v3425 = vmax.f32 %v3261, 0.0
      %v3426 = vmax.f32 %v3264, 0.0
      %v3427 = vmax.f32 %v3269, 0.0
      %v3428 = vmax.f32 %v3272, 0.0
      %v3429 = vmax.f32 %v3277, 0.0
      %v3430 = vmax.f32 %v3280, 0.0
      %v3431 = vmax.f32 %v3285, 0.0
      %v3432 = vmax.f32 %v3288, 0.0
      %v3433 = vmax.f32 %v3293, 0.0
      %v3434 = vmax.f32 %v3296, 0.0
      %v3435 = vmax.f32 %v3301, 0.0
      %v3436 = vmax.f32 %v3304, 0.0
      %v3437 = vmax.f32 %v3309, 0.0
      %v3438 = vmax.f32 %v3312, 0.0
      %v3439 = vmax.f32 %v3317, 0.0
      %v3440 = vmax.f32 %v3320, 0.0
      %v3441 = vmax.f32 %v3325, 0.0
      %v3442 = vmax.f32 %v3328, 0.0
      %v3443 = vmax.f32 %v3333, 0.0
      %v3444 = vmax.f32 %v3336, 0.0
      %v3445 = vmax.f32 %v3341, 0.0
      %v3446 = vmax.f32 %v3344, 0.0
      %v3447 = vmax.f32 %v3349, 0.0
      %v3448 = vmax.f32 %v3352, 0.0
      %v3449 = vmax.f32 %v3357, 0.0
      %v3450 = vmax.f32 %v3360, 0.0
      %v3451 = vmax.f32 %v3365, 0.0
      %v3452 = vmax.f32 %v3368, 0.0
      %v3453 = vmax.f32 %v3373, 0.0
      %v3454 = vmax.f32 %v3376, 0.0
      %v3455 = vmax.f32 %v3381, 0.0
      %v3456 = vmax.f32 %v3384, 0.0
      %v3457 = vmax.f32 %v3389, 0.0
      %v3458 = vmax.f32 %v3392, 0.0
      %v3459 = vpack.c.bf16 %v3396, %v3395
      %v3460 = vpack.c.bf16 %v3398, %v3397
      %v3461 = vpack.c.bf16 %v3400, %v3399
      %v3462 = vpack.c.bf16 %v3402, %v3401
      %v3463 = vpack.c.bf16 %v3404, %v3403
      %v3464 = vpack.c.bf16 %v3406, %v3405
      %v3465 = vpack.c.bf16 %v3408, %v3407
      %v3466 = vpack.c.bf16 %v3410, %v3409
      %v3467 = vpack.c.bf16 %v3412, %v3411
      %v3468 = vpack.c.bf16 %v3414, %v3413
      %v3469 = vpack.c.bf16 %v3416, %v3415
      %v3470 = vpack.c.bf16 %v3418, %v3417
      %v3471 = vpack.c.bf16 %v3420, %v3419
      %v3472 = vpack.c.bf16 %v3422, %v3421
      %v3473 = vpack.c.bf16 %v3424, %v3423
      %v3474 = vpack.c.bf16 %v3426, %v3425
      %v3475 = vpack.c.bf16 %v3428, %v3427
      %v3476 = vpack.c.bf16 %v3430, %v3429
      %v3477 = vpack.c.bf16 %v3432, %v3431
      %v3478 = vpack.c.bf16 %v3434, %v3433
      %v3479 = vpack.c.bf16 %v3436, %v3435
      %v3480 = vpack.c.bf16 %v3438, %v3437
      %v3481 = vpack.c.bf16 %v3440, %v3439
      %v3482 = vpack.c.bf16 %v3442, %v3441
      %v3483 = vpack.c.bf16 %v3444, %v3443
      %v3484 = vpack.c.bf16 %v3446, %v3445
      %v3485 = vpack.c.bf16 %v3448, %v3447
      %v3486 = vpack.c.bf16 %v3450, %v3449
      %v3487 = vpack.c.bf16 %v3452, %v3451
      %v3488 = vpack.c.bf16 %v3454, %v3453
      %v3489 = vpack.c.bf16 %v3456, %v3455
      %v3490 = vpack.c.bf16 %v3458, %v3457
      %v3491 = vld [vmem:[%s11] sm:$0xf]
      %v3492 = vld [vmem:[%s11 + $0x4] sm:$0xf]
      %v3493 = vld [vmem:[%s11 + $0x8] sm:$0xf]
      %v3494 = vld [vmem:[%s11 + $0xc] sm:$0xf]
      %v3495 = vld [vmem:[%s11 + $0x10] sm:$0xf]
      %v3496 = vld [vmem:[%s11 + $0x14] sm:$0xf]
      %v3497 = vld [vmem:[%s11 + $0x18] sm:$0xf]
      %v3498 = vld [vmem:[%s11 + $0x1c] sm:$0xf]
      %v3499 = vld [vmem:[%s12] sm:$0x1]
      %v3501 = vlaneseq
      %v3502 = vshrl.u32 %v3501, 7
      %v3503 = vsub.s32 0, %v3502
      %v3504 = vrot.slane %v3499, %v3503
      %v3514 = vunpack.c.l.b16 %v3491
      %v3515 = vunpack.c.l.b16 %v3492
      %v3516 = vunpack.c.l.b16 %v3493
      %v3517 = vunpack.c.l.b16 %v3494
      %v3518 = vunpack.c.l.b16 %v3495
      %v3519 = vunpack.c.l.b16 %v3496
      %v3520 = vunpack.c.l.b16 %v3497
      %v3521 = vunpack.c.l.b16 %v3498
      %v3522 = vpack.c.b16 %v3515, %v3514
      %v3523 = vpack.c.b16 %v3517, %v3516
      %v3524 = vpack.c.b16 %v3519, %v3518
      %v3525 = vpack.c.b16 %v3521, %v3520
      %vm3530 = vcmask 523264
      %v3532 = vsel %vm3530, %v3459, 0
      %v3535 = vsel %vm3530, %v3460, 0
      %v3538 = vsel %vm3530, %v3461, 0
      %v3541 = vsel %vm3530, %v3462, 0
      %v3544 = vsel %vm3530, %v3463, 0
      %v3547 = vsel %vm3530, %v3464, 0
      %v3550 = vsel %vm3530, %v3465, 0
      %v3553 = vsel %vm3530, %v3466, 0
      %v3556 = vsel %vm3530, %v3467, 0
      %v3559 = vsel %vm3530, %v3468, 0
      %v3562 = vsel %vm3530, %v3469, 0
      %v3565 = vsel %vm3530, %v3470, 0
      %v3568 = vsel %vm3530, %v3471, 0
      %v3571 = vsel %vm3530, %v3472, 0
      %v3574 = vsel %vm3530, %v3473, 0
      %v3577 = vsel %vm3530, %v3474, 0
      %v3580 = vsel %vm3530, %v3475, 0
      %v3583 = vsel %vm3530, %v3476, 0
      %v3586 = vsel %vm3530, %v3477, 0
      %v3589 = vsel %vm3530, %v3478, 0
      %v3592 = vsel %vm3530, %v3479, 0
      %v3595 = vsel %vm3530, %v3480, 0
      %v3598 = vsel %vm3530, %v3481, 0
      %v3601 = vsel %vm3530, %v3482, 0
      %v3604 = vsel %vm3530, %v3483, 0
      %v3607 = vsel %vm3530, %v3484, 0
      %v3610 = vsel %vm3530, %v3485, 0
      %v3613 = vsel %vm3530, %v3486, 0
      %v3616 = vsel %vm3530, %v3487, 0
      %v3619 = vsel %vm3530, %v3488, 0
      %v3622 = vsel %vm3530, %v3489, 0
      %v3625 = vsel %vm3530, %v3490, 0
      %3627 = vmatprep.subr.bf16.mxu0 0
      %3628 = vmatpush1.bf16.msra.mxu0 %v3522
      %3629 = vmatprep.subr.bf16.mxu0 0
      %3630 = vmatpush1.bf16.msra.mxu0 %v3523
      %3631 = vmatprep.subr.bf16.mxu0 0
      %3632 = vmatpush1.bf16.msra.mxu0 %v3524
      %3633 = vmatprep.subr.bf16.mxu0 0
      %3634 = vmatpush1.bf16.msra.mxu0 %v3525
      %3635 = vmatprep.subr.bf16.mxu0 0
      %3636 = vmatpush1.bf16.msra.mxu0 0
      %3637 = vmatprep.subr.bf16.mxu0 0
      %3638 = vmatpush1.bf16.msra.mxu0 0
      %3639 = vmatprep.subr.bf16.mxu0 0
      %3640 = vmatpush1.bf16.msra.mxu0 0
      %3641 = vmatprep.subr.bf16.mxu0 0
      %3642 = vmatpush1.bf16.msra.mxu0 0
      %3643 = vmatprep.subr.bf16.mxu0 0
      %3644 = vmatpush1.bf16.msra.mxu0 0
      %3645 = vmatprep.subr.bf16.mxu0 0
      %3646 = vmatpush1.bf16.msra.mxu0 0
      %3647 = vmatprep.subr.bf16.mxu0 0
      %3648 = vmatpush1.bf16.msra.mxu0 0
      %3649 = vmatprep.subr.bf16.mxu0 0
      %3650 = vmatpush1.bf16.msra.mxu0 0
      %3651 = vmatprep.subr.bf16.mxu0 0
      %3652 = vmatpush1.bf16.msra.mxu0 0
      %3653 = vmatprep.subr.bf16.mxu0 0
      %3654 = vmatpush1.bf16.msra.mxu0 0
      %3655 = vmatprep.subr.bf16.mxu0 0
      %3656 = vmatpush1.bf16.msra.mxu0 0
      %3657 = vmatprep.subr.bf16.mxu0 0
      %3658 = vmatpush1.bf16.msra.mxu0 0
      %3659 = vmatprep.mubr.bf16.mxu0 0
      %3660 = vmatmul.mubr.bf16.gmra.mrb[0].mxu0 %v3532
      %v3661 = vpop.f32.mrb[0].mxu0
      %v3662 = vadd.f32 %v3504, %v3661
      %v3663 = vpop.f32.mrb[0].mxu0
      %v3664 = vpop.f32.mrb[0].mxu0
      %v3665 = vadd.f32 %v3504, %v3664
      %v3666 = vpop.f32.mrb[0].mxu0
      %3667 = vmatprep.mubr.bf16.mxu0 0
      %3668 = vmatmul.mubr.bf16.gmra.mrb[0].mxu0 %v3535
      %v3669 = vpop.f32.mrb[0].mxu0
      %v3670 = vadd.f32 %v3504, %v3669
      %v3671 = vpop.f32.mrb[0].mxu0
      %v3672 = vpop.f32.mrb[0].mxu0
      %v3673 = vadd.f32 %v3504, %v3672
      %v3674 = vpop.f32.mrb[0].mxu0
      %3675 = vmatprep.mubr.bf16.mxu0 0
      %3676 = vmatmul.mubr.bf16.gmra.mrb[0].mxu0 %v3538
      %v3677 = vpop.f32.mrb[0].mxu0
      %v3678 = vadd.f32 %v3504, %v3677
      %v3679 = vpop.f32.mrb[0].mxu0
      %v3680 = vpop.f32.mrb[0].mxu0
      %v3681 = vadd.f32 %v3504, %v3680
      %v3682 = vpop.f32.mrb[0].mxu0
      %3683 = vmatprep.mubr.bf16.mxu0 0
      %3684 = vmatmul.mubr.bf16.gmra.mrb[0].mxu0 %v3541
      %v3685 = vpop.f32.mrb[0].mxu0
      %v3686 = vadd.f32 %v3504, %v3685
      %v3687 = vpop.f32.mrb[0].mxu0
      %v3688 = vpop.f32.mrb[0].mxu0
      %v3689 = vadd.f32 %v3504, %v3688
      %v3690 = vpop.f32.mrb[0].mxu0
      %3691 = vmatprep.mubr.bf16.mxu0 0
      %3692 = vmatmul.mubr.bf16.gmra.mrb[0].mxu0 %v3544
      %v3693 = vpop.f32.mrb[0].mxu0
      %v3694 = vadd.f32 %v3504, %v3693
      %v3695 = vpop.f32.mrb[0].mxu0
      %v3696 = vpop.f32.mrb[0].mxu0
      %v3697 = vadd.f32 %v3504, %v3696
      %v3698 = vpop.f32.mrb[0].mxu0
      %3699 = vmatprep.mubr.bf16.mxu0 0
      %3700 = vmatmul.mubr.bf16.gmra.mrb[0].mxu0 %v3547
      %v3701 = vpop.f32.mrb[0].mxu0
      %v3702 = vadd.f32 %v3504, %v3701
      %v3703 = vpop.f32.mrb[0].mxu0
      %v3704 = vpop.f32.mrb[0].mxu0
      %v3705 = vadd.f32 %v3504, %v3704
      %v3706 = vpop.f32.mrb[0].mxu0
      %3707 = vmatprep.mubr.bf16.mxu0 0
      %3708 = vmatmul.mubr.bf16.gmra.mrb[0].mxu0 %v3550
      %v3709 = vpop.f32.mrb[0].mxu0
      %v3710 = vadd.f32 %v3504, %v3709
      %v3711 = vpop.f32.mrb[0].mxu0
      %v3712 = vpop.f32.mrb[0].mxu0
      %v3713 = vadd.f32 %v3504, %v3712
      %v3714 = vpop.f32.mrb[0].mxu0
      %3715 = vmatprep.mubr.bf16.mxu0 0
      %3716 = vmatmul.mubr.bf16.gmra.mrb[0].mxu0 %v3553
      %v3717 = vpop.f32.mrb[0].mxu0
      %v3718 = vadd.f32 %v3504, %v3717
      %v3719 = vpop.f32.mrb[0].mxu0
      %v3720 = vpop.f32.mrb[0].mxu0
      %v3721 = vadd.f32 %v3504, %v3720
      %v3722 = vpop.f32.mrb[0].mxu0
      %3723 = vmatprep.mubr.bf16.mxu0 0
      %3724 = vmatmul.mubr.bf16.gmra.mrb[0].mxu0 %v3556
      %v3725 = vpop.f32.mrb[0].mxu0
      %v3726 = vadd.f32 %v3504, %v3725
      %v3727 = vpop.f32.mrb[0].mxu0
      %v3728 = vpop.f32.mrb[0].mxu0
      %v3729 = vadd.f32 %v3504, %v3728
      %v3730 = vpop.f32.mrb[0].mxu0
      %3731 = vmatprep.mubr.bf16.mxu0 0
      %3732 = vmatmul.mubr.bf16.gmra.mrb[0].mxu0 %v3559
      %v3733 = vpop.f32.mrb[0].mxu0
      %v3734 = vadd.f32 %v3504, %v3733
      %v3735 = vpop.f32.mrb[0].mxu0
      %v3736 = vpop.f32.mrb[0].mxu0
      %v3737 = vadd.f32 %v3504, %v3736
      %v3738 = vpop.f32.mrb[0].mxu0
      %3739 = vmatprep.mubr.bf16.mxu0 0
      %3740 = vmatmul.mubr.bf16.gmra.mrb[0].mxu0 %v3562
      %v3741 = vpop.f32.mrb[0].mxu0
      %v3742 = vadd.f32 %v3504, %v3741
      %v3743 = vpop.f32.mrb[0].mxu0
      %v3744 = vpop.f32.mrb[0].mxu0
      %v3745 = vadd.f32 %v3504, %v3744
      %v3746 = vpop.f32.mrb[0].mxu0
      %3747 = vmatprep.mubr.bf16.mxu0 0
      %3748 = vmatmul.mubr.bf16.gmra.mrb[0].mxu0 %v3565
      %v3749 = vpop.f32.mrb[0].mxu0
      %v3750 = vadd.f32 %v3504, %v3749
      %v3751 = vpop.f32.mrb[0].mxu0
      %v3752 = vpop.f32.mrb[0].mxu0
      %v3753 = vadd.f32 %v3504, %v3752
      %v3754 = vpop.f32.mrb[0].mxu0
      %3755 = vmatprep.mubr.bf16.mxu0 0
      %3756 = vmatmul.mubr.bf16.gmra.mrb[0].mxu0 %v3568
      %v3757 = vpop.f32.mrb[0].mxu0
      %v3758 = vadd.f32 %v3504, %v3757
      %v3759 = vpop.f32.mrb[0].mxu0
      %v3760 = vpop.f32.mrb[0].mxu0
      %v3761 = vadd.f32 %v3504, %v3760
      %v3762 = vpop.f32.mrb[0].mxu0
      %3763 = vmatprep.mubr.bf16.mxu0 0
      %3764 = vmatmul.mubr.bf16.gmra.mrb[0].mxu0 %v3571
      %v3765 = vpop.f32.mrb[0].mxu0
      %v3766 = vadd.f32 %v3504, %v3765
      %v3767 = vpop.f32.mrb[0].mxu0
      %v3768 = vpop.f32.mrb[0].mxu0
      %v3769 = vadd.f32 %v3504, %v3768
      %v3770 = vpop.f32.mrb[0].mxu0
      %3771 = vmatprep.mubr.bf16.mxu0 0
      %3772 = vmatmul.mubr.bf16.gmra.mrb[0].mxu0 %v3574
      %v3773 = vpop.f32.mrb[0].mxu0
      %v3774 = vadd.f32 %v3504, %v3773
      %v3775 = vpop.f32.mrb[0].mxu0
      %v3776 = vpop.f32.mrb[0].mxu0
      %v3777 = vadd.f32 %v3504, %v3776
      %v3778 = vpop.f32.mrb[0].mxu0
      %3779 = vmatprep.mubr.bf16.mxu0 0
      %3780 = vmatmul.mubr.bf16.gmra.mrb[0].mxu0 %v3577
      %v3781 = vpop.f32.mrb[0].mxu0
      %v3782 = vadd.f32 %v3504, %v3781
      %v3783 = vpop.f32.mrb[0].mxu0
      %v3784 = vpop.f32.mrb[0].mxu0
      %v3785 = vadd.f32 %v3504, %v3784
      %v3786 = vpop.f32.mrb[0].mxu0
      %3787 = vmatprep.mubr.bf16.mxu0 0
      %3788 = vmatmul.mubr.bf16.gmra.mrb[0].mxu0 %v3580
      %v3789 = vpop.f32.mrb[0].mxu0
      %v3790 = vadd.f32 %v3504, %v3789
      %v3791 = vpop.f32.mrb[0].mxu0
      %v3792 = vpop.f32.mrb[0].mxu0
      %v3793 = vadd.f32 %v3504, %v3792
      %v3794 = vpop.f32.mrb[0].mxu0
      %3795 = vmatprep.mubr.bf16.mxu0 0
      %3796 = vmatmul.mubr.bf16.gmra.mrb[0].mxu0 %v3583
      %v3797 = vpop.f32.mrb[0].mxu0
      %v3798 = vadd.f32 %v3504, %v3797
      %v3799 = vpop.f32.mrb[0].mxu0
      %v3800 = vpop.f32.mrb[0].mxu0
      %v3801 = vadd.f32 %v3504, %v3800
      %v3802 = vpop.f32.mrb[0].mxu0
      %3803 = vmatprep.mubr.bf16.mxu0 0
      %3804 = vmatmul.mubr.bf16.gmra.mrb[0].mxu0 %v3586
      %v3805 = vpop.f32.mrb[0].mxu0
      %v3806 = vadd.f32 %v3504, %v3805
      %v3807 = vpop.f32.mrb[0].mxu0
      %v3808 = vpop.f32.mrb[0].mxu0
      %v3809 = vadd.f32 %v3504, %v3808
      %v3810 = vpop.f32.mrb[0].mxu0
      %3811 = vmatprep.mubr.bf16.mxu0 0
      %3812 = vmatmul.mubr.bf16.gmra.mrb[0].mxu0 %v3589
      %v3813 = vpop.f32.mrb[0].mxu0
      %v3814 = vadd.f32 %v3504, %v3813
      %v3815 = vpop.f32.mrb[0].mxu0
      %v3816 = vpop.f32.mrb[0].mxu0
      %v3817 = vadd.f32 %v3504, %v3816
      %v3818 = vpop.f32.mrb[0].mxu0
      %3819 = vmatprep.mubr.bf16.mxu0 0
      %3820 = vmatmul.mubr.bf16.gmra.mrb[0].mxu0 %v3592
      %v3821 = vpop.f32.mrb[0].mxu0
      %v3822 = vadd.f32 %v3504, %v3821
      %v3823 = vpop.f32.mrb[0].mxu0
      %v3824 = vpop.f32.mrb[0].mxu0
      %v3825 = vadd.f32 %v3504, %v3824
      %v3826 = vpop.f32.mrb[0].mxu0
      %3827 = vmatprep.mubr.bf16.mxu0 0
      %3828 = vmatmul.mubr.bf16.gmra.mrb[0].mxu0 %v3595
      %v3829 = vpop.f32.mrb[0].mxu0
      %v3830 = vadd.f32 %v3504, %v3829
      %v3831 = vpop.f32.mrb[0].mxu0
      %v3832 = vpop.f32.mrb[0].mxu0
      %v3833 = vadd.f32 %v3504, %v3832
      %v3834 = vpop.f32.mrb[0].mxu0
      %3835 = vmatprep.mubr.bf16.mxu0 0
      %3836 = vmatmul.mubr.bf16.gmra.mrb[0].mxu0 %v3598
      %v3837 = vpop.f32.mrb[0].mxu0
      %v3838 = vadd.f32 %v3504, %v3837
      %v3839 = vpop.f32.mrb[0].mxu0
      %v3840 = vpop.f32.mrb[0].mxu0
      %v3841 = vadd.f32 %v3504, %v3840
      %v3842 = vpop.f32.mrb[0].mxu0
      %3843 = vmatprep.mubr.bf16.mxu0 0
      %3844 = vmatmul.mubr.bf16.gmra.mrb[0].mxu0 %v3601
      %v3845 = vpop.f32.mrb[0].mxu0
      %v3846 = vadd.f32 %v3504, %v3845
      %v3847 = vpop.f32.mrb[0].mxu0
      %v3848 = vpop.f32.mrb[0].mxu0
      %v3849 = vadd.f32 %v3504, %v3848
      %v3850 = vpop.f32.mrb[0].mxu0
      %3851 = vmatprep.mubr.bf16.mxu0 0
      %3852 = vmatmul.mubr.bf16.gmra.mrb[0].mxu0 %v3604
      %v3853 = vpop.f32.mrb[0].mxu0
      %v3854 = vadd.f32 %v3504, %v3853
      %v3855 = vpop.f32.mrb[0].mxu0
      %v3856 = vpop.f32.mrb[0].mxu0
      %v3857 = vadd.f32 %v3504, %v3856
      %v3858 = vpop.f32.mrb[0].mxu0
      %3859 = vmatprep.mubr.bf16.mxu0 0
      %3860 = vmatmul.mubr.bf16.gmra.mrb[0].mxu0 %v3607
      %v3861 = vpop.f32.mrb[0].mxu0
      %v3862 = vadd.f32 %v3504, %v3861
      %v3863 = vpop.f32.mrb[0].mxu0
      %v3864 = vpop.f32.mrb[0].mxu0
      %v3865 = vadd.f32 %v3504, %v3864
      %v3866 = vpop.f32.mrb[0].mxu0
      %3867 = vmatprep.mubr.bf16.mxu0 0
      %3868 = vmatmul.mubr.bf16.gmra.mrb[0].mxu0 %v3610
      %v3869 = vpop.f32.mrb[0].mxu0
      %v3870 = vadd.f32 %v3504, %v3869
      %v3871 = vpop.f32.mrb[0].mxu0
      %v3872 = vpop.f32.mrb[0].mxu0
      %v3873 = vadd.f32 %v3504, %v3872
      %v3874 = vpop.f32.mrb[0].mxu0
      %3875 = vmatprep.mubr.bf16.mxu0 0
      %3876 = vmatmul.mubr.bf16.gmra.mrb[0].mxu0 %v3613
      %v3877 = vpop.f32.mrb[0].mxu0
      %v3878 = vadd.f32 %v3504, %v3877
      %v3879 = vpop.f32.mrb[0].mxu0
      %v3880 = vpop.f32.mrb[0].mxu0
      %v3881 = vadd.f32 %v3504, %v3880
      %v3882 = vpop.f32.mrb[0].mxu0
      %3883 = vmatprep.mubr.bf16.mxu0 0
      %3884 = vmatmul.mubr.bf16.gmra.mrb[0].mxu0 %v3616
      %v3885 = vpop.f32.mrb[0].mxu0
      %v3886 = vadd.f32 %v3504, %v3885
      %v3887 = vpop.f32.mrb[0].mxu0
      %v3888 = vpop.f32.mrb[0].mxu0
      %v3889 = vadd.f32 %v3504, %v3888
      %v3890 = vpop.f32.mrb[0].mxu0
      %3891 = vmatprep.mubr.bf16.mxu0 0
      %3892 = vmatmul.mubr.bf16.gmra.mrb[0].mxu0 %v3619
      %v3893 = vpop.f32.mrb[0].mxu0
      %v3894 = vadd.f32 %v3504, %v3893
      %v3895 = vpop.f32.mrb[0].mxu0
      %v3896 = vpop.f32.mrb[0].mxu0
      %v3897 = vadd.f32 %v3504, %v3896
      %v3898 = vpop.f32.mrb[0].mxu0
      %3899 = vmatprep.mubr.bf16.mxu0 0
      %3900 = vmatmul.mubr.bf16.gmra.mrb[0].mxu0 %v3622
      %v3901 = vpop.f32.mrb[0].mxu0
      %v3902 = vadd.f32 %v3504, %v3901
      %v3903 = vpop.f32.mrb[0].mxu0
      %v3904 = vpop.f32.mrb[0].mxu0
      %v3905 = vadd.f32 %v3504, %v3904
      %v3906 = vpop.f32.mrb[0].mxu0
      %3907 = vmatprep.mubr.bf16.mxu0 0
      %3908 = vmatmul.mubr.bf16.gmra.mrb[0].mxu0 %v3625
      %v3909 = vpop.f32.mrb[0].mxu0
      %v3910 = vadd.f32 %v3504, %v3909
      %v3911 = vpop.f32.mrb[0].mxu0
      %v3912 = vpop.f32.mrb[0].mxu0
      %v3913 = vadd.f32 %v3504, %v3912
      %v3914 = vpop.f32.mrb[0].mxu0
      %3915 = vdwg.mxu0
      %v3916 = vmax.f32 %v3662, 0.0
      %v3917 = vmax.f32 %v3665, 0.0
      %v3918 = vmax.f32 %v3670, 0.0
      %v3919 = vmax.f32 %v3673, 0.0
      %v3920 = vmax.f32 %v3678, 0.0
      %v3921 = vmax.f32 %v3681, 0.0
      %v3922 = vmax.f32 %v3686, 0.0
      %v3923 = vmax.f32 %v3689, 0.0
      %v3924 = vmax.f32 %v3694, 0.0
      %v3925 = vmax.f32 %v3697, 0.0
      %v3926 = vmax.f32 %v3702, 0.0
      %v3927 = vmax.f32 %v3705, 0.0
      %v3928 = vmax.f32 %v3710, 0.0
      %v3929 = vmax.f32 %v3713, 0.0
      %v3930 = vmax.f32 %v3718, 0.0
      %v3931 = vmax.f32 %v3721, 0.0
      %v3932 = vmax.f32 %v3726, 0.0
      %v3933 = vmax.f32 %v3729, 0.0
      %v3934 = vmax.f32 %v3734, 0.0
      %v3935 = vmax.f32 %v3737, 0.0
      %v3936 = vmax.f32 %v3742, 0.0
      %v3937 = vmax.f32 %v3745, 0.0
      %v3938 = vmax.f32 %v3750, 0.0
      %v3939 = vmax.f32 %v3753, 0.0
      %v3940 = vmax.f32 %v3758, 0.0
      %v3941 = vmax.f32 %v3761, 0.0
      %v3942 = vmax.f32 %v3766, 0.0
      %v3943 = vmax.f32 %v3769, 0.0
      %v3944 = vmax.f32 %v3774, 0.0
      %v3945 = vmax.f32 %v3777, 0.0
      %v3946 = vmax.f32 %v3782, 0.0
      %v3947 = vmax.f32 %v3785, 0.0
      %v3948 = vmax.f32 %v3790, 0.0
      %v3949 = vmax.f32 %v3793, 0.0
      %v3950 = vmax.f32 %v3798, 0.0
      %v3951 = vmax.f32 %v3801, 0.0
      %v3952 = vmax.f32 %v3806, 0.0
      %v3953 = vmax.f32 %v3809, 0.0
      %v3954 = vmax.f32 %v3814, 0.0
      %v3955 = vmax.f32 %v3817, 0.0
      %v3956 = vmax.f32 %v3822, 0.0
      %v3957 = vmax.f32 %v3825, 0.0
      %v3958 = vmax.f32 %v3830, 0.0
      %v3959 = vmax.f32 %v3833, 0.0
      %v3960 = vmax.f32 %v3838, 0.0
      %v3961 = vmax.f32 %v3841, 0.0
      %v3962 = vmax.f32 %v3846, 0.0
      %v3963 = vmax.f32 %v3849, 0.0
      %v3964 = vmax.f32 %v3854, 0.0
      %v3965 = vmax.f32 %v3857, 0.0
      %v3966 = vmax.f32 %v3862, 0.0
      %v3967 = vmax.f32 %v3865, 0.0
      %v3968 = vmax.f32 %v3870, 0.0
      %v3969 = vmax.f32 %v3873, 0.0
      %v3970 = vmax.f32 %v3878, 0.0
      %v3971 = vmax.f32 %v3881, 0.0
      %v3972 = vmax.f32 %v3886, 0.0
      %v3973 = vmax.f32 %v3889, 0.0
      %v3974 = vmax.f32 %v3894, 0.0
      %v3975 = vmax.f32 %v3897, 0.0
      %v3976 = vmax.f32 %v3902, 0.0
      %v3977 = vmax.f32 %v3905, 0.0
      %v3978 = vmax.f32 %v3910, 0.0
      %v3979 = vmax.f32 %v3913, 0.0
      %v3980 = vld [vmem:[%s13] sm:$0xff]
      %v3981 = vld [vmem:[%s13 + $0x8] sm:$0xff]
      %v3982 = vld [vmem:[%s13 + $0x10] sm:$0xff]
      %v3983 = vld [vmem:[%s13 + $0x18] sm:$0xff]
      %v3984 = vld [vmem:[%s14] sm:$0x1]
      %v3986 = vlaneseq
      %v3987 = vshrl.u32 %v3986, 7
      %v3988 = vsub.s32 0, %v3987
      %v3989 = vrot.slane %v3984, %v3988
      %v3992 = vsel %vm873, %v3916, 0
      %v3995 = vsel %vm873, %v3917, 0
      %v3998 = vsel %vm873, %v3918, 0
      %v4001 = vsel %vm873, %v3919, 0
      %v4004 = vsel %vm873, %v3920, 0
      %v4007 = vsel %vm873, %v3921, 0
      %v4010 = vsel %vm873, %v3922, 0
      %v4013 = vsel %vm873, %v3923, 0
      %v4016 = vsel %vm873, %v3924, 0
      %v4019 = vsel %vm873, %v3925, 0
      %v4022 = vsel %vm873, %v3926, 0
      %v4025 = vsel %vm873, %v3927, 0
      %v4028 = vsel %vm873, %v3928, 0
      %v4031 = vsel %vm873, %v3929, 0
      %v4034 = vsel %vm873, %v3930, 0
      %v4037 = vsel %vm873, %v3931, 0
      %v4040 = vsel %vm873, %v3932, 0
      %v4043 = vsel %vm873, %v3933, 0
      %v4046 = vsel %vm873, %v3934, 0
      %v4049 = vsel %vm873, %v3935, 0
      %v4052 = vsel %vm873, %v3936, 0
      %v4055 = vsel %vm873, %v3937, 0
      %v4058 = vsel %vm873, %v3938, 0
      %v4061 = vsel %vm873, %v3939, 0
      %v4064 = vsel %vm873, %v3940, 0
      %v4067 = vsel %vm873, %v3941, 0
      %v4070 = vsel %vm873, %v3942, 0
      %v4073 = vsel %vm873, %v3943, 0
      %v4076 = vsel %vm873, %v3944, 0
      %v4079 = vsel %vm873, %v3945, 0
      %v4082 = vsel %vm873, %v3946, 0
      %v4085 = vsel %vm873, %v3947, 0
      %v4088 = vsel %vm873, %v3948, 0
      %v4091 = vsel %vm873, %v3949, 0
      %v4094 = vsel %vm873, %v3950, 0
      %v4097 = vsel %vm873, %v3951, 0
      %v4100 = vsel %vm873, %v3952, 0
      %v4103 = vsel %vm873, %v3953, 0
      %v4106 = vsel %vm873, %v3954, 0
      %v4109 = vsel %vm873, %v3955, 0
      %v4112 = vsel %vm873, %v3956, 0
      %v4115 = vsel %vm873, %v3957, 0
      %v4118 = vsel %vm873, %v3958, 0
      %v4121 = vsel %vm873, %v3959, 0
      %v4124 = vsel %vm873, %v3960, 0
      %v4127 = vsel %vm873, %v3961, 0
      %v4130 = vsel %vm873, %v3962, 0
      %v4133 = vsel %vm873, %v3963, 0
      %v4136 = vsel %vm873, %v3964, 0
      %v4139 = vsel %vm873, %v3965, 0
      %v4142 = vsel %vm873, %v3966, 0
      %v4145 = vsel %vm873, %v3967, 0
      %v4148 = vsel %vm873, %v3968, 0
      %v4151 = vsel %vm873, %v3969, 0
      %v4154 = vsel %vm873, %v3970, 0
      %v4157 = vsel %vm873, %v3971, 0
      %v4160 = vsel %vm873, %v3972, 0
      %v4163 = vsel %vm873, %v3973, 0
      %v4166 = vsel %vm873, %v3974, 0
      %v4169 = vsel %vm873, %v3975, 0
      %v4172 = vsel %vm873, %v3976, 0
      %v4175 = vsel %vm873, %v3977, 0
      %v4178 = vsel %vm873, %v3978, 0
      %v4181 = vsel %vm873, %v3979, 0
      %4183 = vmatprep.subr.mxu0 0.0
      %4184 = vmatpush1.msra.mxu0 %v3980
      %4185 = vmatprep.subr.mxu0 0.0
      %4186 = vmatpush1.msra.mxu0 %v3981
      %4187 = vmatprep.subr.mxu0 0.0
      %4188 = vmatpush1.msra.mxu0 %v3982
      %4189 = vmatprep.subr.mxu0 0.0
      %4190 = vmatpush1.msra.mxu0 %v3983
      %4191 = vmatprep.subr.mxu0 0.0
      %4192 = vmatpush1.msra.mxu0 0.0
      %4193 = vmatprep.subr.mxu0 0.0
      %4194 = vmatpush1.msra.mxu0 0.0
      %4195 = vmatprep.subr.mxu0 0.0
      %4196 = vmatpush1.msra.mxu0 0.0
      %4197 = vmatprep.subr.mxu0 0.0
      %4198 = vmatpush1.msra.mxu0 0.0
      %4199 = vmatprep.subr.mxu0 0.0
      %4200 = vmatpush1.msra.mxu0 0.0
      %4201 = vmatprep.subr.mxu0 0.0
      %4202 = vmatpush1.msra.mxu0 0.0
      %4203 = vmatprep.subr.mxu0 0.0
      %4204 = vmatpush1.msra.mxu0 0.0
      %4205 = vmatprep.subr.mxu0 0.0
      %4206 = vmatpush1.msra.mxu0 0.0
      %4207 = vmatprep.subr.mxu0 0.0
      %4208 = vmatpush1.msra.mxu0 0.0
      %4209 = vmatprep.subr.mxu0 0.0
      %4210 = vmatpush1.msra.mxu0 0.0
      %4211 = vmatprep.subr.mxu0 0.0
      %4212 = vmatpush1.msra.mxu0 0.0
      %4213 = vmatprep.subr.mxu0 0.0
      %4214 = vmatpush1.msra.mxu0 0.0
      %4215 = vmatprep.subr.mxu0 0.0
      %4216 = vmatpush1.msra.mxu0 0.0
      %4217 = vmatprep.subr.mxu0 0.0
      %4218 = vmatpush1.msra.mxu0 0.0
      %4219 = vmatprep.subr.mxu0 0.0
      %4220 = vmatpush1.msra.mxu0 0.0
      %4221 = vmatprep.subr.mxu0 0.0
      %4222 = vmatpush1.msra.mxu0 0.0
      %4223 = vmatprep.subr.mxu0 0.0
      %4224 = vmatpush1.msra.mxu0 0.0
      %4225 = vmatprep.subr.mxu0 0.0
      %4226 = vmatpush1.msra.mxu0 0.0
      %4227 = vmatprep.subr.mxu0 0.0
      %4228 = vmatpush1.msra.mxu0 0.0
      %4229 = vmatprep.subr.mxu0 0.0
      %4230 = vmatpush1.msra.mxu0 0.0
      %4231 = vmatprep.subr.mxu0 0.0
      %4232 = vmatpush1.msra.mxu0 0.0
      %4233 = vmatprep.subr.mxu0 0.0
      %4234 = vmatpush1.msra.mxu0 0.0
      %4235 = vmatprep.subr.mxu0 0.0
      %4236 = vmatpush1.msra.mxu0 0.0
      %4237 = vmatprep.subr.mxu0 0.0
      %4238 = vmatpush1.msra.mxu0 0.0
      %4239 = vmatprep.subr.mxu0 0.0
      %4240 = vmatpush1.msra.mxu0 0.0
      %4241 = vmatprep.subr.mxu0 0.0
      %4242 = vmatpush1.msra.mxu0 0.0
      %4243 = vmatprep.subr.mxu0 0.0
      %4244 = vmatpush1.msra.mxu0 0.0
      %4245 = vmatprep.subr.mxu0 0.0
      %4246 = vmatpush1.msra.mxu0 0.0
      %4247 = vmatprep.mubr.f32.mxu0 0.0
      %4248 = vmatmul.mubr.f32.gmra.mrb[0].mxu0 %v3992
      %v4249 = vpop.f32.mrb[0].mxu0
      %v4250 = vadd.f32 %v3989, %v4249
      %v4251 = vpop.f32.mrb[0].mxu0
      %4252 = vmatprep.mubr.f32.mxu0 0.0
      %4253 = vmatmul.mubr.f32.gmra.mrb[0].mxu0 %v3995
      %v4254 = vpop.f32.mrb[0].mxu0
      %v4255 = vadd.f32 %v3989, %v4254
      %v4256 = vpop.f32.mrb[0].mxu0
      %4257 = vmatprep.mubr.f32.mxu0 0.0
      %4258 = vmatmul.mubr.f32.gmra.mrb[0].mxu0 %v3998
      %v4259 = vpop.f32.mrb[0].mxu0
      %v4260 = vadd.f32 %v3989, %v4259
      %v4261 = vpop.f32.mrb[0].mxu0
      %4262 = vmatprep.mubr.f32.mxu0 0.0
      %4263 = vmatmul.mubr.f32.gmra.mrb[0].mxu0 %v4001
      %v4264 = vpop.f32.mrb[0].mxu0
      %v4265 = vadd.f32 %v3989, %v4264
      %v4266 = vpop.f32.mrb[0].mxu0
      %4267 = vmatprep.mubr.f32.mxu0 0.0
      %4268 = vmatmul.mubr.f32.gmra.mrb[0].mxu0 %v4004
      %v4269 = vpop.f32.mrb[0].mxu0
      %v4270 = vadd.f32 %v3989, %v4269
      %v4271 = vpop.f32.mrb[0].mxu0
      %4272 = vmatprep.mubr.f32.mxu0 0.0
      %4273 = vmatmul.mubr.f32.gmra.mrb[0].mxu0 %v4007
      %v4274 = vpop.f32.mrb[0].mxu0
      %v4275 = vadd.f32 %v3989, %v4274
      %v4276 = vpop.f32.mrb[0].mxu0
      %4277 = vmatprep.mubr.f32.mxu0 0.0
      %4278 = vmatmul.mubr.f32.gmra.mrb[0].mxu0 %v4010
      %v4279 = vpop.f32.mrb[0].mxu0
      %v4280 = vadd.f32 %v3989, %v4279
      %v4281 = vpop.f32.mrb[0].mxu0
      %4282 = vmatprep.mubr.f32.mxu0 0.0
      %4283 = vmatmul.mubr.f32.gmra.mrb[0].mxu0 %v4013
      %v4284 = vpop.f32.mrb[0].mxu0
      %v4285 = vadd.f32 %v3989, %v4284
      %v4286 = vpop.f32.mrb[0].mxu0
      %4287 = vmatprep.mubr.f32.mxu0 0.0
      %4288 = vmatmul.mubr.f32.gmra.mrb[0].mxu0 %v4016
      %v4289 = vpop.f32.mrb[0].mxu0
      %v4290 = vadd.f32 %v3989, %v4289
      %v4291 = vpop.f32.mrb[0].mxu0
      %4292 = vmatprep.mubr.f32.mxu0 0.0
      %4293 = vmatmul.mubr.f32.gmra.mrb[0].mxu0 %v4019
      %v4294 = vpop.f32.mrb[0].mxu0
      %v4295 = vadd.f32 %v3989, %v4294
      %v4296 = vpop.f32.mrb[0].mxu0
      %4297 = vmatprep.mubr.f32.mxu0 0.0
      %4298 = vmatmul.mubr.f32.gmra.mrb[0].mxu0 %v4022
      %v4299 = vpop.f32.mrb[0].mxu0
      %v4300 = vadd.f32 %v3989, %v4299
      %v4301 = vpop.f32.mrb[0].mxu0
      %4302 = vmatprep.mubr.f32.mxu0 0.0
      %4303 = vmatmul.mubr.f32.gmra.mrb[0].mxu0 %v4025
      %v4304 = vpop.f32.mrb[0].mxu0
      %v4305 = vadd.f32 %v3989, %v4304
      %v4306 = vpop.f32.mrb[0].mxu0
      %4307 = vmatprep.mubr.f32.mxu0 0.0
      %4308 = vmatmul.mubr.f32.gmra.mrb[0].mxu0 %v4028
      %v4309 = vpop.f32.mrb[0].mxu0
      %v4310 = vadd.f32 %v3989, %v4309
      %v4311 = vpop.f32.mrb[0].mxu0
      %4312 = vmatprep.mubr.f32.mxu0 0.0
      %4313 = vmatmul.mubr.f32.gmra.mrb[0].mxu0 %v4031
      %v4314 = vpop.f32.mrb[0].mxu0
      %v4315 = vadd.f32 %v3989, %v4314
      %v4316 = vpop.f32.mrb[0].mxu0
      %4317 = vmatprep.mubr.f32.mxu0 0.0
      %4318 = vmatmul.mubr.f32.gmra.mrb[0].mxu0 %v4034
      %v4319 = vpop.f32.mrb[0].mxu0
      %v4320 = vadd.f32 %v3989, %v4319
      %v4321 = vpop.f32.mrb[0].mxu0
      %4322 = vmatprep.mubr.f32.mxu0 0.0
      %4323 = vmatmul.mubr.f32.gmra.mrb[0].mxu0 %v4037
      %v4324 = vpop.f32.mrb[0].mxu0
      %v4325 = vadd.f32 %v3989, %v4324
      %v4326 = vpop.f32.mrb[0].mxu0
      %4327 = vmatprep.mubr.f32.mxu0 0.0
      %4328 = vmatmul.mubr.f32.gmra.mrb[0].mxu0 %v4040
      %v4329 = vpop.f32.mrb[0].mxu0
      %v4330 = vadd.f32 %v3989, %v4329
      %v4331 = vpop.f32.mrb[0].mxu0
      %4332 = vmatprep.mubr.f32.mxu0 0.0
      %4333 = vmatmul.mubr.f32.gmra.mrb[0].mxu0 %v4043
      %v4334 = vpop.f32.mrb[0].mxu0
      %v4335 = vadd.f32 %v3989, %v4334
      %v4336 = vpop.f32.mrb[0].mxu0
      %4337 = vmatprep.mubr.f32.mxu0 0.0
      %4338 = vmatmul.mubr.f32.gmra.mrb[0].mxu0 %v4046
      %v4339 = vpop.f32.mrb[0].mxu0
      %v4340 = vadd.f32 %v3989, %v4339
      %v4341 = vpop.f32.mrb[0].mxu0
      %4342 = vmatprep.mubr.f32.mxu0 0.0
      %4343 = vmatmul.mubr.f32.gmra.mrb[0].mxu0 %v4049
      %v4344 = vpop.f32.mrb[0].mxu0
      %v4345 = vadd.f32 %v3989, %v4344
      %v4346 = vpop.f32.mrb[0].mxu0
      %4347 = vmatprep.mubr.f32.mxu0 0.0
      %4348 = vmatmul.mubr.f32.gmra.mrb[0].mxu0 %v4052
      %v4349 = vpop.f32.mrb[0].mxu0
      %v4350 = vadd.f32 %v3989, %v4349
      %v4351 = vpop.f32.mrb[0].mxu0
      %4352 = vmatprep.mubr.f32.mxu0 0.0
      %4353 = vmatmul.mubr.f32.gmra.mrb[0].mxu0 %v4055
      %v4354 = vpop.f32.mrb[0].mxu0
      %v4355 = vadd.f32 %v3989, %v4354
      %v4356 = vpop.f32.mrb[0].mxu0
      %4357 = vmatprep.mubr.f32.mxu0 0.0
      %4358 = vmatmul.mubr.f32.gmra.mrb[0].mxu0 %v4058
      %v4359 = vpop.f32.mrb[0].mxu0
      %v4360 = vadd.f32 %v3989, %v4359
      %v4361 = vpop.f32.mrb[0].mxu0
      %4362 = vmatprep.mubr.f32.mxu0 0.0
      %4363 = vmatmul.mubr.f32.gmra.mrb[0].mxu0 %v4061
      %v4364 = vpop.f32.mrb[0].mxu0
      %v4365 = vadd.f32 %v3989, %v4364
      %v4366 = vpop.f32.mrb[0].mxu0
      %4367 = vmatprep.mubr.f32.mxu0 0.0
      %4368 = vmatmul.mubr.f32.gmra.mrb[0].mxu0 %v4064
      %v4369 = vpop.f32.mrb[0].mxu0
      %v4370 = vadd.f32 %v3989, %v4369
      %v4371 = vpop.f32.mrb[0].mxu0
      %4372 = vmatprep.mubr.f32.mxu0 0.0
      %4373 = vmatmul.mubr.f32.gmra.mrb[0].mxu0 %v4067
      %v4374 = vpop.f32.mrb[0].mxu0
      %v4375 = vadd.f32 %v3989, %v4374
      %v4376 = vpop.f32.mrb[0].mxu0
      %4377 = vmatprep.mubr.f32.mxu0 0.0
      %4378 = vmatmul.mubr.f32.gmra.mrb[0].mxu0 %v4070
      %v4379 = vpop.f32.mrb[0].mxu0
      %v4380 = vadd.f32 %v3989, %v4379
      %v4381 = vpop.f32.mrb[0].mxu0
      %4382 = vmatprep.mubr.f32.mxu0 0.0
      %4383 = vmatmul.mubr.f32.gmra.mrb[0].mxu0 %v4073
      %v4384 = vpop.f32.mrb[0].mxu0
      %v4385 = vadd.f32 %v3989, %v4384
      %v4386 = vpop.f32.mrb[0].mxu0
      %4387 = vmatprep.mubr.f32.mxu0 0.0
      %4388 = vmatmul.mubr.f32.gmra.mrb[0].mxu0 %v4076
      %v4389 = vpop.f32.mrb[0].mxu0
      %v4390 = vadd.f32 %v3989, %v4389
      %v4391 = vpop.f32.mrb[0].mxu0
      %4392 = vmatprep.mubr.f32.mxu0 0.0
      %4393 = vmatmul.mubr.f32.gmra.mrb[0].mxu0 %v4079
      %v4394 = vpop.f32.mrb[0].mxu0
      %v4395 = vadd.f32 %v3989, %v4394
      %v4396 = vpop.f32.mrb[0].mxu0
      %4397 = vmatprep.mubr.f32.mxu0 0.0
      %4398 = vmatmul.mubr.f32.gmra.mrb[0].mxu0 %v4082
      %v4399 = vpop.f32.mrb[0].mxu0
      %v4400 = vadd.f32 %v3989, %v4399
      %v4401 = vpop.f32.mrb[0].mxu0
      %4402 = vmatprep.mubr.f32.mxu0 0.0
      %4403 = vmatmul.mubr.f32.gmra.mrb[0].mxu0 %v4085
      %v4404 = vpop.f32.mrb[0].mxu0
      %v4405 = vadd.f32 %v3989, %v4404
      %v4406 = vpop.f32.mrb[0].mxu0
      %4407 = vmatprep.mubr.f32.mxu0 0.0
      %4408 = vmatmul.mubr.f32.gmra.mrb[0].mxu0 %v4088
      %v4409 = vpop.f32.mrb[0].mxu0
      %v4410 = vadd.f32 %v3989, %v4409
      %v4411 = vpop.f32.mrb[0].mxu0
      %4412 = vmatprep.mubr.f32.mxu0 0.0
      %4413 = vmatmul.mubr.f32.gmra.mrb[0].mxu0 %v4091
      %v4414 = vpop.f32.mrb[0].mxu0
      %v4415 = vadd.f32 %v3989, %v4414
      %v4416 = vpop.f32.mrb[0].mxu0
      %4417 = vmatprep.mubr.f32.mxu0 0.0
      %4418 = vmatmul.mubr.f32.gmra.mrb[0].mxu0 %v4094
      %v4419 = vpop.f32.mrb[0].mxu0
      %v4420 = vadd.f32 %v3989, %v4419
      %v4421 = vpop.f32.mrb[0].mxu0
      %4422 = vmatprep.mubr.f32.mxu0 0.0
      %4423 = vmatmul.mubr.f32.gmra.mrb[0].mxu0 %v4097
      %v4424 = vpop.f32.mrb[0].mxu0
      %v4425 = vadd.f32 %v3989, %v4424
      %v4426 = vpop.f32.mrb[0].mxu0
      %4427 = vmatprep.mubr.f32.mxu0 0.0
      %4428 = vmatmul.mubr.f32.gmra.mrb[0].mxu0 %v4100
      %v4429 = vpop.f32.mrb[0].mxu0
      %v4430 = vadd.f32 %v3989, %v4429
      %v4431 = vpop.f32.mrb[0].mxu0
      %4432 = vmatprep.mubr.f32.mxu0 0.0
      %4433 = vmatmul.mubr.f32.gmra.mrb[0].mxu0 %v4103
      %v4434 = vpop.f32.mrb[0].mxu0
      %v4435 = vadd.f32 %v3989, %v4434
      %v4436 = vpop.f32.mrb[0].mxu0
      %4437 = vmatprep.mubr.f32.mxu0 0.0
      %4438 = vmatmul.mubr.f32.gmra.mrb[0].mxu0 %v4106
      %v4439 = vpop.f32.mrb[0].mxu0
      %v4440 = vadd.f32 %v3989, %v4439
      %v4441 = vpop.f32.mrb[0].mxu0
      %4442 = vmatprep.mubr.f32.mxu0 0.0
      %4443 = vmatmul.mubr.f32.gmra.mrb[0].mxu0 %v4109
      %v4444 = vpop.f32.mrb[0].mxu0
      %v4445 = vadd.f32 %v3989, %v4444
      %v4446 = vpop.f32.mrb[0].mxu0
      %4447 = vmatprep.mubr.f32.mxu0 0.0
      %4448 = vmatmul.mubr.f32.gmra.mrb[0].mxu0 %v4112
      %v4449 = vpop.f32.mrb[0].mxu0
      %v4450 = vadd.f32 %v3989, %v4449
      %v4451 = vpop.f32.mrb[0].mxu0
      %4452 = vmatprep.mubr.f32.mxu0 0.0
      %4453 = vmatmul.mubr.f32.gmra.mrb[0].mxu0 %v4115
      %v4454 = vpop.f32.mrb[0].mxu0
      %v4455 = vadd.f32 %v3989, %v4454
      %v4456 = vpop.f32.mrb[0].mxu0
      %4457 = vmatprep.mubr.f32.mxu0 0.0
      %4458 = vmatmul.mubr.f32.gmra.mrb[0].mxu0 %v4118
      %v4459 = vpop.f32.mrb[0].mxu0
      %v4460 = vadd.f32 %v3989, %v4459
      %v4461 = vpop.f32.mrb[0].mxu0
      %4462 = vmatprep.mubr.f32.mxu0 0.0
      %4463 = vmatmul.mubr.f32.gmra.mrb[0].mxu0 %v4121
      %v4464 = vpop.f32.mrb[0].mxu0
      %v4465 = vadd.f32 %v3989, %v4464
      %v4466 = vpop.f32.mrb[0].mxu0
      %4467 = vmatprep.mubr.f32.mxu0 0.0
      %4468 = vmatmul.mubr.f32.gmra.mrb[0].mxu0 %v4124
      %v4469 = vpop.f32.mrb[0].mxu0
      %v4470 = vadd.f32 %v3989, %v4469
      %v4471 = vpop.f32.mrb[0].mxu0
      %4472 = vmatprep.mubr.f32.mxu0 0.0
      %4473 = vmatmul.mubr.f32.gmra.mrb[0].mxu0 %v4127
      %v4474 = vpop.f32.mrb[0].mxu0
      %v4475 = vadd.f32 %v3989, %v4474
      %v4476 = vpop.f32.mrb[0].mxu0
      %4477 = vmatprep.mubr.f32.mxu0 0.0
      %4478 = vmatmul.mubr.f32.gmra.mrb[0].mxu0 %v4130
      %v4479 = vpop.f32.mrb[0].mxu0
      %v4480 = vadd.f32 %v3989, %v4479
      %v4481 = vpop.f32.mrb[0].mxu0
      %4482 = vmatprep.mubr.f32.mxu0 0.0
      %4483 = vmatmul.mubr.f32.gmra.mrb[0].mxu0 %v4133
      %v4484 = vpop.f32.mrb[0].mxu0
      %v4485 = vadd.f32 %v3989, %v4484
      %v4486 = vpop.f32.mrb[0].mxu0
      %4487 = vmatprep.mubr.f32.mxu0 0.0
      %4488 = vmatmul.mubr.f32.gmra.mrb[0].mxu0 %v4136
      %v4489 = vpop.f32.mrb[0].mxu0
      %v4490 = vadd.f32 %v3989, %v4489
      %v4491 = vpop.f32.mrb[0].mxu0
      %4492 = vmatprep.mubr.f32.mxu0 0.0
      %4493 = vmatmul.mubr.f32.gmra.mrb[0].mxu0 %v4139
      %v4494 = vpop.f32.mrb[0].mxu0
      %v4495 = vadd.f32 %v3989, %v4494
      %v4496 = vpop.f32.mrb[0].mxu0
      %4497 = vmatprep.mubr.f32.mxu0 0.0
      %4498 = vmatmul.mubr.f32.gmra.mrb[0].mxu0 %v4142
      %v4499 = vpop.f32.mrb[0].mxu0
      %v4500 = vadd.f32 %v3989, %v4499
      %v4501 = vpop.f32.mrb[0].mxu0
      %4502 = vmatprep.mubr.f32.mxu0 0.0
      %4503 = vmatmul.mubr.f32.gmra.mrb[0].mxu0 %v4145
      %v4504 = vpop.f32.mrb[0].mxu0
      %v4505 = vadd.f32 %v3989, %v4504
      %v4506 = vpop.f32.mrb[0].mxu0
      %4507 = vmatprep.mubr.f32.mxu0 0.0
      %4508 = vmatmul.mubr.f32.gmra.mrb[0].mxu0 %v4148
      %v4509 = vpop.f32.mrb[0].mxu0
      %v4510 = vadd.f32 %v3989, %v4509
      %v4511 = vpop.f32.mrb[0].mxu0
      %4512 = vmatprep.mubr.f32.mxu0 0.0
      %4513 = vmatmul.mubr.f32.gmra.mrb[0].mxu0 %v4151
      %v4514 = vpop.f32.mrb[0].mxu0
      %v4515 = vadd.f32 %v3989, %v4514
      %v4516 = vpop.f32.mrb[0].mxu0
      %4517 = vmatprep.mubr.f32.mxu0 0.0
      %4518 = vmatmul.mubr.f32.gmra.mrb[0].mxu0 %v4154
      %v4519 = vpop.f32.mrb[0].mxu0
      %v4520 = vadd.f32 %v3989, %v4519
      %v4521 = vpop.f32.mrb[0].mxu0
      %4522 = vmatprep.mubr.f32.mxu0 0.0
      %4523 = vmatmul.mubr.f32.gmra.mrb[0].mxu0 %v4157
      %v4524 = vpop.f32.mrb[0].mxu0
      %v4525 = vadd.f32 %v3989, %v4524
      %v4526 = vpop.f32.mrb[0].mxu0
      %4527 = vmatprep.mubr.f32.mxu0 0.0
      %4528 = vmatmul.mubr.f32.gmra.mrb[0].mxu0 %v4160
      %v4529 = vpop.f32.mrb[0].mxu0
      %v4530 = vadd.f32 %v3989, %v4529
      %v4531 = vpop.f32.mrb[0].mxu0
      %4532 = vmatprep.mubr.f32.mxu0 0.0
      %4533 = vmatmul.mubr.f32.gmra.mrb[0].mxu0 %v4163
      %v4534 = vpop.f32.mrb[0].mxu0
      %v4535 = vadd.f32 %v3989, %v4534
      %v4536 = vpop.f32.mrb[0].mxu0
      %4537 = vmatprep.mubr.f32.mxu0 0.0
      %4538 = vmatmul.mubr.f32.gmra.mrb[0].mxu0 %v4166
      %v4539 = vpop.f32.mrb[0].mxu0
      %v4540 = vadd.f32 %v3989, %v4539
      %v4541 = vpop.f32.mrb[0].mxu0
      %4542 = vmatprep.mubr.f32.mxu0 0.0
      %4543 = vmatmul.mubr.f32.gmra.mrb[0].mxu0 %v4169
      %v4544 = vpop.f32.mrb[0].mxu0
      %v4545 = vadd.f32 %v3989, %v4544
      %v4546 = vpop.f32.mrb[0].mxu0
      %4547 = vmatprep.mubr.f32.mxu0 0.0
      %4548 = vmatmul.mubr.f32.gmra.mrb[0].mxu0 %v4172
      %v4549 = vpop.f32.mrb[0].mxu0
      %v4550 = vadd.f32 %v3989, %v4549
      %v4551 = vpop.f32.mrb[0].mxu0
      %4552 = vmatprep.mubr.f32.mxu0 0.0
      %4553 = vmatmul.mubr.f32.gmra.mrb[0].mxu0 %v4175
      %v4554 = vpop.f32.mrb[0].mxu0
      %v4555 = vadd.f32 %v3989, %v4554
      %v4556 = vpop.f32.mrb[0].mxu0
      %4557 = vmatprep.mubr.f32.mxu0 0.0
      %4558 = vmatmul.mubr.f32.gmra.mrb[0].mxu0 %v4178
      %v4559 = vpop.f32.mrb[0].mxu0
      %v4560 = vadd.f32 %v3989, %v4559
      %v4561 = vpop.f32.mrb[0].mxu0
      %4562 = vmatprep.mubr.f32.mxu0 0.0
      %4563 = vmatmul.mubr.f32.gmra.mrb[0].mxu0 %v4181
      %v4564 = vpop.f32.mrb[0].mxu0
      %v4565 = vadd.f32 %v3989, %v4564
      %v4566 = vpop.f32.mrb[0].mxu0
      %4567 = vdwg.mxu0
      %4568 = vst [vmem:[%s562] sm:$0xff] %v4250
      %4569 = vst [vmem:[%s562 + $0x8] sm:$0xff] %v4255
      %4570 = vst [vmem:[%s562 + $0x10] sm:$0xff] %v4260
      %4571 = vst [vmem:[%s562 + $0x18] sm:$0xff] %v4265
      %4572 = vst [vmem:[%s562 + $0x20] sm:$0xff] %v4270
      %4573 = vst [vmem:[%s562 + $0x28] sm:$0xff] %v4275
      %4574 = vst [vmem:[%s562 + $0x30] sm:$0xff] %v4280
      %4575 = vst [vmem:[%s562 + $0x38] sm:$0xff] %v4285
      %4576 = vst [vmem:[%s562 + $0x40] sm:$0xff] %v4290
      %4577 = vst [vmem:[%s562 + $0x48] sm:$0xff] %v4295
      %4578 = vst [vmem:[%s562 + $0x50] sm:$0xff] %v4300
      %4579 = vst [vmem:[%s562 + $0x58] sm:$0xff] %v4305
      %4580 = vst [vmem:[%s562 + $0x60] sm:$0xff] %v4310
      %4581 = vst [vmem:[%s562 + $0x68] sm:$0xff] %v4315
      %4582 = vst [vmem:[%s562 + $0x70] sm:$0xff] %v4320
      %4583 = vst [vmem:[%s562 + $0x78] sm:$0xff] %v4325
      %4584 = vst [vmem:[%s562 + $0x80] sm:$0xff] %v4330
      %4585 = vst [vmem:[%s562 + $0x88] sm:$0xff] %v4335
      %4586 = vst [vmem:[%s562 + $0x90] sm:$0xff] %v4340
      %4587 = vst [vmem:[%s562 + $0x98] sm:$0xff] %v4345
      %4588 = vst [vmem:[%s562 + $0xa0] sm:$0xff] %v4350
      %4589 = vst [vmem:[%s562 + $0xa8] sm:$0xff] %v4355
      %4590 = vst [vmem:[%s562 + $0xb0] sm:$0xff] %v4360
      %4591 = vst [vmem:[%s562 + $0xb8] sm:$0xff] %v4365
      %4592 = vst [vmem:[%s562 + $0xc0] sm:$0xff] %v4370
      %4593 = vst [vmem:[%s562 + $0xc8] sm:$0xff] %v4375
      %4594 = vst [vmem:[%s562 + $0xd0] sm:$0xff] %v4380
      %4595 = vst [vmem:[%s562 + $0xd8] sm:$0xff] %v4385
      %4596 = vst [vmem:[%s562 + $0xe0] sm:$0xff] %v4390
      %4597 = vst [vmem:[%s562 + $0xe8] sm:$0xff] %v4395
      %4598 = vst [vmem:[%s562 + $0xf0] sm:$0xff] %v4400
      %4599 = vst [vmem:[%s562 + $0xf8] sm:$0xff] %v4405
      %4600 = vst [vmem:[%s562 + $0x100] sm:$0xff] %v4410
      %4601 = vst [vmem:[%s562 + $0x108] sm:$0xff] %v4415
      %4602 = vst [vmem:[%s562 + $0x110] sm:$0xff] %v4420
      %4603 = vst [vmem:[%s562 + $0x118] sm:$0xff] %v4425
      %4604 = vst [vmem:[%s562 + $0x120] sm:$0xff] %v4430
      %4605 = vst [vmem:[%s562 + $0x128] sm:$0xff] %v4435
      %4606 = vst [vmem:[%s562 + $0x130] sm:$0xff] %v4440
      %4607 = vst [vmem:[%s562 + $0x138] sm:$0xff] %v4445
      %4608 = vst [vmem:[%s562 + $0x140] sm:$0xff] %v4450
      %4609 = vst [vmem:[%s562 + $0x148] sm:$0xff] %v4455
      %4610 = vst [vmem:[%s562 + $0x150] sm:$0xff] %v4460
      %4611 = vst [vmem:[%s562 + $0x158] sm:$0xff] %v4465
      %4612 = vst [vmem:[%s562 + $0x160] sm:$0xff] %v4470
      %4613 = vst [vmem:[%s562 + $0x168] sm:$0xff] %v4475
      %4614 = vst [vmem:[%s562 + $0x170] sm:$0xff] %v4480
      %4615 = vst [vmem:[%s562 + $0x178] sm:$0xff] %v4485
      %4616 = vst [vmem:[%s562 + $0x180] sm:$0xff] %v4490
      %4617 = vst [vmem:[%s562 + $0x188] sm:$0xff] %v4495
      %4618 = vst [vmem:[%s562 + $0x190] sm:$0xff] %v4500
      %4619 = vst [vmem:[%s562 + $0x198] sm:$0xff] %v4505
      %4620 = vst [vmem:[%s562 + $0x1a0] sm:$0xff] %v4510
      %4621 = vst [vmem:[%s562 + $0x1a8] sm:$0xff] %v4515
      %4622 = vst [vmem:[%s562 + $0x1b0] sm:$0xff] %v4520
      %4623 = vst [vmem:[%s562 + $0x1b8] sm:$0xff] %v4525
      %4624 = vst [vmem:[%s562 + $0x1c0] sm:$0xff] %v4530
      %4625 = vst [vmem:[%s562 + $0x1c8] sm:$0xff] %v4535
      %4626 = vst [vmem:[%s562 + $0x1d0] sm:$0xff] %v4540
      %4627 = vst [vmem:[%s562 + $0x1d8] sm:$0xff] %v4545
      %4628 = vst [vmem:[%s562 + $0x1e0] sm:$0xff] %v4550
      %4629 = vst [vmem:[%s562 + $0x1e8] sm:$0xff] %v4555
      %4630 = vst [vmem:[%s562 + $0x1f0] sm:$0xff] %v4560
      %4631 = vst [vmem:[%s562 + $0x1f8] sm:$0xff] %v4565
      %s4632 = smul.u32 64, %s26
      %p4633 = scmp.lt.s32.totalorder %s4632, 127
      %s4634 = scalar_select %p4633, %s4632, 127
      %s4635 = smul.addr %s4634, 8
      %s4636 = scalar_lea.vmem %s15, %s4635
      // Predicated region
      $region81: #{neural_cf_forward.1} parent=79 // pred_check
        %p4637 = pneg %p379
      $region82: #{neural_cf_forward.1} parent=79 // pred_check_branch
        %4639 = sbr.rel (%p4637) target = $region84
      $region83: #{neural_cf_forward.1} parent=79 // pred_region
        %s4640 = smul.u32 64, %s26
      $region84: #{neural_cf_forward.1} parent=79 // pred_fallthru
        _
    $region80: #{neural_cf_forward.1} parent=5 // pred_fallthru
      _
    %p4641 = scmp.le.s32.totalorder 2, %s21
    // Predicated region
    $region85: #{neural_cf_forward.1} parent=5 // pred_check
      %p4642 = pneg %p4641
    $region86: #{neural_cf_forward.1} parent=5 // pred_check_branch
      %4644 = sbr.rel (%p4642) target = $region88
    $region87: #{neural_cf_forward.1} parent=5 // pred_region
      %s4645 = ssub.s32 %s21, 2
      // Predicated region
      $region89: #{neural_cf_forward.1} parent=87 // pred_check
        %p4646 = pneg %p385
      $region90: #{neural_cf_forward.1} parent=87 // pred_check_branch
        %4648 = sbr.rel (%p4646) target = $region92
      $region91: #{neural_cf_forward.1} parent=87 // pred_region
        %s4649 = smul.u32 64, %s27
        %p4650 = scmp.lt.s32.totalorder %s4649, 127
        %s4651 = scalar_select %p4650, %s4649, 127
        %s4652 = smul.addr %s4651, 8
        %s4653 = scalar_lea.vmem %s15, %s4652
      $region92: #{neural_cf_forward.1} parent=87 // pred_fallthru
        _
    $region88: #{neural_cf_forward.1} parent=5 // pred_fallthru
      _
  $region6: #{neural_cf_forward.1} parent=0 // loop_footer
    %s25 = sadd.s32 1, %s21
  $region7: #{neural_cf_forward.1} parent=0 // loop_footer_branch
    %20 = sbr.rel target = $region3
  $region8: #{neural_cf_forward.1} parent=0 // loop_exit
    _

</llo_original>
